<compile_context>
chip_gen: v5e
topology: v5e:2x2
jax: 0.10.0
libtpu: 0.0.40
codegen_flags: <defaults>
</compile_context>

<pallas_src>
import functools
import itertools

import numpy as np
import jax
import jax.numpy as jnp
from jax.experimental import pallas as pl
from jax.experimental.pallas import tpu as pltpu


def _muxout_kernel(x_ref, o_ref, *, Sh, Sw, inH, inW, Gb, perm_v, perm_h):
    # x_ref: (Gb, Gin, inH, inW)           one block of Gb input groups
    # o_ref: (n_perms, Gb, Sh*inH, Sw*inW) all permutation channels of the block
    nh = len(perm_h)
    for gb in range(Gb):                                   # static unroll (small)
        # W-interleaved rows, shared by all Sh! vertical permutations:
        #   rows[v][j][h, w*Sw + sw] = x[.., v*Sw + perm_h[j][sw], h, w]
        rows = []
        for v in range(Sh):
            if Sw == 1:
                rows.append([x_ref[gb, v]])                # (inH, inW), no relayout
                continue
            # Transpose the Sw tiles of this source row once; they die right
            # after the per-ph rows are built (keeps vreg pressure low).
            tT_v = [x_ref[gb, v * Sw + u].T for u in range(Sw)]   # (inW, inH)
            per_ph = []
            for ph in perm_h:
                cols = [tT_v[ph[sw]] for sw in range(Sw)]
                # sublane interleave: (inW, Sw, inH) -> (Sw*inW, inH);
                # row w*Sw+sw <- cols[sw][w, :]
                row_t = jnp.stack(cols, axis=1).reshape(Sw * inW, inH)
                per_ph.append(row_t.T)                     # (inH, Sw*inW)
            rows.append(per_ph)

        # One output channel per (vertical perm, horizontal perm).
        for iv, pv in enumerate(perm_v):
            for j in range(nh):
                if Sh == 1:
                    out = rows[pv[0]][j]
                else:
                    sel = [rows[pv[sh]][j] for sh in range(Sh)]
                    # sublane interleave: (inH, Sh, Sw*inW) -> (Sh*inH, Sw*inW);
                    # row h*Sh+sh <- sel[sh][h, :]
                    out = jnp.stack(sel, axis=1).reshape(Sh * inH, Sw * inW)
                o_ref[iv * nh + j, gb] = out.astype(o_ref.dtype)


def muxout(x, stride, pmode="all", colors=1, *, groups_per_block=None,
           vmem_block_budget_bytes=8 * 1024 * 1024):
    Sh, Sw = int(stride[0]), int(stride[1])
    assert Sh > 0 and Sw > 0
    B, C, inH, inW = x.shape
    Gin = Sh * Sw
    assert C % Gin == 0, f"Channels={C} must be divisible by Gin={Gin}"
    assert C % (Gin * colors) == 0, (
        f"Channels={C} must be divisible by Gin*colors={Gin * colors}")
    Ng = C // (Gin * colors)

    # Lexicographic permutations == sympy.multiset_permutations(arange(n)) for
    # distinct elements (same order as the module's perm_v/perm_h buffers).
    if pmode is None:
        perm_v = (tuple(range(Sh)),)
        perm_h = (tuple(range(Sw)),)
    else:
        perm_v = tuple(itertools.permutations(range(Sh)))
        perm_h = tuple(itertools.permutations(range(Sw)))
    n_perms = len(perm_v) * len(perm_h)
    C_out = n_perms * Ng * colors

    # --- how many input groups per grid step (Gb), budgeted against VMEM ----
    itemsize = np.dtype(x.dtype).itemsize
    # double-buffered (input group + its n_perms output channels):
    per_group_bytes = 2 * (1 + n_perms) * Gin * inH * inW * itemsize
    gb_cap = max(1, int(vmem_block_budget_bytes // max(per_group_bytes, 1)))
    gb_cap = min(gb_cap, Ng, 8)                 # bound static unrolling
    if groups_per_block is not None:
        gb_cap = min(max(int(groups_per_block), 1), Ng)
    Gb = 1
    for d in range(gb_cap, 0, -1):              # largest divisor of Ng <= cap
        if Ng % d == 0:
            Gb = d
            break

    # Free (adjacent-dim) reshapes on both sides of the kernel:
    #   input  view: [B, Ng, colors, Gin, inH, inW]
    #   output view: [B, n_perms, colors, Ng, Sh*inH, Sw*inW]
    x6 = x.reshape(B, Ng, colors, Gin, inH, inW)
    out6_shape = (B, n_perms, colors, Ng, Sh * inH, Sw * inW)

    kernel = functools.partial(
        _muxout_kernel, Sh=Sh, Sw=Sw, inH=inH, inW=inW, Gb=Gb,
        perm_v=perm_v, perm_h=perm_h)

    # Grid iterates colors fastest -> consecutive steps read adjacent input
    # blocks (good DMA locality); all axes write disjoint output blocks.
    grid = (B, Ng // Gb, colors)
    out6 = pl.pallas_call(
        kernel,
        out_shape=jax.ShapeDtypeStruct(out6_shape, x.dtype),
        grid_spec=pltpu.PrefetchScalarGridSpec(
            num_scalar_prefetch=0,
            grid=grid,
            in_specs=[
                pl.BlockSpec(
                    (None, Gb, None, Gin, inH, inW),
                    lambda b, gblk, c: (b, gblk, c, 0, 0, 0),
                )
            ],
            out_specs=pl.BlockSpec(
                (None, n_perms, None, Gb, Sh * inH, Sw * inW),
                lambda b, gblk, c: (b, 0, c, gblk, 0, 0),
            ),
        ),
        compiler_params=pltpu.CompilerParams(
            dimension_semantics=("parallel", "parallel", "parallel"),
            vmem_limit_bytes=32 * 1024 * 1024,
        ),
    )(x6)
    # Adjacent-dim merge (free): [B, n_perms, colors, Ng, H', W'] -> [B, C_out, H', W'].
    return out6.reshape(B, C_out, Sh * inH, Sw * inW)


def muxout_ref_np(x, stride, pmode="all", colors=1):
    """Pure-numpy replica of the PyTorch forward for verification."""
    Sh, Sw = stride
    B, C, inH, inW = x.shape
    Gin = Sh * Sw
    Ng = C // (Gin * colors)
    y = x.reshape(B, Ng, colors, Sh, Sw, inH, inW)
    perm_v = list(itertools.permutations(range(Sh)))
    perm_h = list(itertools.permutations(range(Sw)))
    if pmode is None:
        perms = [(tuple(range(Sh)), tuple(range(Sw)))]
    else:
        perms = [(pv, ph) for pv in perm_v for ph in perm_h]
    outs = []
    for pv, ph in perms:
        yp = y[:, :, :, list(pv), :, :, :][:, :, :, :, list(ph), :, :]
        m = np.transpose(yp, (0, 2, 1, 5, 3, 6, 4)).reshape(
            B, Ng * colors, Sh * inH, Sw * inW
        )
        outs.append(m)
    return np.concatenate(outs, axis=1)


if __name__ == "__main__":
    key = jax.random.PRNGKey(0)

    # Lane-dense demo shape: Sw*inW = 128, so output stores are full-width.
    B, C, inH, inW = 2, 8, 16, 64
    stride = (2, 2)            # Gin=4, Ng=2, n_perms=4, C_out=8
    x = jax.random.normal(key, (B, C, inH, inW), dtype=jnp.float32)

    out = muxout(x, stride=stride, pmode="all", colors=1)
    out = jax.block_until_ready(out)
    ref = muxout_ref_np(np.asarray(x), stride, pmode="all", colors=1)
    assert out.shape == ref.shape, (out.shape, ref.shape)
    np.testing.assert_array_equal(np.asarray(out), ref)

    # Exercise the colors>1 and pmode=None paths as well.
    x2 = jax.random.normal(jax.random.PRNGKey(1), (2, 16, 16, 64), jnp.float32)
    out2 = jax.block_until_ready(muxout(x2, stride=stride, pmode="all", colors=2))
    np.testing.assert_array_equal(
        np.asarray(out2), muxout_ref_np(np.asarray(x2), stride, "all", colors=2))
    out3 = jax.block_until_ready(muxout(x2, stride=stride, pmode=None, colors=2))
    np.testing.assert_array_equal(
        np.asarray(out3), muxout_ref_np(np.asarray(x2), stride, None, colors=2))

    print("KERNEL_OK")
</pallas_src>

<mosaic_0001>
module attributes {stable_mosaic.version = 11 : i64} {
  func.func @_muxout_kernel(%arg0: i32, %arg1: i32, %arg2: i32, %arg3: memref<1x2x1x4x16x64xf32, #tpu.memory_space<vmem>>, %arg4: memref<1x4x1x2x32x128xf32, #tpu.memory_space<vmem>>) attributes {dimension_semantics = [#tpu.dimension_semantics<parallel>, #tpu.dimension_semantics<parallel>, #tpu.dimension_semantics<parallel>], iteration_bounds = array<i64: 2, 1, 1>, scalar_prefetch = 0 : i64, scratch_operands = 0 : i64, tpu.core_type = #tpu.core_type<tc>, window_params = [{transform_indices = @transform_0, window_bounds = array<i64: 1, 2, 1, 4, 16, 64>}, {transform_indices = @transform_1, window_bounds = array<i64: 1, 4, 1, 2, 32, 128>}]} {
    %c0 = arith.constant 0 : index
    %c0_0 = arith.constant 0 : index
    %c0_1 = arith.constant 0 : index
    %c0_2 = arith.constant 0 : index
    %c0_3 = arith.constant 0 : index
    %c0_4 = arith.constant 0 : index
    %0 = vector.load %arg3[%c0, %c0_0, %c0_1, %c0_2, %c0_3, %c0_4] : memref<1x2x1x4x16x64xf32, #tpu.memory_space<vmem>>, vector<1x1x1x1x16x64xf32>
    %1 = vector.shape_cast %0 : vector<1x1x1x1x16x64xf32> to vector<16x64xf32>
    %2 = tpu.transpose %1, [1, 0] : vector<16x64xf32> -> vector<64x16xf32>
    %c0_5 = arith.constant 0 : index
    %c0_6 = arith.constant 0 : index
    %c0_7 = arith.constant 0 : index
    %c1 = arith.constant 1 : index
    %c0_8 = arith.constant 0 : index
    %c0_9 = arith.constant 0 : index
    %3 = vector.load %arg3[%c0_5, %c0_6, %c0_7, %c1, %c0_8, %c0_9] : memref<1x2x1x4x16x64xf32, #tpu.memory_space<vmem>>, vector<1x1x1x1x16x64xf32>
    %4 = vector.shape_cast %3 : vector<1x1x1x1x16x64xf32> to vector<16x64xf32>
    %5 = tpu.transpose %4, [1, 0] : vector<16x64xf32> -> vector<64x16xf32>
    %6 = vector.shape_cast %2 : vector<64x16xf32> to vector<64x1x16xf32>
    %7 = vector.shape_cast %5 : vector<64x16xf32> to vector<64x1x16xf32>
    %8 = tpu.concatenate %6, %7 in 1 : vector<64x1x16xf32>, vector<64x1x16xf32> -> vector<64x2x16xf32>
    %9 = vector.shape_cast %8 : vector<64x2x16xf32> to vector<128x16xf32>
    %10 = tpu.transpose %9, [1, 0] : vector<128x16xf32> -> vector<16x128xf32>
    %11 = vector.shape_cast %5 : vector<64x16xf32> to vector<64x1x16xf32>
    %12 = vector.shape_cast %2 : vector<64x16xf32> to vector<64x1x16xf32>
    %13 = tpu.concatenate %11, %12 in 1 : vector<64x1x16xf32>, vector<64x1x16xf32> -> vector<64x2x16xf32>
    %14 = vector.shape_cast %13 : vector<64x2x16xf32> to vector<128x16xf32>
    %15 = tpu.transpose %14, [1, 0] : vector<128x16xf32> -> vector<16x128xf32>
    %c0_10 = arith.constant 0 : index
    %c0_11 = arith.constant 0 : index
    %c0_12 = arith.constant 0 : index
    %c2 = arith.constant 2 : index
    %c0_13 = arith.constant 0 : index
    %c0_14 = arith.constant 0 : index
    %16 = vector.load %arg3[%c0_10, %c0_11, %c0_12, %c2, %c0_13, %c0_14] : memref<1x2x1x4x16x64xf32, #tpu.memory_space<vmem>>, vector<1x1x1x1x16x64xf32>
    %17 = vector.shape_cast %16 : vector<1x1x1x1x16x64xf32> to vector<16x64xf32>
    %18 = tpu.transpose %17, [1, 0] : vector<16x64xf32> -> vector<64x16xf32>
    %c0_15 = arith.constant 0 : index
    %c0_16 = arith.constant 0 : index
    %c0_17 = arith.constant 0 : index
    %c3 = arith.constant 3 : index
    %c0_18 = arith.constant 0 : index
    %c0_19 = arith.constant 0 : index
    %19 = vector.load %arg3[%c0_15, %c0_16, %c0_17, %c3, %c0_18, %c0_19] : memref<1x2x1x4x16x64xf32, #tpu.memory_space<vmem>>, vector<1x1x1x1x16x64xf32>
    %20 = vector.shape_cast %19 : vector<1x1x1x1x16x64xf32> to vector<16x64xf32>
    %21 = tpu.transpose %20, [1, 0] : vector<16x64xf32> -> vector<64x16xf32>
    %22 = vector.shape_cast %18 : vector<64x16xf32> to vector<64x1x16xf32>
    %23 = vector.shape_cast %21 : vector<64x16xf32> to vector<64x1x16xf32>
    %24 = tpu.concatenate %22, %23 in 1 : vector<64x1x16xf32>, vector<64x1x16xf32> -> vector<64x2x16xf32>
    %25 = vector.shape_cast %24 : vector<64x2x16xf32> to vector<128x16xf32>
    %26 = tpu.transpose %25, [1, 0] : vector<128x16xf32> -> vector<16x128xf32>
    %27 = vector.shape_cast %21 : vector<64x16xf32> to vector<64x1x16xf32>
    %28 = vector.shape_cast %18 : vector<64x16xf32> to vector<64x1x16xf32>
    %29 = tpu.concatenate %27, %28 in 1 : vector<64x1x16xf32>, vector<64x1x16xf32> -> vector<64x2x16xf32>
    %30 = vector.shape_cast %29 : vector<64x2x16xf32> to vector<128x16xf32>
    %31 = tpu.transpose %30, [1, 0] : vector<128x16xf32> -> vector<16x128xf32>
    %32 = vector.shape_cast %10 : vector<16x128xf32> to vector<16x1x128xf32>
    %33 = vector.shape_cast %26 : vector<16x128xf32> to vector<16x1x128xf32>
    %34 = tpu.concatenate %32, %33 in 1 : vector<16x1x128xf32>, vector<16x1x128xf32> -> vector<16x2x128xf32>
    %35 = vector.shape_cast %34 : vector<16x2x128xf32> to vector<32x128xf32>
    %c0_20 = arith.constant 0 : index
    %c0_21 = arith.constant 0 : index
    %c0_22 = arith.constant 0 : index
    %c0_23 = arith.constant 0 : index
    %c0_24 = arith.constant 0 : index
    %c0_25 = arith.constant 0 : index
    %36 = vector.load %arg4[%c0_20, %c0_21, %c0_22, %c0_23, %c0_24, %c0_25] : memref<1x4x1x2x32x128xf32, #tpu.memory_space<vmem>>, vector<1x1x1x1x32x128xf32>
    %37 = vector.shape_cast %36 : vector<1x1x1x1x32x128xf32> to vector<32x128xf32>
    %38 = vector.shape_cast %35 : vector<32x128xf32> to vector<1x1x1x1x32x128xf32>
    tpu.vector_store %arg4[%c0_20, %c0_21, %c0_22, %c0_23, %c0_24, %c0_25], %38 {strides = array<i32>} : memref<1x4x1x2x32x128xf32, #tpu.memory_space<vmem>>, vector<1x1x1x1x32x128xf32>,
    %39 = vector.shape_cast %15 : vector<16x128xf32> to vector<16x1x128xf32>
    %40 = vector.shape_cast %31 : vector<16x128xf32> to vector<16x1x128xf32>
    %41 = tpu.concatenate %39, %40 in 1 : vector<16x1x128xf32>, vector<16x1x128xf32> -> vector<16x2x128xf32>
    %42 = vector.shape_cast %41 : vector<16x2x128xf32> to vector<32x128xf32>
    %c0_26 = arith.constant 0 : index
    %c1_27 = arith.constant 1 : index
    %c0_28 = arith.constant 0 : index
    %c0_29 = arith.constant 0 : index
    %c0_30 = arith.constant 0 : index
    %c0_31 = arith.constant 0 : index
    %43 = vector.load %arg4[%c0_26, %c1_27, %c0_28, %c0_29, %c0_30, %c0_31] : memref<1x4x1x2x32x128xf32, #tpu.memory_space<vmem>>, vector<1x1x1x1x32x128xf32>
    %44 = vector.shape_cast %43 : vector<1x1x1x1x32x128xf32> to vector<32x128xf32>
    %45 = vector.shape_cast %42 : vector<32x128xf32> to vector<1x1x1x1x32x128xf32>
    tpu.vector_store %arg4[%c0_26, %c1_27, %c0_28, %c0_29, %c0_30, %c0_31], %45 {strides = array<i32>} : memref<1x4x1x2x32x128xf32, #tpu.memory_space<vmem>>, vector<1x1x1x1x32x128xf32>,
    %46 = vector.shape_cast %26 : vector<16x128xf32> to vector<16x1x128xf32>
    %47 = vector.shape_cast %10 : vector<16x128xf32> to vector<16x1x128xf32>
    %48 = tpu.concatenate %46, %47 in 1 : vector<16x1x128xf32>, vector<16x1x128xf32> -> vector<16x2x128xf32>
    %49 = vector.shape_cast %48 : vector<16x2x128xf32> to vector<32x128xf32>
    %c0_32 = arith.constant 0 : index
    %c2_33 = arith.constant 2 : index
    %c0_34 = arith.constant 0 : index
    %c0_35 = arith.constant 0 : index
    %c0_36 = arith.constant 0 : index
    %c0_37 = arith.constant 0 : index
    %50 = vector.load %arg4[%c0_32, %c2_33, %c0_34, %c0_35, %c0_36, %c0_37] : memref<1x4x1x2x32x128xf32, #tpu.memory_space<vmem>>, vector<1x1x1x1x32x128xf32>
    %51 = vector.shape_cast %50 : vector<1x1x1x1x32x128xf32> to vector<32x128xf32>
    %52 = vector.shape_cast %49 : vector<32x128xf32> to vector<1x1x1x1x32x128xf32>
    tpu.vector_store %arg4[%c0_32, %c2_33, %c0_34, %c0_35, %c0_36, %c0_37], %52 {strides = array<i32>} : memref<1x4x1x2x32x128xf32, #tpu.memory_space<vmem>>, vector<1x1x1x1x32x128xf32>,
    %53 = vector.shape_cast %31 : vector<16x128xf32> to vector<16x1x128xf32>
    %54 = vector.shape_cast %15 : vector<16x128xf32> to vector<16x1x128xf32>
    %55 = tpu.concatenate %53, %54 in 1 : vector<16x1x128xf32>, vector<16x1x128xf32> -> vector<16x2x128xf32>
    %56 = vector.shape_cast %55 : vector<16x2x128xf32> to vector<32x128xf32>
    %c0_38 = arith.constant 0 : index
    %c3_39 = arith.constant 3 : index
    %c0_40 = arith.constant 0 : index
    %c0_41 = arith.constant 0 : index
    %c0_42 = arith.constant 0 : index
    %c0_43 = arith.constant 0 : index
    %57 = vector.load %arg4[%c0_38, %c3_39, %c0_40, %c0_41, %c0_42, %c0_43] : memref<1x4x1x2x32x128xf32, #tpu.memory_space<vmem>>, vector<1x1x1x1x32x128xf32>
    %58 = vector.shape_cast %57 : vector<1x1x1x1x32x128xf32> to vector<32x128xf32>
    %59 = vector.shape_cast %56 : vector<32x128xf32> to vector<1x1x1x1x32x128xf32>
    tpu.vector_store %arg4[%c0_38, %c3_39, %c0_40, %c0_41, %c0_42, %c0_43], %59 {strides = array<i32>} : memref<1x4x1x2x32x128xf32, #tpu.memory_space<vmem>>, vector<1x1x1x1x32x128xf32>,
    %c0_44 = arith.constant 0 : index
    %c1_45 = arith.constant 1 : index
    %c0_46 = arith.constant 0 : index
    %c0_47 = arith.constant 0 : index
    %c0_48 = arith.constant 0 : index
    %c0_49 = arith.constant 0 : index
    %60 = vector.load %arg3[%c0_44, %c1_45, %c0_46, %c0_47, %c0_48, %c0_49] : memref<1x2x1x4x16x64xf32, #tpu.memory_space<vmem>>, vector<1x1x1x1x16x64xf32>
    %61 = vector.shape_cast %60 : vector<1x1x1x1x16x64xf32> to vector<16x64xf32>
    %62 = tpu.transpose %61, [1, 0] : vector<16x64xf32> -> vector<64x16xf32>
    %c0_50 = arith.constant 0 : index
    %c1_51 = arith.constant 1 : index
    %c0_52 = arith.constant 0 : index
    %c1_53 = arith.constant 1 : index
    %c0_54 = arith.constant 0 : index
    %c0_55 = arith.constant 0 : index
    %63 = vector.load %arg3[%c0_50, %c1_51, %c0_52, %c1_53, %c0_54, %c0_55] : memref<1x2x1x4x16x64xf32, #tpu.memory_space<vmem>>, vector<1x1x1x1x16x64xf32>
    %64 = vector.shape_cast %63 : vector<1x1x1x1x16x64xf32> to vector<16x64xf32>
    %65 = tpu.transpose %64, [1, 0] : vector<16x64xf32> -> vector<64x16xf32>
    %66 = vector.shape_cast %62 : vector<64x16xf32> to vector<64x1x16xf32>
    %67 = vector.shape_cast %65 : vector<64x16xf32> to vector<64x1x16xf32>
    %68 = tpu.concatenate %66, %67 in 1 : vector<64x1x16xf32>, vector<64x1x16xf32> -> vector<64x2x16xf32>
    %69 = vector.shape_cast %68 : vector<64x2x16xf32> to vector<128x16xf32>
    %70 = tpu.transpose %69, [1, 0] : vector<128x16xf32> -> vector<16x128xf32>
    %71 = vector.shape_cast %65 : vector<64x16xf32> to vector<64x1x16xf32>
    %72 = vector.shape_cast %62 : vector<64x16xf32> to vector<64x1x16xf32>
    %73 = tpu.concatenate %71, %72 in 1 : vector<64x1x16xf32>, vector<64x1x16xf32> -> vector<64x2x16xf32>
    %74 = vector.shape_cast %73 : vector<64x2x16xf32> to vector<128x16xf32>
    %75 = tpu.transpose %74, [1, 0] : vector<128x16xf32> -> vector<16x128xf32>
    %c0_56 = arith.constant 0 : index
    %c1_57 = arith.constant 1 : index
    %c0_58 = arith.constant 0 : index
    %c2_59 = arith.constant 2 : index
    %c0_60 = arith.constant 0 : index
    %c0_61 = arith.constant 0 : index
    %76 = vector.load %arg3[%c0_56, %c1_57, %c0_58, %c2_59, %c0_60, %c0_61] : memref<1x2x1x4x16x64xf32, #tpu.memory_space<vmem>>, vector<1x1x1x1x16x64xf32>
    %77 = vector.shape_cast %76 : vector<1x1x1x1x16x64xf32> to vector<16x64xf32>
    %78 = tpu.transpose %77, [1, 0] : vector<16x64xf32> -> vector<64x16xf32>
    %c0_62 = arith.constant 0 : index
    %c1_63 = arith.constant 1 : index
    %c0_64 = arith.constant 0 : index
    %c3_65 = arith.constant 3 : index
    %c0_66 = arith.constant 0 : index
    %c0_67 = arith.constant 0 : index
    %79 = vector.load %arg3[%c0_62, %c1_63, %c0_64, %c3_65, %c0_66, %c0_67] : memref<1x2x1x4x16x64xf32, #tpu.memory_space<vmem>>, vector<1x1x1x1x16x64xf32>
    %80 = vector.shape_cast %79 : vector<1x1x1x1x16x64xf32> to vector<16x64xf32>
    %81 = tpu.transpose %80, [1, 0] : vector<16x64xf32> -> vector<64x16xf32>
    %82 = vector.shape_cast %78 : vector<64x16xf32> to vector<64x1x16xf32>
    %83 = vector.shape_cast %81 : vector<64x16xf32> to vector<64x1x16xf32>
    %84 = tpu.concatenate %82, %83 in 1 : vector<64x1x16xf32>, vector<64x1x16xf32> -> vector<64x2x16xf32>
    %85 = vector.shape_cast %84 : vector<64x2x16xf32> to vector<128x16xf32>
    %86 = tpu.transpose %85, [1, 0] : vector<128x16xf32> -> vector<16x128xf32>
    %87 = vector.shape_cast %81 : vector<64x16xf32> to vector<64x1x16xf32>
    %88 = vector.shape_cast %78 : vector<64x16xf32> to vector<64x1x16xf32>
    %89 = tpu.concatenate %87, %88 in 1 : vector<64x1x16xf32>, vector<64x1x16xf32> -> vector<64x2x16xf32>
    %90 = vector.shape_cast %89 : vector<64x2x16xf32> to vector<128x16xf32>
    %91 = tpu.transpose %90, [1, 0] : vector<128x16xf32> -> vector<16x128xf32>
    %92 = vector.shape_cast %70 : vector<16x128xf32> to vector<16x1x128xf32>
    %93 = vector.shape_cast %86 : vector<16x128xf32> to vector<16x1x128xf32>
    %94 = tpu.concatenate %92, %93 in 1 : vector<16x1x128xf32>, vector<16x1x128xf32> -> vector<16x2x128xf32>
    %95 = vector.shape_cast %94 : vector<16x2x128xf32> to vector<32x128xf32>
    %c0_68 = arith.constant 0 : index
    %c0_69 = arith.constant 0 : index
    %c0_70 = arith.constant 0 : index
    %c1_71 = arith.constant 1 : index
    %c0_72 = arith.constant 0 : index
    %c0_73 = arith.constant 0 : index
    %96 = vector.load %arg4[%c0_68, %c0_69, %c0_70, %c1_71, %c0_72, %c0_73] : memref<1x4x1x2x32x128xf32, #tpu.memory_space<vmem>>, vector<1x1x1x1x32x128xf32>
    %97 = vector.shape_cast %96 : vector<1x1x1x1x32x128xf32> to vector<32x128xf32>
    %98 = vector.shape_cast %95 : vector<32x128xf32> to vector<1x1x1x1x32x128xf32>
    tpu.vector_store %arg4[%c0_68, %c0_69, %c0_70, %c1_71, %c0_72, %c0_73], %98 {strides = array<i32>} : memref<1x4x1x2x32x128xf32, #tpu.memory_space<vmem>>, vector<1x1x1x1x32x128xf32>,
    %99 = vector.shape_cast %75 : vector<16x128xf32> to vector<16x1x128xf32>
    %100 = vector.shape_cast %91 : vector<16x128xf32> to vector<16x1x128xf32>
    %101 = tpu.concatenate %99, %100 in 1 : vector<16x1x128xf32>, vector<16x1x128xf32> -> vector<16x2x128xf32>
    %102 = vector.shape_cast %101 : vector<16x2x128xf32> to vector<32x128xf32>
    %c0_74 = arith.constant 0 : index
    %c1_75 = arith.constant 1 : index
    %c0_76 = arith.constant 0 : index
    %c1_77 = arith.constant 1 : index
    %c0_78 = arith.constant 0 : index
    %c0_79 = arith.constant 0 : index
    %103 = vector.load %arg4[%c0_74, %c1_75, %c0_76, %c1_77, %c0_78, %c0_79] : memref<1x4x1x2x32x128xf32, #tpu.memory_space<vmem>>, vector<1x1x1x1x32x128xf32>
    %104 = vector.shape_cast %103 : vector<1x1x1x1x32x128xf32> to vector<32x128xf32>
    %105 = vector.shape_cast %102 : vector<32x128xf32> to vector<1x1x1x1x32x128xf32>
    tpu.vector_store %arg4[%c0_74, %c1_75, %c0_76, %c1_77, %c0_78, %c0_79], %105 {strides = array<i32>} : memref<1x4x1x2x32x128xf32, #tpu.memory_space<vmem>>, vector<1x1x1x1x32x128xf32>,
    %106 = vector.shape_cast %86 : vector<16x128xf32> to vector<16x1x128xf32>
    %107 = vector.shape_cast %70 : vector<16x128xf32> to vector<16x1x128xf32>
    %108 = tpu.concatenate %106, %107 in 1 : vector<16x1x128xf32>, vector<16x1x128xf32> -> vector<16x2x128xf32>
    %109 = vector.shape_cast %108 : vector<16x2x128xf32> to vector<32x128xf32>
    %c0_80 = arith.constant 0 : index
    %c2_81 = arith.constant 2 : index
    %c0_82 = arith.constant 0 : index
    %c1_83 = arith.constant 1 : index
    %c0_84 = arith.constant 0 : index
    %c0_85 = arith.constant 0 : index
    %110 = vector.load %arg4[%c0_80, %c2_81, %c0_82, %c1_83, %c0_84, %c0_85] : memref<1x4x1x2x32x128xf32, #tpu.memory_space<vmem>>, vector<1x1x1x1x32x128xf32>
    %111 = vector.shape_cast %110 : vector<1x1x1x1x32x128xf32> to vector<32x128xf32>
    %112 = vector.shape_cast %109 : vector<32x128xf32> to vector<1x1x1x1x32x128xf32>
    tpu.vector_store %arg4[%c0_80, %c2_81, %c0_82, %c1_83, %c0_84, %c0_85], %112 {strides = array<i32>} : memref<1x4x1x2x32x128xf32, #tpu.memory_space<vmem>>, vector<1x1x1x1x32x128xf32>,
    %113 = vector.shape_cast %91 : vector<16x128xf32> to vector<16x1x128xf32>
    %114 = vector.shape_cast %75 : vector<16x128xf32> to vector<16x1x128xf32>
    %115 = tpu.concatenate %113, %114 in 1 : vector<16x1x128xf32>, vector<16x1x128xf32> -> vector<16x2x128xf32>
    %116 = vector.shape_cast %115 : vector<16x2x128xf32> to vector<32x128xf32>
    %c0_86 = arith.constant 0 : index
    %c3_87 = arith.constant 3 : index
    %c0_88 = arith.constant 0 : index
    %c1_89 = arith.constant 1 : index
    %c0_90 = arith.constant 0 : index
    %c0_91 = arith.constant 0 : index
    %117 = vector.load %arg4[%c0_86, %c3_87, %c0_88, %c1_89, %c0_90, %c0_91] : memref<1x4x1x2x32x128xf32, #tpu.memory_space<vmem>>, vector<1x1x1x1x32x128xf32>
    %118 = vector.shape_cast %117 : vector<1x1x1x1x32x128xf32> to vector<32x128xf32>
    %119 = vector.shape_cast %116 : vector<32x128xf32> to vector<1x1x1x1x32x128xf32>
    tpu.vector_store %arg4[%c0_86, %c3_87, %c0_88, %c1_89, %c0_90, %c0_91], %119 {strides = array<i32>} : memref<1x4x1x2x32x128xf32, #tpu.memory_space<vmem>>, vector<1x1x1x1x32x128xf32>,
    return
  }
  func.func @transform_0(%arg0: i32, %arg1: i32, %arg2: i32) -> (i32, i32, i32, i32, i32, i32) {
    %c0_i32 = arith.constant 0 : i32
    %c0_i32_0 = arith.constant 0 : i32
    %c0_i32_1 = arith.constant 0 : i32
    %c0_i32_2 = arith.constant 0 : i32
    return %arg0, %arg1, %arg2, %c0_i32, %c0_i32_0, %c0_i32_1 : i32, i32, i32, i32, i32, i32
  }
  func.func @transform_1(%arg0: i32, %arg1: i32, %arg2: i32) -> (i32, i32, i32, i32, i32, i32) {
    %c0_i32 = arith.constant 0 : i32
    %c0_i32_0 = arith.constant 0 : i32
    %c0_i32_1 = arith.constant 0 : i32
    %c0_i32_2 = arith.constant 0 : i32
    return %arg0, %c0_i32, %arg2, %arg1, %c0_i32_0, %c0_i32_1 : i32, i32, i32, i32, i32, i32
  }
}

</mosaic_0001>

<llo_original>
// kernel: tpu_custom_call.1
$region0: #{tpu_custom_call.1}
  #allocation0 [shape = 'u32[]', space=smem, size = 0x4, offset = 0x4, fixed_abs, tag = 'smem constant byte address 0x4 - core index']
  #allocation1 [shape = 'u32[72,128]{1,0:T(1,128)}', space=vmem, size = 0x9000, scoped, tag = 'internal scratch']
  %s0 = inlined_call_operand.hbm [shape: f32[2,2,1,4,16,64], index: 0, kind: input, shape index: {}]
  %s1 = inlined_call_operand.hbm [shape: f32[2,4,1,2,32,128], index: 1, kind: output, shape index: {}]
  %s2 = sld [smem:[#allocation0]]
  $region41: #{tpu_custom_call.1} parent=0
    _
  %s4 = ssub.s32 1, %s2
  %s5 = scalar_select 0, %s4, %s2
  $region1: #{tpu_custom_call.1} parent=0
    #allocation2 [shape = 'u8[131072]{0}', space=vmem, size = 0x20000, scoped, tag = 'input window, operand 0']
    #allocation3 [shape = 's32[2]{0}', space=sflag, size = 0x8, scoped, tag = 'scoped memory for tpu_custom_call.1']
    #allocation4 [shape = 's32[2]{0}', space=sflag, size = 0x8, scoped, tag = 'scoped memory for tpu_custom_call.1']
    #allocation5 [shape = 'u8[262144]{0}', space=vmem, size = 0x40000, scoped, tag = 'output window, operand 0']
    %6 = vsyncpa [#allocation3], 0
    %s7 = scalar_lea.sflag [#allocation3], 1
    %8 = vsyncpa %s7, 0
    %9 = vsyncpa [#allocation4], 0
    %s10 = scalar_lea.sflag [#allocation4], 1
    %11 = vsyncpa %s10, 0
    loop: start=0, step=1, limit=4
    $region2: #{tpu_custom_call.1} parent=1 // loop_pre_header
      _
    $region3: #{tpu_custom_call.1} parent=1 // loop_header
      %s13 = sphi 0, %s17
      %p14 = scmp.ge.s32.totalorder %s13, 4
      %s20 = sphi 0, %s39
      %s21 = sphi 0, %s35
      %s22 = sphi 0, %s31
      %s23 = sphi 0, %s20
      %s24 = sphi 0, %s21
      %s25 = sphi 0, %s22
      %s26 = sphi 0, %s23
      %s27 = sphi 0, %s24
      %s28 = sphi 0, %s25
      %s46 = sphi 0, %s48
      %s49 = sphi 0, %s46
      %s50 = sphi 0, %s49
      %s66 = sphi 0, %s50
      %s76 = sphi 0, %s78
      %s79 = sphi 0, %s76
      %s80 = sphi 0, %s79
      %s96 = sphi 0, %s80
    $region4: #{tpu_custom_call.1} parent=1 // loop_header_branch
      %16 = sbr.rel (%p14) target = $region8
    $region5: #{tpu_custom_call.1} parent=1 // loop_body
      %s18 = ssub.s32 %s13, 1
      %s19 = ssub.s32 %s13, 2
      %s29 = sadd.s32 1, %s22
      %p30 = scmp.ge.s32.totalorder %s29, 1
      %s31 = scalar_select %p30, 0, %s29
      %s32 = sadd.s32 1, %s21
      %s33 = scalar_select %p30, %s32, %s21
      %p34 = scmp.ge.s32.totalorder %s33, 1
      %s35 = scalar_select %p34, 0, %s33
      %s36 = sadd.s32 1, %s20
      %s37 = scalar_select %p34, %s36, %s20
      %p38 = scmp.ge.s32.totalorder %s37, 2
      %s39 = scalar_select %p38, 0, %s37
      %s40 = ssub.s32 %s20, %s39
      %s41 = ssub.s32 %s21, %s35
      %s42 = sor.u32 %s40, %s41
      %s43 = ssub.s32 %s22, %s31
      %s44 = sor.u32 %s42, %s43
      %p45 = scmp.eq.s32.totalorder %s44, 0
      %s47 = sadd.s32 %s46, 1
      %s48 = scalar_select %p45, %s46, %s47
      %p51 = pneg %p45
      %p52 = scmp.eq.s32.totalorder %s13, 1
      %p53 = por %p51, %p52
      %p54 = scmp.ne.s32.totalorder %s46, %s49
      %p55 = scmp.eq.s32.totalorder %s13, 0
      %p56 = por %p54, %p55
      %p57 = scmp.ne.s32.totalorder %s46, %s49
      %p58 = scmp.eq.s32.totalorder %s18, 1
      %p59 = por %p57, %p58
      %p60 = scmp.ne.s32.totalorder %s49, %s50
      %p61 = scmp.eq.s32.totalorder %s18, 0
      %p62 = por %p60, %p61
      %p63 = scmp.ne.s32.totalorder %s49, %s50
      %p64 = scmp.eq.s32.totalorder %s19, 1
      %p65 = por %p63, %p64
      %p67 = scmp.ne.s32.totalorder %s50, %s66
      %p68 = scmp.eq.s32.totalorder %s19, 0
      %p69 = por %p67, %p68
      %s70 = ssub.s32 %s20, %s39
      %s71 = ssub.s32 %s22, %s31
      %s72 = sor.u32 %s70, %s71
      %s73 = ssub.s32 %s21, %s35
      %s74 = sor.u32 %s72, %s73
      %p75 = scmp.eq.s32.totalorder %s74, 0
      %s77 = sadd.s32 %s76, 1
      %s78 = scalar_select %p75, %s76, %s77
      %p81 = pneg %p75
      %p82 = scmp.eq.s32.totalorder %s13, 1
      %p83 = por %p81, %p82
      %p84 = scmp.ne.s32.totalorder %s76, %s79
      %p85 = scmp.eq.s32.totalorder %s13, 0
      %p86 = por %p84, %p85
      %p87 = scmp.ne.s32.totalorder %s76, %s79
      %p88 = scmp.eq.s32.totalorder %s18, 1
      %p89 = por %p87, %p88
      %p90 = scmp.ne.s32.totalorder %s79, %s80
      %p91 = scmp.eq.s32.totalorder %s18, 0
      %p92 = por %p90, %p91
      %p93 = scmp.ne.s32.totalorder %s79, %s80
      %p94 = scmp.eq.s32.totalorder %s19, 1
      %p95 = por %p93, %p94
      %p97 = scmp.ne.s32.totalorder %s80, %s96
      %p98 = scmp.eq.s32.totalorder %s19, 0
      %p99 = por %p97, %p98
      %p100 = scmp.le.s32.totalorder 1, %s13
      %p101 = scmp.lt.s32.totalorder %s13, 3
      %p102 = pnand %p100, %p101
      %p103 = pneg %p102
      // Predicated region
      $region9: #{tpu_custom_call.1} parent=5 // pred_check
        _
      $region10: #{tpu_custom_call.1} parent=5 // pred_check_branch
        %105 = sbr.rel (%p102) target = $region12
      $region11: #{tpu_custom_call.1} parent=5 // pred_region
        %s106 = ssub.s32 %s13, 1
      $region12: #{tpu_custom_call.1} parent=5 // pred_fallthru
        _
      %p107 = scmp.lt.s32.totalorder %s13, 2
      // Predicated region
      $region13: #{tpu_custom_call.1} parent=5 // pred_check
        %p108 = pneg %p107
      $region14: #{tpu_custom_call.1} parent=5 // pred_check_branch
        %110 = sbr.rel (%p108) target = $region16
      $region15: #{tpu_custom_call.1} parent=5 // pred_region
        // Predicated region
        $region17: #{tpu_custom_call.1} parent=15 // pred_check
          %p111 = pneg %p56
        $region18: #{tpu_custom_call.1} parent=15 // pred_check_branch
          %113 = sbr.rel (%p111) target = $region20
        $region19: #{tpu_custom_call.1} parent=15 // pred_region
          %s114 = sand.u32 %s46, 1
          %s115 = scalar_lea.sflag [#allocation3], %s114
          %s116 = sand.u32 %s46, 1
          %s117 = smul.addr %s116, 128
          %s118 = scalar_lea.vmem [#allocation2], %s117
          %s119 = smul.u32 2, %s21
          %121 = vsyncadd %s115, 0
          %s122 = smul.addr %s22, 8
          %s123 = smul.addr %s119, 8
          %s124 = sadd.s32 %s122, %s123
          %s125 = smul.addr %s20, 16
          %s126 = sadd.s32 %s124, %s125
          %s127 = smul.addr %s126, 8
          %s128 = scalar_lea.hbm %s0, %s127
          %s129 = sshll.u32 %s128, 4
          %s130 = int_to_ptr.hbm [resolvable:$true] %s129
          %s131 = sshll.u32 %s118, 4
          %s132 = int_to_ptr.vmem [resolvable:$true] %s131
          %137 = dma.hbm_to_vmem [thread:$0]  %s130, 2048, %s132, %s115, 128, 128, 8
        $region20: #{tpu_custom_call.1} parent=15 // pred_fallthru
          _
      $region16: #{tpu_custom_call.1} parent=5 // pred_fallthru
        _
      %p138 = scmp.le.s32.totalorder 1, %s13
      %p139 = scmp.lt.s32.totalorder %s13, 3
      %p140 = pnand %p138, %p139
      %p141 = pneg %p140
      // Predicated region
      $region21: #{tpu_custom_call.1} parent=5 // pred_check
        _
      $region22: #{tpu_custom_call.1} parent=5 // pred_check_branch
        %143 = sbr.rel (%p140) target = $region24
      $region23: #{tpu_custom_call.1} parent=5 // pred_region
        %s144 = ssub.s32 %s13, 1
        %s145 = sand.u32 %s49, 1
        %s146 = scalar_lea.sflag [#allocation3], %s145
        %s147 = sand.u32 %s49, 1
        %s148 = smul.addr %s147, 128
        %s149 = scalar_lea.vmem [#allocation2], %s148
        // Predicated region
        $region25: #{tpu_custom_call.1} parent=23 // pred_check
          %p150 = pneg %p62
        $region26: #{tpu_custom_call.1} parent=23 // pred_check_branch
          %152 = sbr.rel (%p150) target = $region28
        $region27: #{tpu_custom_call.1} parent=23 // pred_region
          %154 = dma.done %s146, 2048
        $region28: #{tpu_custom_call.1} parent=23 // pred_fallthru
          _
        %s155 = sand.u32 %s49, 1
        %s156 = scalar_lea.sflag [#allocation3], %s155
        %s157 = sand.u32 %s49, 1
        %s158 = smul.addr %s157, 128
        %s159 = scalar_lea.vmem [#allocation2], %s158
        %p160 = pneg %p62
        %p161 = pneg %p59
        %p162 = pneg %p92
        %p163 = pneg %p89
        %s164 = sand.u32 %s79, 1
        %s165 = scalar_lea.sflag [#allocation4], %s164
        %s166 = sand.u32 %s79, 1
        %s167 = smul.addr %s166, 256
        %s168 = scalar_lea.vmem [#allocation5], %s167
        %s169 = smul.u32 2, %s24
        %s170 = smul.u32 2, %s24
        %v171 = vld [vmem:[%s149] sm:$0xff]
        %v172 = vld [vmem:[%s149 + $0x8] sm:$0xff]
        %173 = vxpose.xlu0.b32.start [1/16] %v171, 128
        %174 = vxpose.xlu0.b32.cont [2/16] %v172, 128
        %175 = vxpose.xlu0.b32.cont [3/16] 0.0, 128
        %176 = vxpose.xlu0.b32.cont [4/16] 0.0, 128
        %177 = vxpose.xlu0.b32.cont [5/16] 0.0, 128
        %178 = vxpose.xlu0.b32.cont [6/16] 0.0, 128
        %179 = vxpose.xlu0.b32.cont [7/16] 0.0, 128
        %180 = vxpose.xlu0.b32.cont [8/16] 0.0, 128
        %181 = vxpose.xlu0.b32.cont [9/16] 0.0, 128
        %182 = vxpose.xlu0.b32.cont [10/16] 0.0, 128
        %183 = vxpose.xlu0.b32.cont [11/16] 0.0, 128
        %184 = vxpose.xlu0.b32.cont [12/16] 0.0, 128
        %185 = vxpose.xlu0.b32.cont [13/16] 0.0, 128
        %186 = vxpose.xlu0.b32.cont [14/16] 0.0, 128
        %187 = vxpose.xlu0.b32.cont [15/16] 0.0, 128
        %188 = vxpose.xlu0.b32.end [16/16] 0.0, 128
        %v189 = vpop.trf.xlu0
        %v190 = vpop.trf.xlu0
        %v191 = vpop.trf.xlu0
        %v192 = vpop.trf.xlu0
        %v193 = vpop.trf.xlu0
        %v194 = vpop.trf.xlu0
        %v195 = vpop.trf.xlu0
        %v196 = vpop.trf.xlu0
        %v197 = vpop.trf.xlu0
        %v198 = vpop.trf.xlu0
        %v199 = vpop.trf.xlu0
        %v200 = vpop.trf.xlu0
        %v201 = vpop.trf.xlu0
        %v202 = vpop.trf.xlu0
        %v203 = vpop.trf.xlu0
        %v204 = vpop.trf.xlu0
        %s205 = scalar_lea.vmem %s149, 16 [#allocation2]
        %v206 = vld [vmem:[%s205] sm:$0xff]
        %v207 = vld [vmem:[%s205 + $0x8] sm:$0xff]
        %208 = vxpose.xlu0.b32.start [1/16] %v206, 128
        %209 = vxpose.xlu0.b32.cont [2/16] %v207, 128
        %210 = vxpose.xlu0.b32.cont [3/16] 0.0, 128
        %211 = vxpose.xlu0.b32.cont [4/16] 0.0, 128
        %212 = vxpose.xlu0.b32.cont [5/16] 0.0, 128
        %213 = vxpose.xlu0.b32.cont [6/16] 0.0, 128
        %214 = vxpose.xlu0.b32.cont [7/16] 0.0, 128
        %215 = vxpose.xlu0.b32.cont [8/16] 0.0, 128
        %216 = vxpose.xlu0.b32.cont [9/16] 0.0, 128
        %217 = vxpose.xlu0.b32.cont [10/16] 0.0, 128
        %218 = vxpose.xlu0.b32.cont [11/16] 0.0, 128
        %219 = vxpose.xlu0.b32.cont [12/16] 0.0, 128
        %220 = vxpose.xlu0.b32.cont [13/16] 0.0, 128
        %221 = vxpose.xlu0.b32.cont [14/16] 0.0, 128
        %222 = vxpose.xlu0.b32.cont [15/16] 0.0, 128
        %223 = vxpose.xlu0.b32.end [16/16] 0.0, 128
        %v224 = vpop.trf.xlu0
        %v225 = vpop.trf.xlu0
        %v226 = vpop.trf.xlu0
        %v227 = vpop.trf.xlu0
        %v228 = vpop.trf.xlu0
        %v229 = vpop.trf.xlu0
        %v230 = vpop.trf.xlu0
        %v231 = vpop.trf.xlu0
        %v232 = vpop.trf.xlu0
        %v233 = vpop.trf.xlu0
        %v234 = vpop.trf.xlu0
        %v235 = vpop.trf.xlu0
        %v236 = vpop.trf.xlu0
        %v237 = vpop.trf.xlu0
        %v238 = vpop.trf.xlu0
        %v239 = vpop.trf.xlu0
        %v248 = vrot.slane %v189, 1
        %v249 = vrot.slane %v189, 2
        %v250 = vrot.slane %v189, 3
        %v251 = vrot.slane %v189, 4
        %v252 = vrot.slane %v189, 5
        %v253 = vrot.slane %v189, 6
        %v254 = vrot.slane %v189, 7
        %v255 = vrot.slane %v190, 1
        %v256 = vrot.slane %v190, 2
        %v257 = vrot.slane %v190, 3
        %v258 = vrot.slane %v190, 4
        %v259 = vrot.slane %v190, 5
        %v260 = vrot.slane %v190, 6
        %v261 = vrot.slane %v190, 7
        %v262 = vrot.slane %v191, 1
        %v263 = vrot.slane %v191, 2
        %v264 = vrot.slane %v191, 3
        %v265 = vrot.slane %v191, 4
        %v266 = vrot.slane %v191, 5
        %v267 = vrot.slane %v191, 6
        %v268 = vrot.slane %v191, 7
        %v269 = vrot.slane %v192, 1
        %v270 = vrot.slane %v192, 2
        %v271 = vrot.slane %v192, 3
        %v272 = vrot.slane %v192, 4
        %v273 = vrot.slane %v192, 5
        %v274 = vrot.slane %v192, 6
        %v275 = vrot.slane %v192, 7
        %v276 = vrot.slane %v193, 1
        %v277 = vrot.slane %v193, 2
        %v278 = vrot.slane %v193, 3
        %v279 = vrot.slane %v193, 4
        %v280 = vrot.slane %v193, 5
        %v281 = vrot.slane %v193, 6
        %v282 = vrot.slane %v193, 7
        %v283 = vrot.slane %v194, 1
        %v284 = vrot.slane %v194, 2
        %v285 = vrot.slane %v194, 3
        %v286 = vrot.slane %v194, 4
        %v287 = vrot.slane %v194, 5
        %v288 = vrot.slane %v194, 6
        %v289 = vrot.slane %v194, 7
        %v290 = vrot.slane %v195, 1
        %v291 = vrot.slane %v195, 2
        %v292 = vrot.slane %v195, 3
        %v293 = vrot.slane %v195, 4
        %v294 = vrot.slane %v195, 5
        %v295 = vrot.slane %v195, 6
        %v296 = vrot.slane %v195, 7
        %v297 = vrot.slane %v196, 1
        %v298 = vrot.slane %v196, 2
        %v299 = vrot.slane %v196, 3
        %v300 = vrot.slane %v196, 4
        %v301 = vrot.slane %v196, 5
        %v302 = vrot.slane %v196, 6
        %v303 = vrot.slane %v196, 7
        %v368 = vrot.slane %v224, 1
        %v369 = vrot.slane %v224, 2
        %v370 = vrot.slane %v224, 3
        %v371 = vrot.slane %v224, 4
        %v372 = vrot.slane %v224, 5
        %v373 = vrot.slane %v224, 6
        %v374 = vrot.slane %v224, 7
        %v375 = vrot.slane %v225, 1
        %v376 = vrot.slane %v225, 2
        %v377 = vrot.slane %v225, 3
        %v378 = vrot.slane %v225, 4
        %v379 = vrot.slane %v225, 5
        %v380 = vrot.slane %v225, 6
        %v381 = vrot.slane %v225, 7
        %v382 = vrot.slane %v226, 1
        %v383 = vrot.slane %v226, 2
        %v384 = vrot.slane %v226, 3
        %v385 = vrot.slane %v226, 4
        %v386 = vrot.slane %v226, 5
        %v387 = vrot.slane %v226, 6
        %v388 = vrot.slane %v226, 7
        %v389 = vrot.slane %v227, 1
        %v390 = vrot.slane %v227, 2
        %v391 = vrot.slane %v227, 3
        %v392 = vrot.slane %v227, 4
        %v393 = vrot.slane %v227, 5
        %v394 = vrot.slane %v227, 6
        %v395 = vrot.slane %v227, 7
        %v396 = vrot.slane %v228, 1
        %v397 = vrot.slane %v228, 2
        %v398 = vrot.slane %v228, 3
        %v399 = vrot.slane %v228, 4
        %v400 = vrot.slane %v228, 5
        %v401 = vrot.slane %v228, 6
        %v402 = vrot.slane %v228, 7
        %v403 = vrot.slane %v229, 1
        %v404 = vrot.slane %v229, 2
        %v405 = vrot.slane %v229, 3
        %v406 = vrot.slane %v229, 4
        %v407 = vrot.slane %v229, 5
        %v408 = vrot.slane %v229, 6
        %v409 = vrot.slane %v229, 7
        %v410 = vrot.slane %v230, 1
        %v411 = vrot.slane %v230, 2
        %v412 = vrot.slane %v230, 3
        %v413 = vrot.slane %v230, 4
        %v414 = vrot.slane %v230, 5
        %v415 = vrot.slane %v230, 6
        %v416 = vrot.slane %v230, 7
        %v417 = vrot.slane %v231, 1
        %v418 = vrot.slane %v231, 2
        %v419 = vrot.slane %v231, 3
        %v420 = vrot.slane %v231, 4
        %v421 = vrot.slane %v231, 5
        %v422 = vrot.slane %v231, 6
        %v423 = vrot.slane %v231, 7
        %v480 = vperm.slane %v224, 0
        %v481 = vperm.slane %v368, 0
        %v482 = vperm.slane %v369, 0
        %v483 = vperm.slane %v370, 0
        %v484 = vperm.slane %v371, 0
        %v485 = vperm.slane %v372, 0
        %v486 = vperm.slane %v373, 0
        %v487 = vperm.slane %v374, 0
        %v488 = vperm.slane %v225, 0
        %v489 = vperm.slane %v375, 0
        %v490 = vperm.slane %v376, 0
        %v491 = vperm.slane %v377, 0
        %v492 = vperm.slane %v378, 0
        %v493 = vperm.slane %v379, 0
        %v494 = vperm.slane %v380, 0
        %v495 = vperm.slane %v381, 0
        %v496 = vperm.slane %v226, 0
        %v497 = vperm.slane %v382, 0
        %v498 = vperm.slane %v383, 0
        %v499 = vperm.slane %v384, 0
        %v500 = vperm.slane %v385, 0
        %v501 = vperm.slane %v386, 0
        %v502 = vperm.slane %v387, 0
        %v503 = vperm.slane %v388, 0
        %v504 = vperm.slane %v227, 0
        %v505 = vperm.slane %v389, 0
        %v506 = vperm.slane %v390, 0
        %v507 = vperm.slane %v391, 0
        %v508 = vperm.slane %v392, 0
        %v509 = vperm.slane %v393, 0
        %v510 = vperm.slane %v394, 0
        %v511 = vperm.slane %v395, 0
        %v512 = vperm.slane %v228, 0
        %v513 = vperm.slane %v396, 0
        %v514 = vperm.slane %v397, 0
        %v515 = vperm.slane %v398, 0
        %v516 = vperm.slane %v399, 0
        %v517 = vperm.slane %v400, 0
        %v518 = vperm.slane %v401, 0
        %v519 = vperm.slane %v402, 0
        %v520 = vperm.slane %v229, 0
        %v521 = vperm.slane %v403, 0
        %v522 = vperm.slane %v404, 0
        %v523 = vperm.slane %v405, 0
        %v524 = vperm.slane %v406, 0
        %v525 = vperm.slane %v407, 0
        %v526 = vperm.slane %v408, 0
        %v527 = vperm.slane %v409, 0
        %v528 = vperm.slane %v230, 0
        %v529 = vperm.slane %v410, 0
        %v530 = vperm.slane %v411, 0
        %v531 = vperm.slane %v412, 0
        %v532 = vperm.slane %v413, 0
        %v533 = vperm.slane %v414, 0
        %v534 = vperm.slane %v415, 0
        %v535 = vperm.slane %v416, 0
        %v536 = vperm.slane %v231, 0
        %v537 = vperm.slane %v417, 0
        %v538 = vperm.slane %v418, 0
        %v539 = vperm.slane %v419, 0
        %v540 = vperm.slane %v420, 0
        %v541 = vperm.slane %v421, 0
        %v542 = vperm.slane %v422, 0
        %v543 = vperm.slane %v423, 0
        %vm608 = vcmask 1040384
        %v609 = vsel %vm608, %v189, %v480
        %v610 = vsel %vm608, %v248, %v481
        %v611 = vsel %vm608, %v249, %v482
        %v612 = vsel %vm608, %v250, %v483
        %v613 = vsel %vm608, %v251, %v484
        %v614 = vsel %vm608, %v252, %v485
        %v615 = vsel %vm608, %v253, %v486
        %v616 = vsel %vm608, %v254, %v487
        %v617 = vsel %vm608, %v190, %v488
        %v618 = vsel %vm608, %v255, %v489
        %v619 = vsel %vm608, %v256, %v490
        %v620 = vsel %vm608, %v257, %v491
        %v621 = vsel %vm608, %v258, %v492
        %v622 = vsel %vm608, %v259, %v493
        %v623 = vsel %vm608, %v260, %v494
        %v624 = vsel %vm608, %v261, %v495
        %v625 = vsel %vm608, %v191, %v496
        %v626 = vsel %vm608, %v262, %v497
        %v627 = vsel %vm608, %v263, %v498
        %v628 = vsel %vm608, %v264, %v499
        %v629 = vsel %vm608, %v265, %v500
        %v630 = vsel %vm608, %v266, %v501
        %v631 = vsel %vm608, %v267, %v502
        %v632 = vsel %vm608, %v268, %v503
        %v633 = vsel %vm608, %v192, %v504
        %v634 = vsel %vm608, %v269, %v505
        %v635 = vsel %vm608, %v270, %v506
        %v636 = vsel %vm608, %v271, %v507
        %v637 = vsel %vm608, %v272, %v508
        %v638 = vsel %vm608, %v273, %v509
        %v639 = vsel %vm608, %v274, %v510
        %v640 = vsel %vm608, %v275, %v511
        %v641 = vsel %vm608, %v193, %v512
        %v642 = vsel %vm608, %v276, %v513
        %v643 = vsel %vm608, %v277, %v514
        %v644 = vsel %vm608, %v278, %v515
        %v645 = vsel %vm608, %v279, %v516
        %v646 = vsel %vm608, %v280, %v517
        %v647 = vsel %vm608, %v281, %v518
        %v648 = vsel %vm608, %v282, %v519
        %v649 = vsel %vm608, %v194, %v520
        %v650 = vsel %vm608, %v283, %v521
        %v651 = vsel %vm608, %v284, %v522
        %v652 = vsel %vm608, %v285, %v523
        %v653 = vsel %vm608, %v286, %v524
        %v654 = vsel %vm608, %v287, %v525
        %v655 = vsel %vm608, %v288, %v526
        %v656 = vsel %vm608, %v289, %v527
        %v657 = vsel %vm608, %v195, %v528
        %v658 = vsel %vm608, %v290, %v529
        %v659 = vsel %vm608, %v291, %v530
        %v660 = vsel %vm608, %v292, %v531
        %v661 = vsel %vm608, %v293, %v532
        %v662 = vsel %vm608, %v294, %v533
        %v663 = vsel %vm608, %v295, %v534
        %v664 = vsel %vm608, %v296, %v535
        %v665 = vsel %vm608, %v196, %v536
        %v666 = vsel %vm608, %v297, %v537
        %v667 = vsel %vm608, %v298, %v538
        %v668 = vsel %vm608, %v299, %v539
        %v669 = vsel %vm608, %v300, %v540
        %v670 = vsel %vm608, %v301, %v541
        %v671 = vsel %vm608, %v302, %v542
        %v672 = vsel %vm608, %v303, %v543
        %737 = vst [vmem:[#allocation1] ss:$4 sm:$0xff] %v609
        %s738 = scalar_lea.vmem [#allocation1], 1
        %739 = vst [vmem:[%s738] ss:$4 sm:$0xff] %v610
        %s740 = scalar_lea.vmem [#allocation1], 2
        %741 = vst [vmem:[%s740] ss:$4 sm:$0xff] %v611
        %s742 = scalar_lea.vmem [#allocation1], 3
        %743 = vst [vmem:[%s742] ss:$4 sm:$0xff] %v612
        %s744 = scalar_lea.vmem [#allocation1], 32
        %745 = vst [vmem:[%s744] ss:$4 sm:$0xff] %v613
        %s746 = scalar_lea.vmem [#allocation1], 33
        %747 = vst [vmem:[%s746] ss:$4 sm:$0xff] %v614
        %s748 = scalar_lea.vmem [#allocation1], 34
        %749 = vst [vmem:[%s748] ss:$4 sm:$0xff] %v615
        %s750 = scalar_lea.vmem [#allocation1], 35
        %751 = vst [vmem:[%s750] ss:$4 sm:$0xff] %v616
        %v752 = vld.sshfl [vmem:[#allocation1] sm:$0xff pattern:$0x73625140]
        %v753 = vld.sshfl [vmem:[#allocation1 + $0x20] sm:$0xff pattern:$0x73625140]
        %754 = vst [vmem:[#allocation1] ss:$4 sm:$0xff] %v617
        %755 = vst [vmem:[%s738] ss:$4 sm:$0xff] %v618
        %756 = vst [vmem:[%s740] ss:$4 sm:$0xff] %v619
        %757 = vst [vmem:[%s742] ss:$4 sm:$0xff] %v620
        %758 = vst [vmem:[%s744] ss:$4 sm:$0xff] %v621
        %759 = vst [vmem:[%s746] ss:$4 sm:$0xff] %v622
        %760 = vst [vmem:[%s748] ss:$4 sm:$0xff] %v623
        %761 = vst [vmem:[%s750] ss:$4 sm:$0xff] %v624
        %v762 = vld.sshfl [vmem:[#allocation1] sm:$0xff pattern:$0x73625140]
        %v763 = vld.sshfl [vmem:[#allocation1 + $0x20] sm:$0xff pattern:$0x73625140]
        %764 = vst [vmem:[#allocation1] ss:$4 sm:$0xff] %v625
        %765 = vst [vmem:[%s738] ss:$4 sm:$0xff] %v626
        %766 = vst [vmem:[%s740] ss:$4 sm:$0xff] %v627
        %767 = vst [vmem:[%s742] ss:$4 sm:$0xff] %v628
        %768 = vst [vmem:[%s744] ss:$4 sm:$0xff] %v629
        %769 = vst [vmem:[%s746] ss:$4 sm:$0xff] %v630
        %770 = vst [vmem:[%s748] ss:$4 sm:$0xff] %v631
        %771 = vst [vmem:[%s750] ss:$4 sm:$0xff] %v632
        %v772 = vld.sshfl [vmem:[#allocation1] sm:$0xff pattern:$0x73625140]
        %v773 = vld.sshfl [vmem:[#allocation1 + $0x20] sm:$0xff pattern:$0x73625140]
        %774 = vst [vmem:[#allocation1] ss:$4 sm:$0xff] %v633
        %775 = vst [vmem:[%s738] ss:$4 sm:$0xff] %v634
        %776 = vst [vmem:[%s740] ss:$4 sm:$0xff] %v635
        %777 = vst [vmem:[%s742] ss:$4 sm:$0xff] %v636
        %778 = vst [vmem:[%s744] ss:$4 sm:$0xff] %v637
        %779 = vst [vmem:[%s746] ss:$4 sm:$0xff] %v638
        %780 = vst [vmem:[%s748] ss:$4 sm:$0xff] %v639
        %781 = vst [vmem:[%s750] ss:$4 sm:$0xff] %v640
        %v782 = vld.sshfl [vmem:[#allocation1] sm:$0xff pattern:$0x73625140]
        %v783 = vld.sshfl [vmem:[#allocation1 + $0x20] sm:$0xff pattern:$0x73625140]
        %784 = vst [vmem:[#allocation1] ss:$4 sm:$0xff] %v641
        %785 = vst [vmem:[%s738] ss:$4 sm:$0xff] %v642
        %786 = vst [vmem:[%s740] ss:$4 sm:$0xff] %v643
        %787 = vst [vmem:[%s742] ss:$4 sm:$0xff] %v644
        %788 = vst [vmem:[%s744] ss:$4 sm:$0xff] %v645
        %789 = vst [vmem:[%s746] ss:$4 sm:$0xff] %v646
        %790 = vst [vmem:[%s748] ss:$4 sm:$0xff] %v647
        %791 = vst [vmem:[%s750] ss:$4 sm:$0xff] %v648
        %v792 = vld.sshfl [vmem:[#allocation1] sm:$0xff pattern:$0x73625140]
        %v793 = vld.sshfl [vmem:[#allocation1 + $0x20] sm:$0xff pattern:$0x73625140]
        %794 = vst [vmem:[#allocation1] ss:$4 sm:$0xff] %v649
        %795 = vst [vmem:[%s738] ss:$4 sm:$0xff] %v650
        %796 = vst [vmem:[%s740] ss:$4 sm:$0xff] %v651
        %797 = vst [vmem:[%s742] ss:$4 sm:$0xff] %v652
        %798 = vst [vmem:[%s744] ss:$4 sm:$0xff] %v653
        %799 = vst [vmem:[%s746] ss:$4 sm:$0xff] %v654
        %800 = vst [vmem:[%s748] ss:$4 sm:$0xff] %v655
        %801 = vst [vmem:[%s750] ss:$4 sm:$0xff] %v656
        %v802 = vld.sshfl [vmem:[#allocation1] sm:$0xff pattern:$0x73625140]
        %v803 = vld.sshfl [vmem:[#allocation1 + $0x20] sm:$0xff pattern:$0x73625140]
        %804 = vst [vmem:[#allocation1] ss:$4 sm:$0xff] %v657
        %805 = vst [vmem:[%s738] ss:$4 sm:$0xff] %v658
        %806 = vst [vmem:[%s740] ss:$4 sm:$0xff] %v659
        %807 = vst [vmem:[%s742] ss:$4 sm:$0xff] %v660
        %808 = vst [vmem:[%s744] ss:$4 sm:$0xff] %v661
        %809 = vst [vmem:[%s746] ss:$4 sm:$0xff] %v662
        %810 = vst [vmem:[%s748] ss:$4 sm:$0xff] %v663
        %811 = vst [vmem:[%s750] ss:$4 sm:$0xff] %v664
        %v812 = vld.sshfl [vmem:[#allocation1] sm:$0xff pattern:$0x73625140]
        %v813 = vld.sshfl [vmem:[#allocation1 + $0x20] sm:$0xff pattern:$0x73625140]
        %814 = vst [vmem:[#allocation1] ss:$4 sm:$0xff] %v665
        %815 = vst [vmem:[%s738] ss:$4 sm:$0xff] %v666
        %816 = vst [vmem:[%s740] ss:$4 sm:$0xff] %v667
        %817 = vst [vmem:[%s742] ss:$4 sm:$0xff] %v668
        %818 = vst [vmem:[%s744] ss:$4 sm:$0xff] %v669
        %819 = vst [vmem:[%s746] ss:$4 sm:$0xff] %v670
        %820 = vst [vmem:[%s748] ss:$4 sm:$0xff] %v671
        %821 = vst [vmem:[%s750] ss:$4 sm:$0xff] %v672
        %v822 = vld.sshfl [vmem:[#allocation1] sm:$0xff pattern:$0x73625140]
        %v823 = vld.sshfl [vmem:[#allocation1 + $0x20] sm:$0xff pattern:$0x73625140]
        %840 = vxpose.xlu0.b32.start [1/16] %v752, 128
        %841 = vxpose.xlu0.b32.cont [2/16] %v753, 128
        %842 = vxpose.xlu0.b32.cont [3/16] %v762, 128
        %843 = vxpose.xlu0.b32.cont [4/16] %v763, 128
        %844 = vxpose.xlu0.b32.cont [5/16] %v772, 128
        %845 = vxpose.xlu0.b32.cont [6/16] %v773, 128
        %846 = vxpose.xlu0.b32.cont [7/16] %v782, 128
        %847 = vxpose.xlu0.b32.cont [8/16] %v783, 128
        %848 = vxpose.xlu0.b32.cont [9/16] %v792, 128
        %849 = vxpose.xlu0.b32.cont [10/16] %v793, 128
        %850 = vxpose.xlu0.b32.cont [11/16] %v802, 128
        %851 = vxpose.xlu0.b32.cont [12/16] %v803, 128
        %852 = vxpose.xlu0.b32.cont [13/16] %v812, 128
        %853 = vxpose.xlu0.b32.cont [14/16] %v813, 128
        %854 = vxpose.xlu0.b32.cont [15/16] %v822, 128
        %855 = vxpose.xlu0.b32.end [16/16] %v823, 128
        %v856 = vpop.trf.xlu0
        %v857 = vpop.trf.xlu0
        %v858 = vpop.trf.xlu0
        %v859 = vpop.trf.xlu0
        %v860 = vpop.trf.xlu0
        %v861 = vpop.trf.xlu0
        %v862 = vpop.trf.xlu0
        %v863 = vpop.trf.xlu0
        %v864 = vpop.trf.xlu0
        %v865 = vpop.trf.xlu0
        %v866 = vpop.trf.xlu0
        %v867 = vpop.trf.xlu0
        %v868 = vpop.trf.xlu0
        %v869 = vpop.trf.xlu0
        %v870 = vpop.trf.xlu0
        %v871 = vpop.trf.xlu0
        %v872 = vperm.slane %v189, 0
        %v873 = vperm.slane %v248, 0
        %v874 = vperm.slane %v249, 0
        %v875 = vperm.slane %v250, 0
        %v876 = vperm.slane %v251, 0
        %v877 = vperm.slane %v252, 0
        %v878 = vperm.slane %v253, 0
        %v879 = vperm.slane %v254, 0
        %v880 = vperm.slane %v190, 0
        %v881 = vperm.slane %v255, 0
        %v882 = vperm.slane %v256, 0
        %v883 = vperm.slane %v257, 0
        %v884 = vperm.slane %v258, 0
        %v885 = vperm.slane %v259, 0
        %v886 = vperm.slane %v260, 0
        %v887 = vperm.slane %v261, 0
        %v888 = vperm.slane %v191, 0
        %v889 = vperm.slane %v262, 0
        %v890 = vperm.slane %v263, 0
        %v891 = vperm.slane %v264, 0
        %v892 = vperm.slane %v265, 0
        %v893 = vperm.slane %v266, 0
        %v894 = vperm.slane %v267, 0
        %v895 = vperm.slane %v268, 0
        %v896 = vperm.slane %v192, 0
        %v897 = vperm.slane %v269, 0
        %v898 = vperm.slane %v270, 0
        %v899 = vperm.slane %v271, 0
        %v900 = vperm.slane %v272, 0
        %v901 = vperm.slane %v273, 0
        %v902 = vperm.slane %v274, 0
        %v903 = vperm.slane %v275, 0
        %v904 = vperm.slane %v193, 0
        %v905 = vperm.slane %v276, 0
        %v906 = vperm.slane %v277, 0
        %v907 = vperm.slane %v278, 0
        %v908 = vperm.slane %v279, 0
        %v909 = vperm.slane %v280, 0
        %v910 = vperm.slane %v281, 0
        %v911 = vperm.slane %v282, 0
        %v912 = vperm.slane %v194, 0
        %v913 = vperm.slane %v283, 0
        %v914 = vperm.slane %v284, 0
        %v915 = vperm.slane %v285, 0
        %v916 = vperm.slane %v286, 0
        %v917 = vperm.slane %v287, 0
        %v918 = vperm.slane %v288, 0
        %v919 = vperm.slane %v289, 0
        %v920 = vperm.slane %v195, 0
        %v921 = vperm.slane %v290, 0
        %v922 = vperm.slane %v291, 0
        %v923 = vperm.slane %v292, 0
        %v924 = vperm.slane %v293, 0
        %v925 = vperm.slane %v294, 0
        %v926 = vperm.slane %v295, 0
        %v927 = vperm.slane %v296, 0
        %v928 = vperm.slane %v196, 0
        %v929 = vperm.slane %v297, 0
        %v930 = vperm.slane %v298, 0
        %v931 = vperm.slane %v299, 0
        %v932 = vperm.slane %v300, 0
        %v933 = vperm.slane %v301, 0
        %v934 = vperm.slane %v302, 0
        %v935 = vperm.slane %v303, 0
        %v1000 = vsel %vm608, %v224, %v872
        %v1001 = vsel %vm608, %v368, %v873
        %v1002 = vsel %vm608, %v369, %v874
        %v1003 = vsel %vm608, %v370, %v875
        %v1004 = vsel %vm608, %v371, %v876
        %v1005 = vsel %vm608, %v372, %v877
        %v1006 = vsel %vm608, %v373, %v878
        %v1007 = vsel %vm608, %v374, %v879
        %v1008 = vsel %vm608, %v225, %v880
        %v1009 = vsel %vm608, %v375, %v881
        %v1010 = vsel %vm608, %v376, %v882
        %v1011 = vsel %vm608, %v377, %v883
        %v1012 = vsel %vm608, %v378, %v884
        %v1013 = vsel %vm608, %v379, %v885
        %v1014 = vsel %vm608, %v380, %v886
        %v1015 = vsel %vm608, %v381, %v887
        %v1016 = vsel %vm608, %v226, %v888
        %v1017 = vsel %vm608, %v382, %v889
        %v1018 = vsel %vm608, %v383, %v890
        %v1019 = vsel %vm608, %v384, %v891
        %v1020 = vsel %vm608, %v385, %v892
        %v1021 = vsel %vm608, %v386, %v893
        %v1022 = vsel %vm608, %v387, %v894
        %v1023 = vsel %vm608, %v388, %v895
        %v1024 = vsel %vm608, %v227, %v896
        %v1025 = vsel %vm608, %v389, %v897
        %v1026 = vsel %vm608, %v390, %v898
        %v1027 = vsel %vm608, %v391, %v899
        %v1028 = vsel %vm608, %v392, %v900
        %v1029 = vsel %vm608, %v393, %v901
        %v1030 = vsel %vm608, %v394, %v902
        %v1031 = vsel %vm608, %v395, %v903
        %v1032 = vsel %vm608, %v228, %v904
        %v1033 = vsel %vm608, %v396, %v905
        %v1034 = vsel %vm608, %v397, %v906
        %v1035 = vsel %vm608, %v398, %v907
        %v1036 = vsel %vm608, %v399, %v908
        %v1037 = vsel %vm608, %v400, %v909
        %v1038 = vsel %vm608, %v401, %v910
        %v1039 = vsel %vm608, %v402, %v911
        %v1040 = vsel %vm608, %v229, %v912
        %v1041 = vsel %vm608, %v403, %v913
        %v1042 = vsel %vm608, %v404, %v914
        %v1043 = vsel %vm608, %v405, %v915
        %v1044 = vsel %vm608, %v406, %v916
        %v1045 = vsel %vm608, %v407, %v917
        %v1046 = vsel %vm608, %v408, %v918
        %v1047 = vsel %vm608, %v409, %v919
        %v1048 = vsel %vm608, %v230, %v920
        %v1049 = vsel %vm608, %v410, %v921
        %v1050 = vsel %vm608, %v411, %v922
        %v1051 = vsel %vm608, %v412, %v923
        %v1052 = vsel %vm608, %v413, %v924
        %v1053 = vsel %vm608, %v414, %v925
        %v1054 = vsel %vm608, %v415, %v926
        %v1055 = vsel %vm608, %v416, %v927
        %v1056 = vsel %vm608, %v231, %v928
        %v1057 = vsel %vm608, %v417, %v929
        %v1058 = vsel %vm608, %v418, %v930
        %v1059 = vsel %vm608, %v419, %v931
        %v1060 = vsel %vm608, %v420, %v932
        %v1061 = vsel %vm608, %v421, %v933
        %v1062 = vsel %vm608, %v422, %v934
        %v1063 = vsel %vm608, %v423, %v935
        %1128 = vst [vmem:[#allocation1] ss:$4 sm:$0xff] %v1000
        %s1129 = scalar_lea.vmem [#allocation1], 1
        %1130 = vst [vmem:[%s1129] ss:$4 sm:$0xff] %v1001
        %s1131 = scalar_lea.vmem [#allocation1], 2
        %1132 = vst [vmem:[%s1131] ss:$4 sm:$0xff] %v1002
        %s1133 = scalar_lea.vmem [#allocation1], 3
        %1134 = vst [vmem:[%s1133] ss:$4 sm:$0xff] %v1003
        %s1135 = scalar_lea.vmem [#allocation1], 32
        %1136 = vst [vmem:[%s1135] ss:$4 sm:$0xff] %v1004
        %s1137 = scalar_lea.vmem [#allocation1], 33
        %1138 = vst [vmem:[%s1137] ss:$4 sm:$0xff] %v1005
        %s1139 = scalar_lea.vmem [#allocation1], 34
        %1140 = vst [vmem:[%s1139] ss:$4 sm:$0xff] %v1006
        %s1141 = scalar_lea.vmem [#allocation1], 35
        %1142 = vst [vmem:[%s1141] ss:$4 sm:$0xff] %v1007
        %v1143 = vld.sshfl [vmem:[#allocation1] sm:$0xff pattern:$0x73625140]
        %v1144 = vld.sshfl [vmem:[#allocation1 + $0x20] sm:$0xff pattern:$0x73625140]
        %1145 = vst [vmem:[#allocation1] ss:$4 sm:$0xff] %v1008
        %1146 = vst [vmem:[%s1129] ss:$4 sm:$0xff] %v1009
        %1147 = vst [vmem:[%s1131] ss:$4 sm:$0xff] %v1010
        %1148 = vst [vmem:[%s1133] ss:$4 sm:$0xff] %v1011
        %1149 = vst [vmem:[%s1135] ss:$4 sm:$0xff] %v1012
        %1150 = vst [vmem:[%s1137] ss:$4 sm:$0xff] %v1013
        %1151 = vst [vmem:[%s1139] ss:$4 sm:$0xff] %v1014
        %1152 = vst [vmem:[%s1141] ss:$4 sm:$0xff] %v1015
        %v1153 = vld.sshfl [vmem:[#allocation1] sm:$0xff pattern:$0x73625140]
        %v1154 = vld.sshfl [vmem:[#allocation1 + $0x20] sm:$0xff pattern:$0x73625140]
        %1155 = vst [vmem:[#allocation1] ss:$4 sm:$0xff] %v1016
        %1156 = vst [vmem:[%s1129] ss:$4 sm:$0xff] %v1017
        %1157 = vst [vmem:[%s1131] ss:$4 sm:$0xff] %v1018
        %1158 = vst [vmem:[%s1133] ss:$4 sm:$0xff] %v1019
        %1159 = vst [vmem:[%s1135] ss:$4 sm:$0xff] %v1020
        %1160 = vst [vmem:[%s1137] ss:$4 sm:$0xff] %v1021
        %1161 = vst [vmem:[%s1139] ss:$4 sm:$0xff] %v1022
        %1162 = vst [vmem:[%s1141] ss:$4 sm:$0xff] %v1023
        %v1163 = vld.sshfl [vmem:[#allocation1] sm:$0xff pattern:$0x73625140]
        %v1164 = vld.sshfl [vmem:[#allocation1 + $0x20] sm:$0xff pattern:$0x73625140]
        %1165 = vst [vmem:[#allocation1] ss:$4 sm:$0xff] %v1024
        %1166 = vst [vmem:[%s1129] ss:$4 sm:$0xff] %v1025
        %1167 = vst [vmem:[%s1131] ss:$4 sm:$0xff] %v1026
        %1168 = vst [vmem:[%s1133] ss:$4 sm:$0xff] %v1027
        %1169 = vst [vmem:[%s1135] ss:$4 sm:$0xff] %v1028
        %1170 = vst [vmem:[%s1137] ss:$4 sm:$0xff] %v1029
        %1171 = vst [vmem:[%s1139] ss:$4 sm:$0xff] %v1030
        %1172 = vst [vmem:[%s1141] ss:$4 sm:$0xff] %v1031
        %v1173 = vld.sshfl [vmem:[#allocation1] sm:$0xff pattern:$0x73625140]
        %v1174 = vld.sshfl [vmem:[#allocation1 + $0x20] sm:$0xff pattern:$0x73625140]
        %1175 = vst [vmem:[#allocation1] ss:$4 sm:$0xff] %v1032
        %1176 = vst [vmem:[%s1129] ss:$4 sm:$0xff] %v1033
        %1177 = vst [vmem:[%s1131] ss:$4 sm:$0xff] %v1034
        %1178 = vst [vmem:[%s1133] ss:$4 sm:$0xff] %v1035
        %1179 = vst [vmem:[%s1135] ss:$4 sm:$0xff] %v1036
        %1180 = vst [vmem:[%s1137] ss:$4 sm:$0xff] %v1037
        %1181 = vst [vmem:[%s1139] ss:$4 sm:$0xff] %v1038
        %1182 = vst [vmem:[%s1141] ss:$4 sm:$0xff] %v1039
        %v1183 = vld.sshfl [vmem:[#allocation1] sm:$0xff pattern:$0x73625140]
        %v1184 = vld.sshfl [vmem:[#allocation1 + $0x20] sm:$0xff pattern:$0x73625140]
        %1185 = vst [vmem:[#allocation1] ss:$4 sm:$0xff] %v1040
        %1186 = vst [vmem:[%s1129] ss:$4 sm:$0xff] %v1041
        %1187 = vst [vmem:[%s1131] ss:$4 sm:$0xff] %v1042
        %1188 = vst [vmem:[%s1133] ss:$4 sm:$0xff] %v1043
        %1189 = vst [vmem:[%s1135] ss:$4 sm:$0xff] %v1044
        %1190 = vst [vmem:[%s1137] ss:$4 sm:$0xff] %v1045
        %1191 = vst [vmem:[%s1139] ss:$4 sm:$0xff] %v1046
        %1192 = vst [vmem:[%s1141] ss:$4 sm:$0xff] %v1047
        %v1193 = vld.sshfl [vmem:[#allocation1] sm:$0xff pattern:$0x73625140]
        %v1194 = vld.sshfl [vmem:[#allocation1 + $0x20] sm:$0xff pattern:$0x73625140]
        %1195 = vst [vmem:[#allocation1] ss:$4 sm:$0xff] %v1048
        %1196 = vst [vmem:[%s1129] ss:$4 sm:$0xff] %v1049
        %1197 = vst [vmem:[%s1131] ss:$4 sm:$0xff] %v1050
        %1198 = vst [vmem:[%s1133] ss:$4 sm:$0xff] %v1051
        %1199 = vst [vmem:[%s1135] ss:$4 sm:$0xff] %v1052
        %1200 = vst [vmem:[%s1137] ss:$4 sm:$0xff] %v1053
        %1201 = vst [vmem:[%s1139] ss:$4 sm:$0xff] %v1054
        %1202 = vst [vmem:[%s1141] ss:$4 sm:$0xff] %v1055
        %v1203 = vld.sshfl [vmem:[#allocation1] sm:$0xff pattern:$0x73625140]
        %v1204 = vld.sshfl [vmem:[#allocation1 + $0x20] sm:$0xff pattern:$0x73625140]
        %1205 = vst [vmem:[#allocation1] ss:$4 sm:$0xff] %v1056
        %1206 = vst [vmem:[%s1129] ss:$4 sm:$0xff] %v1057
        %1207 = vst [vmem:[%s1131] ss:$4 sm:$0xff] %v1058
        %1208 = vst [vmem:[%s1133] ss:$4 sm:$0xff] %v1059
        %1209 = vst [vmem:[%s1135] ss:$4 sm:$0xff] %v1060
        %1210 = vst [vmem:[%s1137] ss:$4 sm:$0xff] %v1061
        %1211 = vst [vmem:[%s1139] ss:$4 sm:$0xff] %v1062
        %1212 = vst [vmem:[%s1141] ss:$4 sm:$0xff] %v1063
        %v1213 = vld.sshfl [vmem:[#allocation1] sm:$0xff pattern:$0x73625140]
        %v1214 = vld.sshfl [vmem:[#allocation1 + $0x20] sm:$0xff pattern:$0x73625140]
        %1231 = vxpose.xlu0.b32.start [1/16] %v1143, 128
        %1232 = vxpose.xlu0.b32.cont [2/16] %v1144, 128
        %1233 = vxpose.xlu0.b32.cont [3/16] %v1153, 128
        %1234 = vxpose.xlu0.b32.cont [4/16] %v1154, 128
        %1235 = vxpose.xlu0.b32.cont [5/16] %v1163, 128
        %1236 = vxpose.xlu0.b32.cont [6/16] %v1164, 128
        %1237 = vxpose.xlu0.b32.cont [7/16] %v1173, 128
        %1238 = vxpose.xlu0.b32.cont [8/16] %v1174, 128
        %1239 = vxpose.xlu0.b32.cont [9/16] %v1183, 128
        %1240 = vxpose.xlu0.b32.cont [10/16] %v1184, 128
        %1241 = vxpose.xlu0.b32.cont [11/16] %v1193, 128
        %1242 = vxpose.xlu0.b32.cont [12/16] %v1194, 128
        %1243 = vxpose.xlu0.b32.cont [13/16] %v1203, 128
        %1244 = vxpose.xlu0.b32.cont [14/16] %v1204, 128
        %1245 = vxpose.xlu0.b32.cont [15/16] %v1213, 128
        %1246 = vxpose.xlu0.b32.end [16/16] %v1214, 128
        %v1247 = vpop.trf.xlu0
        %v1248 = vpop.trf.xlu0
        %v1249 = vpop.trf.xlu0
        %v1250 = vpop.trf.xlu0
        %v1251 = vpop.trf.xlu0
        %v1252 = vpop.trf.xlu0
        %v1253 = vpop.trf.xlu0
        %v1254 = vpop.trf.xlu0
        %v1255 = vpop.trf.xlu0
        %v1256 = vpop.trf.xlu0
        %v1257 = vpop.trf.xlu0
        %v1258 = vpop.trf.xlu0
        %v1259 = vpop.trf.xlu0
        %v1260 = vpop.trf.xlu0
        %v1261 = vpop.trf.xlu0
        %v1262 = vpop.trf.xlu0
        %s1263 = scalar_lea.vmem %s149, 32 [#allocation2]
        %v1264 = vld [vmem:[%s1263] sm:$0xff]
        %v1265 = vld [vmem:[%s1263 + $0x8] sm:$0xff]
        %1266 = vxpose.xlu0.b32.start [1/16] %v1264, 128
        %1267 = vxpose.xlu0.b32.cont [2/16] %v1265, 128
        %1268 = vxpose.xlu0.b32.cont [3/16] 0.0, 128
        %1269 = vxpose.xlu0.b32.cont [4/16] 0.0, 128
        %1270 = vxpose.xlu0.b32.cont [5/16] 0.0, 128
        %1271 = vxpose.xlu0.b32.cont [6/16] 0.0, 128
        %1272 = vxpose.xlu0.b32.cont [7/16] 0.0, 128
        %1273 = vxpose.xlu0.b32.cont [8/16] 0.0, 128
        %1274 = vxpose.xlu0.b32.cont [9/16] 0.0, 128
        %1275 = vxpose.xlu0.b32.cont [10/16] 0.0, 128
        %1276 = vxpose.xlu0.b32.cont [11/16] 0.0, 128
        %1277 = vxpose.xlu0.b32.cont [12/16] 0.0, 128
        %1278 = vxpose.xlu0.b32.cont [13/16] 0.0, 128
        %1279 = vxpose.xlu0.b32.cont [14/16] 0.0, 128
        %1280 = vxpose.xlu0.b32.cont [15/16] 0.0, 128
        %1281 = vxpose.xlu0.b32.end [16/16] 0.0, 128
        %v1282 = vpop.trf.xlu0
        %v1283 = vpop.trf.xlu0
        %v1284 = vpop.trf.xlu0
        %v1285 = vpop.trf.xlu0
        %v1286 = vpop.trf.xlu0
        %v1287 = vpop.trf.xlu0
        %v1288 = vpop.trf.xlu0
        %v1289 = vpop.trf.xlu0
        %v1290 = vpop.trf.xlu0
        %v1291 = vpop.trf.xlu0
        %v1292 = vpop.trf.xlu0
        %v1293 = vpop.trf.xlu0
        %v1294 = vpop.trf.xlu0
        %v1295 = vpop.trf.xlu0
        %v1296 = vpop.trf.xlu0
        %v1297 = vpop.trf.xlu0
        %s1298 = scalar_lea.vmem %s149, 48 [#allocation2]
        %v1299 = vld [vmem:[%s1298] sm:$0xff]
        %v1300 = vld [vmem:[%s1298 + $0x8] sm:$0xff]
        %1301 = vxpose.xlu0.b32.start [1/16] %v1299, 128
        %1302 = vxpose.xlu0.b32.cont [2/16] %v1300, 128
        %1303 = vxpose.xlu0.b32.cont [3/16] 0.0, 128
        %1304 = vxpose.xlu0.b32.cont [4/16] 0.0, 128
        %1305 = vxpose.xlu0.b32.cont [5/16] 0.0, 128
        %1306 = vxpose.xlu0.b32.cont [6/16] 0.0, 128
        %1307 = vxpose.xlu0.b32.cont [7/16] 0.0, 128
        %1308 = vxpose.xlu0.b32.cont [8/16] 0.0, 128
        %1309 = vxpose.xlu0.b32.cont [9/16] 0.0, 128
        %1310 = vxpose.xlu0.b32.cont [10/16] 0.0, 128
        %1311 = vxpose.xlu0.b32.cont [11/16] 0.0, 128
        %1312 = vxpose.xlu0.b32.cont [12/16] 0.0, 128
        %1313 = vxpose.xlu0.b32.cont [13/16] 0.0, 128
        %1314 = vxpose.xlu0.b32.cont [14/16] 0.0, 128
        %1315 = vxpose.xlu0.b32.cont [15/16] 0.0, 128
        %1316 = vxpose.xlu0.b32.end [16/16] 0.0, 128
        %v1317 = vpop.trf.xlu0
        %v1318 = vpop.trf.xlu0
        %v1319 = vpop.trf.xlu0
        %v1320 = vpop.trf.xlu0
        %v1321 = vpop.trf.xlu0
        %v1322 = vpop.trf.xlu0
        %v1323 = vpop.trf.xlu0
        %v1324 = vpop.trf.xlu0
        %v1325 = vpop.trf.xlu0
        %v1326 = vpop.trf.xlu0
        %v1327 = vpop.trf.xlu0
        %v1328 = vpop.trf.xlu0
        %v1329 = vpop.trf.xlu0
        %v1330 = vpop.trf.xlu0
        %v1331 = vpop.trf.xlu0
        %v1332 = vpop.trf.xlu0
        %v1341 = vrot.slane %v1282, 1
        %v1342 = vrot.slane %v1282, 2
        %v1343 = vrot.slane %v1282, 3
        %v1344 = vrot.slane %v1282, 4
        %v1345 = vrot.slane %v1282, 5
        %v1346 = vrot.slane %v1282, 6
        %v1347 = vrot.slane %v1282, 7
        %v1348 = vrot.slane %v1283, 1
        %v1349 = vrot.slane %v1283, 2
        %v1350 = vrot.slane %v1283, 3
        %v1351 = vrot.slane %v1283, 4
        %v1352 = vrot.slane %v1283, 5
        %v1353 = vrot.slane %v1283, 6
        %v1354 = vrot.slane %v1283, 7
        %v1355 = vrot.slane %v1284, 1
        %v1356 = vrot.slane %v1284, 2
        %v1357 = vrot.slane %v1284, 3
        %v1358 = vrot.slane %v1284, 4
        %v1359 = vrot.slane %v1284, 5
        %v1360 = vrot.slane %v1284, 6
        %v1361 = vrot.slane %v1284, 7
        %v1362 = vrot.slane %v1285, 1
        %v1363 = vrot.slane %v1285, 2
        %v1364 = vrot.slane %v1285, 3
        %v1365 = vrot.slane %v1285, 4
        %v1366 = vrot.slane %v1285, 5
        %v1367 = vrot.slane %v1285, 6
        %v1368 = vrot.slane %v1285, 7
        %v1369 = vrot.slane %v1286, 1
        %v1370 = vrot.slane %v1286, 2
        %v1371 = vrot.slane %v1286, 3
        %v1372 = vrot.slane %v1286, 4
        %v1373 = vrot.slane %v1286, 5
        %v1374 = vrot.slane %v1286, 6
        %v1375 = vrot.slane %v1286, 7
        %v1376 = vrot.slane %v1287, 1
        %v1377 = vrot.slane %v1287, 2
        %v1378 = vrot.slane %v1287, 3
        %v1379 = vrot.slane %v1287, 4
        %v1380 = vrot.slane %v1287, 5
        %v1381 = vrot.slane %v1287, 6
        %v1382 = vrot.slane %v1287, 7
        %v1383 = vrot.slane %v1288, 1
        %v1384 = vrot.slane %v1288, 2
        %v1385 = vrot.slane %v1288, 3
        %v1386 = vrot.slane %v1288, 4
        %v1387 = vrot.slane %v1288, 5
        %v1388 = vrot.slane %v1288, 6
        %v1389 = vrot.slane %v1288, 7
        %v1390 = vrot.slane %v1289, 1
        %v1391 = vrot.slane %v1289, 2
        %v1392 = vrot.slane %v1289, 3
        %v1393 = vrot.slane %v1289, 4
        %v1394 = vrot.slane %v1289, 5
        %v1395 = vrot.slane %v1289, 6
        %v1396 = vrot.slane %v1289, 7
        %v1461 = vrot.slane %v1317, 1
        %v1462 = vrot.slane %v1317, 2
        %v1463 = vrot.slane %v1317, 3
        %v1464 = vrot.slane %v1317, 4
        %v1465 = vrot.slane %v1317, 5
        %v1466 = vrot.slane %v1317, 6
        %v1467 = vrot.slane %v1317, 7
        %v1468 = vrot.slane %v1318, 1
        %v1469 = vrot.slane %v1318, 2
        %v1470 = vrot.slane %v1318, 3
        %v1471 = vrot.slane %v1318, 4
        %v1472 = vrot.slane %v1318, 5
        %v1473 = vrot.slane %v1318, 6
        %v1474 = vrot.slane %v1318, 7
        %v1475 = vrot.slane %v1319, 1
        %v1476 = vrot.slane %v1319, 2
        %v1477 = vrot.slane %v1319, 3
        %v1478 = vrot.slane %v1319, 4
        %v1479 = vrot.slane %v1319, 5
        %v1480 = vrot.slane %v1319, 6
        %v1481 = vrot.slane %v1319, 7
        %v1482 = vrot.slane %v1320, 1
        %v1483 = vrot.slane %v1320, 2
        %v1484 = vrot.slane %v1320, 3
        %v1485 = vrot.slane %v1320, 4
        %v1486 = vrot.slane %v1320, 5
        %v1487 = vrot.slane %v1320, 6
        %v1488 = vrot.slane %v1320, 7
        %v1489 = vrot.slane %v1321, 1
        %v1490 = vrot.slane %v1321, 2
        %v1491 = vrot.slane %v1321, 3
        %v1492 = vrot.slane %v1321, 4
        %v1493 = vrot.slane %v1321, 5
        %v1494 = vrot.slane %v1321, 6
        %v1495 = vrot.slane %v1321, 7
        %v1496 = vrot.slane %v1322, 1
        %v1497 = vrot.slane %v1322, 2
        %v1498 = vrot.slane %v1322, 3
        %v1499 = vrot.slane %v1322, 4
        %v1500 = vrot.slane %v1322, 5
        %v1501 = vrot.slane %v1322, 6
        %v1502 = vrot.slane %v1322, 7
        %v1503 = vrot.slane %v1323, 1
        %v1504 = vrot.slane %v1323, 2
        %v1505 = vrot.slane %v1323, 3
        %v1506 = vrot.slane %v1323, 4
        %v1507 = vrot.slane %v1323, 5
        %v1508 = vrot.slane %v1323, 6
        %v1509 = vrot.slane %v1323, 7
        %v1510 = vrot.slane %v1324, 1
        %v1511 = vrot.slane %v1324, 2
        %v1512 = vrot.slane %v1324, 3
        %v1513 = vrot.slane %v1324, 4
        %v1514 = vrot.slane %v1324, 5
        %v1515 = vrot.slane %v1324, 6
        %v1516 = vrot.slane %v1324, 7
        %v1573 = vperm.slane %v1317, 0
        %v1574 = vperm.slane %v1461, 0
        %v1575 = vperm.slane %v1462, 0
        %v1576 = vperm.slane %v1463, 0
        %v1577 = vperm.slane %v1464, 0
        %v1578 = vperm.slane %v1465, 0
        %v1579 = vperm.slane %v1466, 0
        %v1580 = vperm.slane %v1467, 0
        %v1581 = vperm.slane %v1318, 0
        %v1582 = vperm.slane %v1468, 0
        %v1583 = vperm.slane %v1469, 0
        %v1584 = vperm.slane %v1470, 0
        %v1585 = vperm.slane %v1471, 0
        %v1586 = vperm.slane %v1472, 0
        %v1587 = vperm.slane %v1473, 0
        %v1588 = vperm.slane %v1474, 0
        %v1589 = vperm.slane %v1319, 0
        %v1590 = vperm.slane %v1475, 0
        %v1591 = vperm.slane %v1476, 0
        %v1592 = vperm.slane %v1477, 0
        %v1593 = vperm.slane %v1478, 0
        %v1594 = vperm.slane %v1479, 0
        %v1595 = vperm.slane %v1480, 0
        %v1596 = vperm.slane %v1481, 0
        %v1597 = vperm.slane %v1320, 0
        %v1598 = vperm.slane %v1482, 0
        %v1599 = vperm.slane %v1483, 0
        %v1600 = vperm.slane %v1484, 0
        %v1601 = vperm.slane %v1485, 0
        %v1602 = vperm.slane %v1486, 0
        %v1603 = vperm.slane %v1487, 0
        %v1604 = vperm.slane %v1488, 0
        %v1605 = vperm.slane %v1321, 0
        %v1606 = vperm.slane %v1489, 0
        %v1607 = vperm.slane %v1490, 0
        %v1608 = vperm.slane %v1491, 0
        %v1609 = vperm.slane %v1492, 0
        %v1610 = vperm.slane %v1493, 0
        %v1611 = vperm.slane %v1494, 0
        %v1612 = vperm.slane %v1495, 0
        %v1613 = vperm.slane %v1322, 0
        %v1614 = vperm.slane %v1496, 0
        %v1615 = vperm.slane %v1497, 0
        %v1616 = vperm.slane %v1498, 0
        %v1617 = vperm.slane %v1499, 0
        %v1618 = vperm.slane %v1500, 0
        %v1619 = vperm.slane %v1501, 0
        %v1620 = vperm.slane %v1502, 0
        %v1621 = vperm.slane %v1323, 0
        %v1622 = vperm.slane %v1503, 0
        %v1623 = vperm.slane %v1504, 0
        %v1624 = vperm.slane %v1505, 0
        %v1625 = vperm.slane %v1506, 0
        %v1626 = vperm.slane %v1507, 0
        %v1627 = vperm.slane %v1508, 0
        %v1628 = vperm.slane %v1509, 0
        %v1629 = vperm.slane %v1324, 0
        %v1630 = vperm.slane %v1510, 0
        %v1631 = vperm.slane %v1511, 0
        %v1632 = vperm.slane %v1512, 0
        %v1633 = vperm.slane %v1513, 0
        %v1634 = vperm.slane %v1514, 0
        %v1635 = vperm.slane %v1515, 0
        %v1636 = vperm.slane %v1516, 0
        %v1701 = vsel %vm608, %v1282, %v1573
        %v1702 = vsel %vm608, %v1341, %v1574
        %v1703 = vsel %vm608, %v1342, %v1575
        %v1704 = vsel %vm608, %v1343, %v1576
        %v1705 = vsel %vm608, %v1344, %v1577
        %v1706 = vsel %vm608, %v1345, %v1578
        %v1707 = vsel %vm608, %v1346, %v1579
        %v1708 = vsel %vm608, %v1347, %v1580
        %v1709 = vsel %vm608, %v1283, %v1581
        %v1710 = vsel %vm608, %v1348, %v1582
        %v1711 = vsel %vm608, %v1349, %v1583
        %v1712 = vsel %vm608, %v1350, %v1584
        %v1713 = vsel %vm608, %v1351, %v1585
        %v1714 = vsel %vm608, %v1352, %v1586
        %v1715 = vsel %vm608, %v1353, %v1587
        %v1716 = vsel %vm608, %v1354, %v1588
        %v1717 = vsel %vm608, %v1284, %v1589
        %v1718 = vsel %vm608, %v1355, %v1590
        %v1719 = vsel %vm608, %v1356, %v1591
        %v1720 = vsel %vm608, %v1357, %v1592
        %v1721 = vsel %vm608, %v1358, %v1593
        %v1722 = vsel %vm608, %v1359, %v1594
        %v1723 = vsel %vm608, %v1360, %v1595
        %v1724 = vsel %vm608, %v1361, %v1596
        %v1725 = vsel %vm608, %v1285, %v1597
        %v1726 = vsel %vm608, %v1362, %v1598
        %v1727 = vsel %vm608, %v1363, %v1599
        %v1728 = vsel %vm608, %v1364, %v1600
        %v1729 = vsel %vm608, %v1365, %v1601
        %v1730 = vsel %vm608, %v1366, %v1602
        %v1731 = vsel %vm608, %v1367, %v1603
        %v1732 = vsel %vm608, %v1368, %v1604
        %v1733 = vsel %vm608, %v1286, %v1605
        %v1734 = vsel %vm608, %v1369, %v1606
        %v1735 = vsel %vm608, %v1370, %v1607
        %v1736 = vsel %vm608, %v1371, %v1608
        %v1737 = vsel %vm608, %v1372, %v1609
        %v1738 = vsel %vm608, %v1373, %v1610
        %v1739 = vsel %vm608, %v1374, %v1611
        %v1740 = vsel %vm608, %v1375, %v1612
        %v1741 = vsel %vm608, %v1287, %v1613
        %v1742 = vsel %vm608, %v1376, %v1614
        %v1743 = vsel %vm608, %v1377, %v1615
        %v1744 = vsel %vm608, %v1378, %v1616
        %v1745 = vsel %vm608, %v1379, %v1617
        %v1746 = vsel %vm608, %v1380, %v1618
        %v1747 = vsel %vm608, %v1381, %v1619
        %v1748 = vsel %vm608, %v1382, %v1620
        %v1749 = vsel %vm608, %v1288, %v1621
        %v1750 = vsel %vm608, %v1383, %v1622
        %v1751 = vsel %vm608, %v1384, %v1623
        %v1752 = vsel %vm608, %v1385, %v1624
        %v1753 = vsel %vm608, %v1386, %v1625
        %v1754 = vsel %vm608, %v1387, %v1626
        %v1755 = vsel %vm608, %v1388, %v1627
        %v1756 = vsel %vm608, %v1389, %v1628
        %v1757 = vsel %vm608, %v1289, %v1629
        %v1758 = vsel %vm608, %v1390, %v1630
        %v1759 = vsel %vm608, %v1391, %v1631
        %v1760 = vsel %vm608, %v1392, %v1632
        %v1761 = vsel %vm608, %v1393, %v1633
        %v1762 = vsel %vm608, %v1394, %v1634
        %v1763 = vsel %vm608, %v1395, %v1635
        %v1764 = vsel %vm608, %v1396, %v1636
        %1829 = vst [vmem:[#allocation1] ss:$4 sm:$0xff] %v1701
        %s1830 = scalar_lea.vmem [#allocation1], 1
        %1831 = vst [vmem:[%s1830] ss:$4 sm:$0xff] %v1702
        %s1832 = scalar_lea.vmem [#allocation1], 2
        %1833 = vst [vmem:[%s1832] ss:$4 sm:$0xff] %v1703
        %s1834 = scalar_lea.vmem [#allocation1], 3
        %1835 = vst [vmem:[%s1834] ss:$4 sm:$0xff] %v1704
        %s1836 = scalar_lea.vmem [#allocation1], 32
        %1837 = vst [vmem:[%s1836] ss:$4 sm:$0xff] %v1705
        %s1838 = scalar_lea.vmem [#allocation1], 33
        %1839 = vst [vmem:[%s1838] ss:$4 sm:$0xff] %v1706
        %s1840 = scalar_lea.vmem [#allocation1], 34
        %1841 = vst [vmem:[%s1840] ss:$4 sm:$0xff] %v1707
        %s1842 = scalar_lea.vmem [#allocation1], 35
        %1843 = vst [vmem:[%s1842] ss:$4 sm:$0xff] %v1708
        %v1844 = vld.sshfl [vmem:[#allocation1] sm:$0xff pattern:$0x73625140]
        %v1845 = vld.sshfl [vmem:[#allocation1 + $0x20] sm:$0xff pattern:$0x73625140]
        %1846 = vst [vmem:[#allocation1] ss:$4 sm:$0xff] %v1709
        %1847 = vst [vmem:[%s1830] ss:$4 sm:$0xff] %v1710
        %1848 = vst [vmem:[%s1832] ss:$4 sm:$0xff] %v1711
        %1849 = vst [vmem:[%s1834] ss:$4 sm:$0xff] %v1712
        %1850 = vst [vmem:[%s1836] ss:$4 sm:$0xff] %v1713
        %1851 = vst [vmem:[%s1838] ss:$4 sm:$0xff] %v1714
        %1852 = vst [vmem:[%s1840] ss:$4 sm:$0xff] %v1715
        %1853 = vst [vmem:[%s1842] ss:$4 sm:$0xff] %v1716
        %v1854 = vld.sshfl [vmem:[#allocation1] sm:$0xff pattern:$0x73625140]
        %v1855 = vld.sshfl [vmem:[#allocation1 + $0x20] sm:$0xff pattern:$0x73625140]
        %1856 = vst [vmem:[#allocation1] ss:$4 sm:$0xff] %v1717
        %1857 = vst [vmem:[%s1830] ss:$4 sm:$0xff] %v1718
        %1858 = vst [vmem:[%s1832] ss:$4 sm:$0xff] %v1719
        %1859 = vst [vmem:[%s1834] ss:$4 sm:$0xff] %v1720
        %1860 = vst [vmem:[%s1836] ss:$4 sm:$0xff] %v1721
        %1861 = vst [vmem:[%s1838] ss:$4 sm:$0xff] %v1722
        %1862 = vst [vmem:[%s1840] ss:$4 sm:$0xff] %v1723
        %1863 = vst [vmem:[%s1842] ss:$4 sm:$0xff] %v1724
        %v1864 = vld.sshfl [vmem:[#allocation1] sm:$0xff pattern:$0x73625140]
        %v1865 = vld.sshfl [vmem:[#allocation1 + $0x20] sm:$0xff pattern:$0x73625140]
        %1866 = vst [vmem:[#allocation1] ss:$4 sm:$0xff] %v1725
        %1867 = vst [vmem:[%s1830] ss:$4 sm:$0xff] %v1726
        %1868 = vst [vmem:[%s1832] ss:$4 sm:$0xff] %v1727
        %1869 = vst [vmem:[%s1834] ss:$4 sm:$0xff] %v1728
        %1870 = vst [vmem:[%s1836] ss:$4 sm:$0xff] %v1729
        %1871 = vst [vmem:[%s1838] ss:$4 sm:$0xff] %v1730
        %1872 = vst [vmem:[%s1840] ss:$4 sm:$0xff] %v1731
        %1873 = vst [vmem:[%s1842] ss:$4 sm:$0xff] %v1732
        %v1874 = vld.sshfl [vmem:[#allocation1] sm:$0xff pattern:$0x73625140]
        %v1875 = vld.sshfl [vmem:[#allocation1 + $0x20] sm:$0xff pattern:$0x73625140]
        %1876 = vst [vmem:[#allocation1] ss:$4 sm:$0xff] %v1733
        %1877 = vst [vmem:[%s1830] ss:$4 sm:$0xff] %v1734
        %1878 = vst [vmem:[%s1832] ss:$4 sm:$0xff] %v1735
        %1879 = vst [vmem:[%s1834] ss:$4 sm:$0xff] %v1736
        %1880 = vst [vmem:[%s1836] ss:$4 sm:$0xff] %v1737
        %1881 = vst [vmem:[%s1838] ss:$4 sm:$0xff] %v1738
        %1882 = vst [vmem:[%s1840] ss:$4 sm:$0xff] %v1739
        %1883 = vst [vmem:[%s1842] ss:$4 sm:$0xff] %v1740
        %v1884 = vld.sshfl [vmem:[#allocation1] sm:$0xff pattern:$0x73625140]
        %v1885 = vld.sshfl [vmem:[#allocation1 + $0x20] sm:$0xff pattern:$0x73625140]
        %1886 = vst [vmem:[#allocation1] ss:$4 sm:$0xff] %v1741
        %1887 = vst [vmem:[%s1830] ss:$4 sm:$0xff] %v1742
        %1888 = vst [vmem:[%s1832] ss:$4 sm:$0xff] %v1743
        %1889 = vst [vmem:[%s1834] ss:$4 sm:$0xff] %v1744
        %1890 = vst [vmem:[%s1836] ss:$4 sm:$0xff] %v1745
        %1891 = vst [vmem:[%s1838] ss:$4 sm:$0xff] %v1746
        %1892 = vst [vmem:[%s1840] ss:$4 sm:$0xff] %v1747
        %1893 = vst [vmem:[%s1842] ss:$4 sm:$0xff] %v1748
        %v1894 = vld.sshfl [vmem:[#allocation1] sm:$0xff pattern:$0x73625140]
        %v1895 = vld.sshfl [vmem:[#allocation1 + $0x20] sm:$0xff pattern:$0x73625140]
        %1896 = vst [vmem:[#allocation1] ss:$4 sm:$0xff] %v1749
        %1897 = vst [vmem:[%s1830] ss:$4 sm:$0xff] %v1750
        %1898 = vst [vmem:[%s1832] ss:$4 sm:$0xff] %v1751
        %1899 = vst [vmem:[%s1834] ss:$4 sm:$0xff] %v1752
        %1900 = vst [vmem:[%s1836] ss:$4 sm:$0xff] %v1753
        %1901 = vst [vmem:[%s1838] ss:$4 sm:$0xff] %v1754
        %1902 = vst [vmem:[%s1840] ss:$4 sm:$0xff] %v1755
        %1903 = vst [vmem:[%s1842] ss:$4 sm:$0xff] %v1756
        %v1904 = vld.sshfl [vmem:[#allocation1] sm:$0xff pattern:$0x73625140]
        %v1905 = vld.sshfl [vmem:[#allocation1 + $0x20] sm:$0xff pattern:$0x73625140]
        %1906 = vst [vmem:[#allocation1] ss:$4 sm:$0xff] %v1757
        %1907 = vst [vmem:[%s1830] ss:$4 sm:$0xff] %v1758
        %1908 = vst [vmem:[%s1832] ss:$4 sm:$0xff] %v1759
        %1909 = vst [vmem:[%s1834] ss:$4 sm:$0xff] %v1760
        %1910 = vst [vmem:[%s1836] ss:$4 sm:$0xff] %v1761
        %1911 = vst [vmem:[%s1838] ss:$4 sm:$0xff] %v1762
        %1912 = vst [vmem:[%s1840] ss:$4 sm:$0xff] %v1763
        %1913 = vst [vmem:[%s1842] ss:$4 sm:$0xff] %v1764
        %v1914 = vld.sshfl [vmem:[#allocation1] sm:$0xff pattern:$0x73625140]
        %v1915 = vld.sshfl [vmem:[#allocation1 + $0x20] sm:$0xff pattern:$0x73625140]
        %1932 = vxpose.xlu0.b32.start [1/16] %v1844, 128
        %1933 = vxpose.xlu0.b32.cont [2/16] %v1845, 128
        %1934 = vxpose.xlu0.b32.cont [3/16] %v1854, 128
        %1935 = vxpose.xlu0.b32.cont [4/16] %v1855, 128
        %1936 = vxpose.xlu0.b32.cont [5/16] %v1864, 128
        %1937 = vxpose.xlu0.b32.cont [6/16] %v1865, 128
        %1938 = vxpose.xlu0.b32.cont [7/16] %v1874, 128
        %1939 = vxpose.xlu0.b32.cont [8/16] %v1875, 128
        %1940 = vxpose.xlu0.b32.cont [9/16] %v1884, 128
        %1941 = vxpose.xlu0.b32.cont [10/16] %v1885, 128
        %1942 = vxpose.xlu0.b32.cont [11/16] %v1894, 128
        %1943 = vxpose.xlu0.b32.cont [12/16] %v1895, 128
        %1944 = vxpose.xlu0.b32.cont [13/16] %v1904, 128
        %1945 = vxpose.xlu0.b32.cont [14/16] %v1905, 128
        %1946 = vxpose.xlu0.b32.cont [15/16] %v1914, 128
        %1947 = vxpose.xlu0.b32.end [16/16] %v1915, 128
        %v1948 = vpop.trf.xlu0
        %v1949 = vpop.trf.xlu0
        %v1950 = vpop.trf.xlu0
        %v1951 = vpop.trf.xlu0
        %v1952 = vpop.trf.xlu0
        %v1953 = vpop.trf.xlu0
        %v1954 = vpop.trf.xlu0
        %v1955 = vpop.trf.xlu0
        %v1956 = vpop.trf.xlu0
        %v1957 = vpop.trf.xlu0
        %v1958 = vpop.trf.xlu0
        %v1959 = vpop.trf.xlu0
        %v1960 = vpop.trf.xlu0
        %v1961 = vpop.trf.xlu0
        %v1962 = vpop.trf.xlu0
        %v1963 = vpop.trf.xlu0
        %v1964 = vperm.slane %v1282, 0
        %v1965 = vperm.slane %v1341, 0
        %v1966 = vperm.slane %v1342, 0
        %v1967 = vperm.slane %v1343, 0
        %v1968 = vperm.slane %v1344, 0
        %v1969 = vperm.slane %v1345, 0
        %v1970 = vperm.slane %v1346, 0
        %v1971 = vperm.slane %v1347, 0
        %v1972 = vperm.slane %v1283, 0
        %v1973 = vperm.slane %v1348, 0
        %v1974 = vperm.slane %v1349, 0
        %v1975 = vperm.slane %v1350, 0
        %v1976 = vperm.slane %v1351, 0
        %v1977 = vperm.slane %v1352, 0
        %v1978 = vperm.slane %v1353, 0
        %v1979 = vperm.slane %v1354, 0
        %v1980 = vperm.slane %v1284, 0
        %v1981 = vperm.slane %v1355, 0
        %v1982 = vperm.slane %v1356, 0
        %v1983 = vperm.slane %v1357, 0
        %v1984 = vperm.slane %v1358, 0
        %v1985 = vperm.slane %v1359, 0
        %v1986 = vperm.slane %v1360, 0
        %v1987 = vperm.slane %v1361, 0
        %v1988 = vperm.slane %v1285, 0
        %v1989 = vperm.slane %v1362, 0
        %v1990 = vperm.slane %v1363, 0
        %v1991 = vperm.slane %v1364, 0
        %v1992 = vperm.slane %v1365, 0
        %v1993 = vperm.slane %v1366, 0
        %v1994 = vperm.slane %v1367, 0
        %v1995 = vperm.slane %v1368, 0
        %v1996 = vperm.slane %v1286, 0
        %v1997 = vperm.slane %v1369, 0
        %v1998 = vperm.slane %v1370, 0
        %v1999 = vperm.slane %v1371, 0
        %v2000 = vperm.slane %v1372, 0
        %v2001 = vperm.slane %v1373, 0
        %v2002 = vperm.slane %v1374, 0
        %v2003 = vperm.slane %v1375, 0
        %v2004 = vperm.slane %v1287, 0
        %v2005 = vperm.slane %v1376, 0
        %v2006 = vperm.slane %v1377, 0
        %v2007 = vperm.slane %v1378, 0
        %v2008 = vperm.slane %v1379, 0
        %v2009 = vperm.slane %v1380, 0
        %v2010 = vperm.slane %v1381, 0
        %v2011 = vperm.slane %v1382, 0
        %v2012 = vperm.slane %v1288, 0
        %v2013 = vperm.slane %v1383, 0
        %v2014 = vperm.slane %v1384, 0
        %v2015 = vperm.slane %v1385, 0
        %v2016 = vperm.slane %v1386, 0
        %v2017 = vperm.slane %v1387, 0
        %v2018 = vperm.slane %v1388, 0
        %v2019 = vperm.slane %v1389, 0
        %v2020 = vperm.slane %v1289, 0
        %v2021 = vperm.slane %v1390, 0
        %v2022 = vperm.slane %v1391, 0
        %v2023 = vperm.slane %v1392, 0
        %v2024 = vperm.slane %v1393, 0
        %v2025 = vperm.slane %v1394, 0
        %v2026 = vperm.slane %v1395, 0
        %v2027 = vperm.slane %v1396, 0
        %v2092 = vsel %vm608, %v1317, %v1964
        %v2093 = vsel %vm608, %v1461, %v1965
        %v2094 = vsel %vm608, %v1462, %v1966
        %v2095 = vsel %vm608, %v1463, %v1967
        %v2096 = vsel %vm608, %v1464, %v1968
        %v2097 = vsel %vm608, %v1465, %v1969
        %v2098 = vsel %vm608, %v1466, %v1970
        %v2099 = vsel %vm608, %v1467, %v1971
        %v2100 = vsel %vm608, %v1318, %v1972
        %v2101 = vsel %vm608, %v1468, %v1973
        %v2102 = vsel %vm608, %v1469, %v1974
        %v2103 = vsel %vm608, %v1470, %v1975
        %v2104 = vsel %vm608, %v1471, %v1976
        %v2105 = vsel %vm608, %v1472, %v1977
        %v2106 = vsel %vm608, %v1473, %v1978
        %v2107 = vsel %vm608, %v1474, %v1979
        %v2108 = vsel %vm608, %v1319, %v1980
        %v2109 = vsel %vm608, %v1475, %v1981
        %v2110 = vsel %vm608, %v1476, %v1982
        %v2111 = vsel %vm608, %v1477, %v1983
        %v2112 = vsel %vm608, %v1478, %v1984
        %v2113 = vsel %vm608, %v1479, %v1985
        %v2114 = vsel %vm608, %v1480, %v1986
        %v2115 = vsel %vm608, %v1481, %v1987
        %v2116 = vsel %vm608, %v1320, %v1988
        %v2117 = vsel %vm608, %v1482, %v1989
        %v2118 = vsel %vm608, %v1483, %v1990
        %v2119 = vsel %vm608, %v1484, %v1991
        %v2120 = vsel %vm608, %v1485, %v1992
        %v2121 = vsel %vm608, %v1486, %v1993
        %v2122 = vsel %vm608, %v1487, %v1994
        %v2123 = vsel %vm608, %v1488, %v1995
        %v2124 = vsel %vm608, %v1321, %v1996
        %v2125 = vsel %vm608, %v1489, %v1997
        %v2126 = vsel %vm608, %v1490, %v1998
        %v2127 = vsel %vm608, %v1491, %v1999
        %v2128 = vsel %vm608, %v1492, %v2000
        %v2129 = vsel %vm608, %v1493, %v2001
        %v2130 = vsel %vm608, %v1494, %v2002
        %v2131 = vsel %vm608, %v1495, %v2003
        %v2132 = vsel %vm608, %v1322, %v2004
        %v2133 = vsel %vm608, %v1496, %v2005
        %v2134 = vsel %vm608, %v1497, %v2006
        %v2135 = vsel %vm608, %v1498, %v2007
        %v2136 = vsel %vm608, %v1499, %v2008
        %v2137 = vsel %vm608, %v1500, %v2009
        %v2138 = vsel %vm608, %v1501, %v2010
        %v2139 = vsel %vm608, %v1502, %v2011
        %v2140 = vsel %vm608, %v1323, %v2012
        %v2141 = vsel %vm608, %v1503, %v2013
        %v2142 = vsel %vm608, %v1504, %v2014
        %v2143 = vsel %vm608, %v1505, %v2015
        %v2144 = vsel %vm608, %v1506, %v2016
        %v2145 = vsel %vm608, %v1507, %v2017
        %v2146 = vsel %vm608, %v1508, %v2018
        %v2147 = vsel %vm608, %v1509, %v2019
        %v2148 = vsel %vm608, %v1324, %v2020
        %v2149 = vsel %vm608, %v1510, %v2021
        %v2150 = vsel %vm608, %v1511, %v2022
        %v2151 = vsel %vm608, %v1512, %v2023
        %v2152 = vsel %vm608, %v1513, %v2024
        %v2153 = vsel %vm608, %v1514, %v2025
        %v2154 = vsel %vm608, %v1515, %v2026
        %v2155 = vsel %vm608, %v1516, %v2027
        %2220 = vst [vmem:[#allocation1] ss:$4 sm:$0xff] %v2092
        %s2221 = scalar_lea.vmem [#allocation1], 1
        %2222 = vst [vmem:[%s2221] ss:$4 sm:$0xff] %v2093
        %s2223 = scalar_lea.vmem [#allocation1], 2
        %2224 = vst [vmem:[%s2223] ss:$4 sm:$0xff] %v2094
        %s2225 = scalar_lea.vmem [#allocation1], 3
        %2226 = vst [vmem:[%s2225] ss:$4 sm:$0xff] %v2095
        %s2227 = scalar_lea.vmem [#allocation1], 32
        %2228 = vst [vmem:[%s2227] ss:$4 sm:$0xff] %v2096
        %s2229 = scalar_lea.vmem [#allocation1], 33
        %2230 = vst [vmem:[%s2229] ss:$4 sm:$0xff] %v2097
        %s2231 = scalar_lea.vmem [#allocation1], 34
        %2232 = vst [vmem:[%s2231] ss:$4 sm:$0xff] %v2098
        %s2233 = scalar_lea.vmem [#allocation1], 35
        %2234 = vst [vmem:[%s2233] ss:$4 sm:$0xff] %v2099
        %v2235 = vld.sshfl [vmem:[#allocation1] sm:$0xff pattern:$0x73625140]
        %v2236 = vld.sshfl [vmem:[#allocation1 + $0x20] sm:$0xff pattern:$0x73625140]
        %2237 = vst [vmem:[#allocation1] ss:$4 sm:$0xff] %v2100
        %2238 = vst [vmem:[%s2221] ss:$4 sm:$0xff] %v2101
        %2239 = vst [vmem:[%s2223] ss:$4 sm:$0xff] %v2102
        %2240 = vst [vmem:[%s2225] ss:$4 sm:$0xff] %v2103
        %2241 = vst [vmem:[%s2227] ss:$4 sm:$0xff] %v2104
        %2242 = vst [vmem:[%s2229] ss:$4 sm:$0xff] %v2105
        %2243 = vst [vmem:[%s2231] ss:$4 sm:$0xff] %v2106
        %2244 = vst [vmem:[%s2233] ss:$4 sm:$0xff] %v2107
        %v2245 = vld.sshfl [vmem:[#allocation1] sm:$0xff pattern:$0x73625140]
        %v2246 = vld.sshfl [vmem:[#allocation1 + $0x20] sm:$0xff pattern:$0x73625140]
        %2247 = vst [vmem:[#allocation1] ss:$4 sm:$0xff] %v2108
        %2248 = vst [vmem:[%s2221] ss:$4 sm:$0xff] %v2109
        %2249 = vst [vmem:[%s2223] ss:$4 sm:$0xff] %v2110
        %2250 = vst [vmem:[%s2225] ss:$4 sm:$0xff] %v2111
        %2251 = vst [vmem:[%s2227] ss:$4 sm:$0xff] %v2112
        %2252 = vst [vmem:[%s2229] ss:$4 sm:$0xff] %v2113
        %2253 = vst [vmem:[%s2231] ss:$4 sm:$0xff] %v2114
        %2254 = vst [vmem:[%s2233] ss:$4 sm:$0xff] %v2115
        %v2255 = vld.sshfl [vmem:[#allocation1] sm:$0xff pattern:$0x73625140]
        %v2256 = vld.sshfl [vmem:[#allocation1 + $0x20] sm:$0xff pattern:$0x73625140]
        %2257 = vst [vmem:[#allocation1] ss:$4 sm:$0xff] %v2116
        %2258 = vst [vmem:[%s2221] ss:$4 sm:$0xff] %v2117
        %2259 = vst [vmem:[%s2223] ss:$4 sm:$0xff] %v2118
        %2260 = vst [vmem:[%s2225] ss:$4 sm:$0xff] %v2119
        %2261 = vst [vmem:[%s2227] ss:$4 sm:$0xff] %v2120
        %2262 = vst [vmem:[%s2229] ss:$4 sm:$0xff] %v2121
        %2263 = vst [vmem:[%s2231] ss:$4 sm:$0xff] %v2122
        %2264 = vst [vmem:[%s2233] ss:$4 sm:$0xff] %v2123
        %v2265 = vld.sshfl [vmem:[#allocation1] sm:$0xff pattern:$0x73625140]
        %v2266 = vld.sshfl [vmem:[#allocation1 + $0x20] sm:$0xff pattern:$0x73625140]
        %2267 = vst [vmem:[#allocation1] ss:$4 sm:$0xff] %v2124
        %2268 = vst [vmem:[%s2221] ss:$4 sm:$0xff] %v2125
        %2269 = vst [vmem:[%s2223] ss:$4 sm:$0xff] %v2126
        %2270 = vst [vmem:[%s2225] ss:$4 sm:$0xff] %v2127
        %2271 = vst [vmem:[%s2227] ss:$4 sm:$0xff] %v2128
        %2272 = vst [vmem:[%s2229] ss:$4 sm:$0xff] %v2129
        %2273 = vst [vmem:[%s2231] ss:$4 sm:$0xff] %v2130
        %2274 = vst [vmem:[%s2233] ss:$4 sm:$0xff] %v2131
        %v2275 = vld.sshfl [vmem:[#allocation1] sm:$0xff pattern:$0x73625140]
        %v2276 = vld.sshfl [vmem:[#allocation1 + $0x20] sm:$0xff pattern:$0x73625140]
        %2277 = vst [vmem:[#allocation1] ss:$4 sm:$0xff] %v2132
        %2278 = vst [vmem:[%s2221] ss:$4 sm:$0xff] %v2133
        %2279 = vst [vmem:[%s2223] ss:$4 sm:$0xff] %v2134
        %2280 = vst [vmem:[%s2225] ss:$4 sm:$0xff] %v2135
        %2281 = vst [vmem:[%s2227] ss:$4 sm:$0xff] %v2136
        %2282 = vst [vmem:[%s2229] ss:$4 sm:$0xff] %v2137
        %2283 = vst [vmem:[%s2231] ss:$4 sm:$0xff] %v2138
        %2284 = vst [vmem:[%s2233] ss:$4 sm:$0xff] %v2139
        %v2285 = vld.sshfl [vmem:[#allocation1] sm:$0xff pattern:$0x73625140]
        %v2286 = vld.sshfl [vmem:[#allocation1 + $0x20] sm:$0xff pattern:$0x73625140]
        %2287 = vst [vmem:[#allocation1] ss:$4 sm:$0xff] %v2140
        %2288 = vst [vmem:[%s2221] ss:$4 sm:$0xff] %v2141
        %2289 = vst [vmem:[%s2223] ss:$4 sm:$0xff] %v2142
        %2290 = vst [vmem:[%s2225] ss:$4 sm:$0xff] %v2143
        %2291 = vst [vmem:[%s2227] ss:$4 sm:$0xff] %v2144
        %2292 = vst [vmem:[%s2229] ss:$4 sm:$0xff] %v2145
        %2293 = vst [vmem:[%s2231] ss:$4 sm:$0xff] %v2146
        %2294 = vst [vmem:[%s2233] ss:$4 sm:$0xff] %v2147
        %v2295 = vld.sshfl [vmem:[#allocation1] sm:$0xff pattern:$0x73625140]
        %v2296 = vld.sshfl [vmem:[#allocation1 + $0x20] sm:$0xff pattern:$0x73625140]
        %2297 = vst [vmem:[#allocation1] ss:$4 sm:$0xff] %v2148
        %2298 = vst [vmem:[%s2221] ss:$4 sm:$0xff] %v2149
        %2299 = vst [vmem:[%s2223] ss:$4 sm:$0xff] %v2150
        %2300 = vst [vmem:[%s2225] ss:$4 sm:$0xff] %v2151
        %2301 = vst [vmem:[%s2227] ss:$4 sm:$0xff] %v2152
        %2302 = vst [vmem:[%s2229] ss:$4 sm:$0xff] %v2153
        %2303 = vst [vmem:[%s2231] ss:$4 sm:$0xff] %v2154
        %2304 = vst [vmem:[%s2233] ss:$4 sm:$0xff] %v2155
        %v2305 = vld.sshfl [vmem:[#allocation1] sm:$0xff pattern:$0x73625140]
        %v2306 = vld.sshfl [vmem:[#allocation1 + $0x20] sm:$0xff pattern:$0x73625140]
        %2323 = vxpose.xlu0.b32.start [1/16] %v2235, 128
        %2324 = vxpose.xlu0.b32.cont [2/16] %v2236, 128
        %2325 = vxpose.xlu0.b32.cont [3/16] %v2245, 128
        %2326 = vxpose.xlu0.b32.cont [4/16] %v2246, 128
        %2327 = vxpose.xlu0.b32.cont [5/16] %v2255, 128
        %2328 = vxpose.xlu0.b32.cont [6/16] %v2256, 128
        %2329 = vxpose.xlu0.b32.cont [7/16] %v2265, 128
        %2330 = vxpose.xlu0.b32.cont [8/16] %v2266, 128
        %2331 = vxpose.xlu0.b32.cont [9/16] %v2275, 128
        %2332 = vxpose.xlu0.b32.cont [10/16] %v2276, 128
        %2333 = vxpose.xlu0.b32.cont [11/16] %v2285, 128
        %2334 = vxpose.xlu0.b32.cont [12/16] %v2286, 128
        %2335 = vxpose.xlu0.b32.cont [13/16] %v2295, 128
        %2336 = vxpose.xlu0.b32.cont [14/16] %v2296, 128
        %2337 = vxpose.xlu0.b32.cont [15/16] %v2305, 128
        %2338 = vxpose.xlu0.b32.end [16/16] %v2306, 128
        %v2339 = vpop.trf.xlu0
        %v2340 = vpop.trf.xlu0
        %v2341 = vpop.trf.xlu0
        %v2342 = vpop.trf.xlu0
        %v2343 = vpop.trf.xlu0
        %v2344 = vpop.trf.xlu0
        %v2345 = vpop.trf.xlu0
        %v2346 = vpop.trf.xlu0
        %v2347 = vpop.trf.xlu0
        %v2348 = vpop.trf.xlu0
        %v2349 = vpop.trf.xlu0
        %v2350 = vpop.trf.xlu0
        %v2351 = vpop.trf.xlu0
        %v2352 = vpop.trf.xlu0
        %v2353 = vpop.trf.xlu0
        %v2354 = vpop.trf.xlu0
        %v2357 = vrot.slane %v856, 1
        %v2358 = vrot.slane %v856, 2
        %v2359 = vrot.slane %v856, 3
        %v2360 = vrot.slane %v856, 4
        %v2361 = vrot.slane %v856, 5
        %v2362 = vrot.slane %v856, 6
        %v2363 = vrot.slane %v856, 7
        %v2364 = vrot.slane %v857, 1
        %v2365 = vrot.slane %v857, 2
        %v2366 = vrot.slane %v857, 3
        %v2367 = vrot.slane %v857, 4
        %v2368 = vrot.slane %v857, 5
        %v2369 = vrot.slane %v857, 6
        %v2370 = vrot.slane %v857, 7
        %v2387 = vrot.slane %v1948, 1
        %v2388 = vrot.slane %v1948, 2
        %v2389 = vrot.slane %v1948, 3
        %v2390 = vrot.slane %v1948, 4
        %v2391 = vrot.slane %v1948, 5
        %v2392 = vrot.slane %v1948, 6
        %v2393 = vrot.slane %v1948, 7
        %v2394 = vrot.slane %v1949, 1
        %v2395 = vrot.slane %v1949, 2
        %v2396 = vrot.slane %v1949, 3
        %v2397 = vrot.slane %v1949, 4
        %v2398 = vrot.slane %v1949, 5
        %v2399 = vrot.slane %v1949, 6
        %v2400 = vrot.slane %v1949, 7
        %v2415 = vperm.slane %v1948, 0
        %v2416 = vperm.slane %v2387, 0
        %v2417 = vperm.slane %v2388, 0
        %v2418 = vperm.slane %v2389, 0
        %v2419 = vperm.slane %v2390, 0
        %v2420 = vperm.slane %v2391, 0
        %v2421 = vperm.slane %v2392, 0
        %v2422 = vperm.slane %v2393, 0
        %v2423 = vperm.slane %v1949, 0
        %v2424 = vperm.slane %v2394, 0
        %v2425 = vperm.slane %v2395, 0
        %v2426 = vperm.slane %v2396, 0
        %v2427 = vperm.slane %v2397, 0
        %v2428 = vperm.slane %v2398, 0
        %v2429 = vperm.slane %v2399, 0
        %v2430 = vperm.slane %v2400, 0
        %v2447 = vsel %vm608, %v856, %v2415
        %v2448 = vsel %vm608, %v2357, %v2416
        %v2449 = vsel %vm608, %v2358, %v2417
        %v2450 = vsel %vm608, %v2359, %v2418
        %v2451 = vsel %vm608, %v2360, %v2419
        %v2452 = vsel %vm608, %v2361, %v2420
        %v2453 = vsel %vm608, %v2362, %v2421
        %v2454 = vsel %vm608, %v2363, %v2422
        %v2455 = vsel %vm608, %v857, %v2423
        %v2456 = vsel %vm608, %v2364, %v2424
        %v2457 = vsel %vm608, %v2365, %v2425
        %v2458 = vsel %vm608, %v2366, %v2426
        %v2459 = vsel %vm608, %v2367, %v2427
        %v2460 = vsel %vm608, %v2368, %v2428
        %v2461 = vsel %vm608, %v2369, %v2429
        %v2462 = vsel %vm608, %v2370, %v2430
        %2479 = vst [vmem:[#allocation1] ss:$4 sm:$0xff] %v2447
        %s2480 = scalar_lea.vmem [#allocation1], 1
        %2481 = vst [vmem:[%s2480] ss:$4 sm:$0xff] %v2448
        %s2482 = scalar_lea.vmem [#allocation1], 2
        %2483 = vst [vmem:[%s2482] ss:$4 sm:$0xff] %v2449
        %s2484 = scalar_lea.vmem [#allocation1], 3
        %2485 = vst [vmem:[%s2484] ss:$4 sm:$0xff] %v2450
        %s2486 = scalar_lea.vmem [#allocation1], 32
        %2487 = vst [vmem:[%s2486] ss:$4 sm:$0xff] %v2451
        %s2488 = scalar_lea.vmem [#allocation1], 33
        %2489 = vst [vmem:[%s2488] ss:$4 sm:$0xff] %v2452
        %s2490 = scalar_lea.vmem [#allocation1], 34
        %2491 = vst [vmem:[%s2490] ss:$4 sm:$0xff] %v2453
        %s2492 = scalar_lea.vmem [#allocation1], 35
        %2493 = vst [vmem:[%s2492] ss:$4 sm:$0xff] %v2454
        %v2494 = vld.sshfl [vmem:[#allocation1] sm:$0xff pattern:$0x73625140]
        %v2495 = vld.sshfl [vmem:[#allocation1 + $0x20] sm:$0xff pattern:$0x73625140]
        %2496 = vst [vmem:[#allocation1] ss:$4 sm:$0xff] %v2455
        %2497 = vst [vmem:[%s2480] ss:$4 sm:$0xff] %v2456
        %2498 = vst [vmem:[%s2482] ss:$4 sm:$0xff] %v2457
        %2499 = vst [vmem:[%s2484] ss:$4 sm:$0xff] %v2458
        %2500 = vst [vmem:[%s2486] ss:$4 sm:$0xff] %v2459
        %2501 = vst [vmem:[%s2488] ss:$4 sm:$0xff] %v2460
        %2502 = vst [vmem:[%s2490] ss:$4 sm:$0xff] %v2461
        %2503 = vst [vmem:[%s2492] ss:$4 sm:$0xff] %v2462
        %v2504 = vld.sshfl [vmem:[#allocation1] sm:$0xff pattern:$0x73625140]
        %v2505 = vld.sshfl [vmem:[#allocation1 + $0x20] sm:$0xff pattern:$0x73625140]
        %2510 = vst [vmem:[%s168] sm:$0xff] %v2494
        %2511 = vst [vmem:[%s168 + $0x8] sm:$0xff] %v2495
        %2512 = vst [vmem:[%s168 + $0x10] sm:$0xff] %v2504
        %2513 = vst [vmem:[%s168 + $0x18] sm:$0xff] %v2505
        %v2516 = vrot.slane %v1247, 1
        %v2517 = vrot.slane %v1247, 2
        %v2518 = vrot.slane %v1247, 3
        %v2519 = vrot.slane %v1247, 4
        %v2520 = vrot.slane %v1247, 5
        %v2521 = vrot.slane %v1247, 6
        %v2522 = vrot.slane %v1247, 7
        %v2523 = vrot.slane %v1248, 1
        %v2524 = vrot.slane %v1248, 2
        %v2525 = vrot.slane %v1248, 3
        %v2526 = vrot.slane %v1248, 4
        %v2527 = vrot.slane %v1248, 5
        %v2528 = vrot.slane %v1248, 6
        %v2529 = vrot.slane %v1248, 7
        %v2546 = vrot.slane %v2339, 1
        %v2547 = vrot.slane %v2339, 2
        %v2548 = vrot.slane %v2339, 3
        %v2549 = vrot.slane %v2339, 4
        %v2550 = vrot.slane %v2339, 5
        %v2551 = vrot.slane %v2339, 6
        %v2552 = vrot.slane %v2339, 7
        %v2553 = vrot.slane %v2340, 1
        %v2554 = vrot.slane %v2340, 2
        %v2555 = vrot.slane %v2340, 3
        %v2556 = vrot.slane %v2340, 4
        %v2557 = vrot.slane %v2340, 5
        %v2558 = vrot.slane %v2340, 6
        %v2559 = vrot.slane %v2340, 7
        %v2574 = vperm.slane %v2339, 0
        %v2575 = vperm.slane %v2546, 0
        %v2576 = vperm.slane %v2547, 0
        %v2577 = vperm.slane %v2548, 0
        %v2578 = vperm.slane %v2549, 0
        %v2579 = vperm.slane %v2550, 0
        %v2580 = vperm.slane %v2551, 0
        %v2581 = vperm.slane %v2552, 0
        %v2582 = vperm.slane %v2340, 0
        %v2583 = vperm.slane %v2553, 0
        %v2584 = vperm.slane %v2554, 0
        %v2585 = vperm.slane %v2555, 0
        %v2586 = vperm.slane %v2556, 0
        %v2587 = vperm.slane %v2557, 0
        %v2588 = vperm.slane %v2558, 0
        %v2589 = vperm.slane %v2559, 0
        %v2606 = vsel %vm608, %v1247, %v2574
        %v2607 = vsel %vm608, %v2516, %v2575
        %v2608 = vsel %vm608, %v2517, %v2576
        %v2609 = vsel %vm608, %v2518, %v2577
        %v2610 = vsel %vm608, %v2519, %v2578
        %v2611 = vsel %vm608, %v2520, %v2579
        %v2612 = vsel %vm608, %v2521, %v2580
        %v2613 = vsel %vm608, %v2522, %v2581
        %v2614 = vsel %vm608, %v1248, %v2582
        %v2615 = vsel %vm608, %v2523, %v2583
        %v2616 = vsel %vm608, %v2524, %v2584
        %v2617 = vsel %vm608, %v2525, %v2585
        %v2618 = vsel %vm608, %v2526, %v2586
        %v2619 = vsel %vm608, %v2527, %v2587
        %v2620 = vsel %vm608, %v2528, %v2588
        %v2621 = vsel %vm608, %v2529, %v2589
        %2638 = vst [vmem:[#allocation1] ss:$4 sm:$0xff] %v2606
        %s2639 = scalar_lea.vmem [#allocation1], 1
        %2640 = vst [vmem:[%s2639] ss:$4 sm:$0xff] %v2607
        %s2641 = scalar_lea.vmem [#allocation1], 2
        %2642 = vst [vmem:[%s2641] ss:$4 sm:$0xff] %v2608
        %s2643 = scalar_lea.vmem [#allocation1], 3
        %2644 = vst [vmem:[%s2643] ss:$4 sm:$0xff] %v2609
        %s2645 = scalar_lea.vmem [#allocation1], 32
        %2646 = vst [vmem:[%s2645] ss:$4 sm:$0xff] %v2610
        %s2647 = scalar_lea.vmem [#allocation1], 33
        %2648 = vst [vmem:[%s2647] ss:$4 sm:$0xff] %v2611
        %s2649 = scalar_lea.vmem [#allocation1], 34
        %2650 = vst [vmem:[%s2649] ss:$4 sm:$0xff] %v2612
        %s2651 = scalar_lea.vmem [#allocation1], 35
        %2652 = vst [vmem:[%s2651] ss:$4 sm:$0xff] %v2613
        %v2653 = vld.sshfl [vmem:[#allocation1] sm:$0xff pattern:$0x73625140]
        %v2654 = vld.sshfl [vmem:[#allocation1 + $0x20] sm:$0xff pattern:$0x73625140]
        %2655 = vst [vmem:[#allocation1] ss:$4 sm:$0xff] %v2614
        %2656 = vst [vmem:[%s2639] ss:$4 sm:$0xff] %v2615
        %2657 = vst [vmem:[%s2641] ss:$4 sm:$0xff] %v2616
        %2658 = vst [vmem:[%s2643] ss:$4 sm:$0xff] %v2617
        %2659 = vst [vmem:[%s2645] ss:$4 sm:$0xff] %v2618
        %2660 = vst [vmem:[%s2647] ss:$4 sm:$0xff] %v2619
        %2661 = vst [vmem:[%s2649] ss:$4 sm:$0xff] %v2620
        %2662 = vst [vmem:[%s2651] ss:$4 sm:$0xff] %v2621
        %v2663 = vld.sshfl [vmem:[#allocation1] sm:$0xff pattern:$0x73625140]
        %v2664 = vld.sshfl [vmem:[#allocation1 + $0x20] sm:$0xff pattern:$0x73625140]
        %s2669 = scalar_lea.vmem %s168, 64 [#allocation5]
        %2670 = vst [vmem:[%s2669] sm:$0xff] %v2653
        %2671 = vst [vmem:[%s2669 + $0x8] sm:$0xff] %v2654
        %2672 = vst [vmem:[%s2669 + $0x10] sm:$0xff] %v2663
        %2673 = vst [vmem:[%s2669 + $0x18] sm:$0xff] %v2664
        %v2674 = vperm.slane %v856, 0
        %v2675 = vperm.slane %v2357, 0
        %v2676 = vperm.slane %v2358, 0
        %v2677 = vperm.slane %v2359, 0
        %v2678 = vperm.slane %v2360, 0
        %v2679 = vperm.slane %v2361, 0
        %v2680 = vperm.slane %v2362, 0
        %v2681 = vperm.slane %v2363, 0
        %v2682 = vperm.slane %v857, 0
        %v2683 = vperm.slane %v2364, 0
        %v2684 = vperm.slane %v2365, 0
        %v2685 = vperm.slane %v2366, 0
        %v2686 = vperm.slane %v2367, 0
        %v2687 = vperm.slane %v2368, 0
        %v2688 = vperm.slane %v2369, 0
        %v2689 = vperm.slane %v2370, 0
        %v2706 = vsel %vm608, %v1948, %v2674
        %v2707 = vsel %vm608, %v2387, %v2675
        %v2708 = vsel %vm608, %v2388, %v2676
        %v2709 = vsel %vm608, %v2389, %v2677
        %v2710 = vsel %vm608, %v2390, %v2678
        %v2711 = vsel %vm608, %v2391, %v2679
        %v2712 = vsel %vm608, %v2392, %v2680
        %v2713 = vsel %vm608, %v2393, %v2681
        %v2714 = vsel %vm608, %v1949, %v2682
        %v2715 = vsel %vm608, %v2394, %v2683
        %v2716 = vsel %vm608, %v2395, %v2684
        %v2717 = vsel %vm608, %v2396, %v2685
        %v2718 = vsel %vm608, %v2397, %v2686
        %v2719 = vsel %vm608, %v2398, %v2687
        %v2720 = vsel %vm608, %v2399, %v2688
        %v2721 = vsel %vm608, %v2400, %v2689
        %2738 = vst [vmem:[#allocation1] ss:$4 sm:$0xff] %v2706
        %s2739 = scalar_lea.vmem [#allocation1], 1
        %2740 = vst [vmem:[%s2739] ss:$4 sm:$0xff] %v2707
        %s2741 = scalar_lea.vmem [#allocation1], 2
        %2742 = vst [vmem:[%s2741] ss:$4 sm:$0xff] %v2708
        %s2743 = scalar_lea.vmem [#allocation1], 3
        %2744 = vst [vmem:[%s2743] ss:$4 sm:$0xff] %v2709
        %s2745 = scalar_lea.vmem [#allocation1], 32
        %2746 = vst [vmem:[%s2745] ss:$4 sm:$0xff] %v2710
        %s2747 = scalar_lea.vmem [#allocation1], 33
        %2748 = vst [vmem:[%s2747] ss:$4 sm:$0xff] %v2711
        %s2749 = scalar_lea.vmem [#allocation1], 34
        %2750 = vst [vmem:[%s2749] ss:$4 sm:$0xff] %v2712
        %s2751 = scalar_lea.vmem [#allocation1], 35
        %2752 = vst [vmem:[%s2751] ss:$4 sm:$0xff] %v2713
        %v2753 = vld.sshfl [vmem:[#allocation1] sm:$0xff pattern:$0x73625140]
        %v2754 = vld.sshfl [vmem:[#allocation1 + $0x20] sm:$0xff pattern:$0x73625140]
        %2755 = vst [vmem:[#allocation1] ss:$4 sm:$0xff] %v2714
        %2756 = vst [vmem:[%s2739] ss:$4 sm:$0xff] %v2715
        %2757 = vst [vmem:[%s2741] ss:$4 sm:$0xff] %v2716
        %2758 = vst [vmem:[%s2743] ss:$4 sm:$0xff] %v2717
        %2759 = vst [vmem:[%s2745] ss:$4 sm:$0xff] %v2718
        %2760 = vst [vmem:[%s2747] ss:$4 sm:$0xff] %v2719
        %2761 = vst [vmem:[%s2749] ss:$4 sm:$0xff] %v2720
        %2762 = vst [vmem:[%s2751] ss:$4 sm:$0xff] %v2721
        %v2763 = vld.sshfl [vmem:[#allocation1] sm:$0xff pattern:$0x73625140]
        %v2764 = vld.sshfl [vmem:[#allocation1 + $0x20] sm:$0xff pattern:$0x73625140]
        %s2769 = scalar_lea.vmem %s168, 128 [#allocation5]
        %2770 = vst [vmem:[%s2769] sm:$0xff] %v2753
        %2771 = vst [vmem:[%s2769 + $0x8] sm:$0xff] %v2754
        %2772 = vst [vmem:[%s2769 + $0x10] sm:$0xff] %v2763
        %2773 = vst [vmem:[%s2769 + $0x18] sm:$0xff] %v2764
        %v2774 = vperm.slane %v1247, 0
        %v2775 = vperm.slane %v2516, 0
        %v2776 = vperm.slane %v2517, 0
        %v2777 = vperm.slane %v2518, 0
        %v2778 = vperm.slane %v2519, 0
        %v2779 = vperm.slane %v2520, 0
        %v2780 = vperm.slane %v2521, 0
        %v2781 = vperm.slane %v2522, 0
        %v2782 = vperm.slane %v1248, 0
        %v2783 = vperm.slane %v2523, 0
        %v2784 = vperm.slane %v2524, 0
        %v2785 = vperm.slane %v2525, 0
        %v2786 = vperm.slane %v2526, 0
        %v2787 = vperm.slane %v2527, 0
        %v2788 = vperm.slane %v2528, 0
        %v2789 = vperm.slane %v2529, 0
        %v2806 = vsel %vm608, %v2339, %v2774
        %v2807 = vsel %vm608, %v2546, %v2775
        %v2808 = vsel %vm608, %v2547, %v2776
        %v2809 = vsel %vm608, %v2548, %v2777
        %v2810 = vsel %vm608, %v2549, %v2778
        %v2811 = vsel %vm608, %v2550, %v2779
        %v2812 = vsel %vm608, %v2551, %v2780
        %v2813 = vsel %vm608, %v2552, %v2781
        %v2814 = vsel %vm608, %v2340, %v2782
        %v2815 = vsel %vm608, %v2553, %v2783
        %v2816 = vsel %vm608, %v2554, %v2784
        %v2817 = vsel %vm608, %v2555, %v2785
        %v2818 = vsel %vm608, %v2556, %v2786
        %v2819 = vsel %vm608, %v2557, %v2787
        %v2820 = vsel %vm608, %v2558, %v2788
        %v2821 = vsel %vm608, %v2559, %v2789
        %2838 = vst [vmem:[#allocation1] ss:$4 sm:$0xff] %v2806
        %s2839 = scalar_lea.vmem [#allocation1], 1
        %2840 = vst [vmem:[%s2839] ss:$4 sm:$0xff] %v2807
        %s2841 = scalar_lea.vmem [#allocation1], 2
        %2842 = vst [vmem:[%s2841] ss:$4 sm:$0xff] %v2808
        %s2843 = scalar_lea.vmem [#allocation1], 3
        %2844 = vst [vmem:[%s2843] ss:$4 sm:$0xff] %v2809
        %s2845 = scalar_lea.vmem [#allocation1], 32
        %2846 = vst [vmem:[%s2845] ss:$4 sm:$0xff] %v2810
        %s2847 = scalar_lea.vmem [#allocation1], 33
        %2848 = vst [vmem:[%s2847] ss:$4 sm:$0xff] %v2811
        %s2849 = scalar_lea.vmem [#allocation1], 34
        %2850 = vst [vmem:[%s2849] ss:$4 sm:$0xff] %v2812
        %s2851 = scalar_lea.vmem [#allocation1], 35
        %2852 = vst [vmem:[%s2851] ss:$4 sm:$0xff] %v2813
        %v2853 = vld.sshfl [vmem:[#allocation1] sm:$0xff pattern:$0x73625140]
        %v2854 = vld.sshfl [vmem:[#allocation1 + $0x20] sm:$0xff pattern:$0x73625140]
        %2855 = vst [vmem:[#allocation1] ss:$4 sm:$0xff] %v2814
        %2856 = vst [vmem:[%s2839] ss:$4 sm:$0xff] %v2815
        %2857 = vst [vmem:[%s2841] ss:$4 sm:$0xff] %v2816
        %2858 = vst [vmem:[%s2843] ss:$4 sm:$0xff] %v2817
        %2859 = vst [vmem:[%s2845] ss:$4 sm:$0xff] %v2818
        %2860 = vst [vmem:[%s2847] ss:$4 sm:$0xff] %v2819
        %2861 = vst [vmem:[%s2849] ss:$4 sm:$0xff] %v2820
        %2862 = vst [vmem:[%s2851] ss:$4 sm:$0xff] %v2821
        %v2863 = vld.sshfl [vmem:[#allocation1] sm:$0xff pattern:$0x73625140]
        %v2864 = vld.sshfl [vmem:[#allocation1 + $0x20] sm:$0xff pattern:$0x73625140]
        %s2869 = scalar_lea.vmem %s168, 192 [#allocation5]
        %2870 = vst [vmem:[%s2869] sm:$0xff] %v2853
        %2871 = vst [vmem:[%s2869 + $0x8] sm:$0xff] %v2854
        %2872 = vst [vmem:[%s2869 + $0x10] sm:$0xff] %v2863
        %2873 = vst [vmem:[%s2869 + $0x18] sm:$0xff] %v2864
        %s2874 = scalar_lea.vmem %s149, 64 [#allocation2]
        %v2875 = vld [vmem:[%s2874] sm:$0xff]
        %v2876 = vld [vmem:[%s2874 + $0x8] sm:$0xff]
        %2877 = vxpose.xlu0.b32.start [1/16] %v2875, 128
        %2878 = vxpose.xlu0.b32.cont [2/16] %v2876, 128
        %2879 = vxpose.xlu0.b32.cont [3/16] 0.0, 128
        %2880 = vxpose.xlu0.b32.cont [4/16] 0.0, 128
        %2881 = vxpose.xlu0.b32.cont [5/16] 0.0, 128
        %2882 = vxpose.xlu0.b32.cont [6/16] 0.0, 128
        %2883 = vxpose.xlu0.b32.cont [7/16] 0.0, 128
        %2884 = vxpose.xlu0.b32.cont [8/16] 0.0, 128
        %2885 = vxpose.xlu0.b32.cont [9/16] 0.0, 128
        %2886 = vxpose.xlu0.b32.cont [10/16] 0.0, 128
        %2887 = vxpose.xlu0.b32.cont [11/16] 0.0, 128
        %2888 = vxpose.xlu0.b32.cont [12/16] 0.0, 128
        %2889 = vxpose.xlu0.b32.cont [13/16] 0.0, 128
        %2890 = vxpose.xlu0.b32.cont [14/16] 0.0, 128
        %2891 = vxpose.xlu0.b32.cont [15/16] 0.0, 128
        %2892 = vxpose.xlu0.b32.end [16/16] 0.0, 128
        %v2893 = vpop.trf.xlu0
        %v2894 = vpop.trf.xlu0
        %v2895 = vpop.trf.xlu0
        %v2896 = vpop.trf.xlu0
        %v2897 = vpop.trf.xlu0
        %v2898 = vpop.trf.xlu0
        %v2899 = vpop.trf.xlu0
        %v2900 = vpop.trf.xlu0
        %v2901 = vpop.trf.xlu0
        %v2902 = vpop.trf.xlu0
        %v2903 = vpop.trf.xlu0
        %v2904 = vpop.trf.xlu0
        %v2905 = vpop.trf.xlu0
        %v2906 = vpop.trf.xlu0
        %v2907 = vpop.trf.xlu0
        %v2908 = vpop.trf.xlu0
        %s2909 = scalar_lea.vmem %s149, 80 [#allocation2]
        %v2910 = vld [vmem:[%s2909] sm:$0xff]
        %v2911 = vld [vmem:[%s2909 + $0x8] sm:$0xff]
        %2912 = vxpose.xlu0.b32.start [1/16] %v2910, 128
        %2913 = vxpose.xlu0.b32.cont [2/16] %v2911, 128
        %2914 = vxpose.xlu0.b32.cont [3/16] 0.0, 128
        %2915 = vxpose.xlu0.b32.cont [4/16] 0.0, 128
        %2916 = vxpose.xlu0.b32.cont [5/16] 0.0, 128
        %2917 = vxpose.xlu0.b32.cont [6/16] 0.0, 128
        %2918 = vxpose.xlu0.b32.cont [7/16] 0.0, 128
        %2919 = vxpose.xlu0.b32.cont [8/16] 0.0, 128
        %2920 = vxpose.xlu0.b32.cont [9/16] 0.0, 128
        %2921 = vxpose.xlu0.b32.cont [10/16] 0.0, 128
        %2922 = vxpose.xlu0.b32.cont [11/16] 0.0, 128
        %2923 = vxpose.xlu0.b32.cont [12/16] 0.0, 128
        %2924 = vxpose.xlu0.b32.cont [13/16] 0.0, 128
        %2925 = vxpose.xlu0.b32.cont [14/16] 0.0, 128
        %2926 = vxpose.xlu0.b32.cont [15/16] 0.0, 128
        %2927 = vxpose.xlu0.b32.end [16/16] 0.0, 128
        %v2928 = vpop.trf.xlu0
        %v2929 = vpop.trf.xlu0
        %v2930 = vpop.trf.xlu0
        %v2931 = vpop.trf.xlu0
        %v2932 = vpop.trf.xlu0
        %v2933 = vpop.trf.xlu0
        %v2934 = vpop.trf.xlu0
        %v2935 = vpop.trf.xlu0
        %v2936 = vpop.trf.xlu0
        %v2937 = vpop.trf.xlu0
        %v2938 = vpop.trf.xlu0
        %v2939 = vpop.trf.xlu0
        %v2940 = vpop.trf.xlu0
        %v2941 = vpop.trf.xlu0
        %v2942 = vpop.trf.xlu0
        %v2943 = vpop.trf.xlu0
        %v2952 = vrot.slane %v2893, 1
        %v2953 = vrot.slane %v2893, 2
        %v2954 = vrot.slane %v2893, 3
        %v2955 = vrot.slane %v2893, 4
        %v2956 = vrot.slane %v2893, 5
        %v2957 = vrot.slane %v2893, 6
        %v2958 = vrot.slane %v2893, 7
        %v2959 = vrot.slane %v2894, 1
        %v2960 = vrot.slane %v2894, 2
        %v2961 = vrot.slane %v2894, 3
        %v2962 = vrot.slane %v2894, 4
        %v2963 = vrot.slane %v2894, 5
        %v2964 = vrot.slane %v2894, 6
        %v2965 = vrot.slane %v2894, 7
        %v2966 = vrot.slane %v2895, 1
        %v2967 = vrot.slane %v2895, 2
        %v2968 = vrot.slane %v2895, 3
        %v2969 = vrot.slane %v2895, 4
        %v2970 = vrot.slane %v2895, 5
        %v2971 = vrot.slane %v2895, 6
        %v2972 = vrot.slane %v2895, 7
        %v2973 = vrot.slane %v2896, 1
        %v2974 = vrot.slane %v2896, 2
        %v2975 = vrot.slane %v2896, 3
        %v2976 = vrot.slane %v2896, 4
        %v2977 = vrot.slane %v2896, 5
        %v2978 = vrot.slane %v2896, 6
        %v2979 = vrot.slane %v2896, 7
        %v2980 = vrot.slane %v2897, 1
        %v2981 = vrot.slane %v2897, 2
        %v2982 = vrot.slane %v2897, 3
        %v2983 = vrot.slane %v2897, 4
        %v2984 = vrot.slane %v2897, 5
        %v2985 = vrot.slane %v2897, 6
        %v2986 = vrot.slane %v2897, 7
        %v2987 = vrot.slane %v2898, 1
        %v2988 = vrot.slane %v2898, 2
        %v2989 = vrot.slane %v2898, 3
        %v2990 = vrot.slane %v2898, 4
        %v2991 = vrot.slane %v2898, 5
        %v2992 = vrot.slane %v2898, 6
        %v2993 = vrot.slane %v2898, 7
        %v2994 = vrot.slane %v2899, 1
        %v2995 = vrot.slane %v2899, 2
        %v2996 = vrot.slane %v2899, 3
        %v2997 = vrot.slane %v2899, 4
        %v2998 = vrot.slane %v2899, 5
        %v2999 = vrot.slane %v2899, 6
        %v3000 = vrot.slane %v2899, 7
        %v3001 = vrot.slane %v2900, 1
        %v3002 = vrot.slane %v2900, 2
        %v3003 = vrot.slane %v2900, 3
        %v3004 = vrot.slane %v2900, 4
        %v3005 = vrot.slane %v2900, 5
        %v3006 = vrot.slane %v2900, 6
        %v3007 = vrot.slane %v2900, 7
        %v3072 = vrot.slane %v2928, 1
        %v3073 = vrot.slane %v2928, 2
        %v3074 = vrot.slane %v2928, 3
        %v3075 = vrot.slane %v2928, 4
        %v3076 = vrot.slane %v2928, 5
        %v3077 = vrot.slane %v2928, 6
        %v3078 = vrot.slane %v2928, 7
        %v3079 = vrot.slane %v2929, 1
        %v3080 = vrot.slane %v2929, 2
        %v3081 = vrot.slane %v2929, 3
        %v3082 = vrot.slane %v2929, 4
        %v3083 = vrot.slane %v2929, 5
        %v3084 = vrot.slane %v2929, 6
        %v3085 = vrot.slane %v2929, 7
        %v3086 = vrot.slane %v2930, 1
        %v3087 = vrot.slane %v2930, 2
        %v3088 = vrot.slane %v2930, 3
        %v3089 = vrot.slane %v2930, 4
        %v3090 = vrot.slane %v2930, 5
        %v3091 = vrot.slane %v2930, 6
        %v3092 = vrot.slane %v2930, 7
        %v3093 = vrot.slane %v2931, 1
        %v3094 = vrot.slane %v2931, 2
        %v3095 = vrot.slane %v2931, 3
        %v3096 = vrot.slane %v2931, 4
        %v3097 = vrot.slane %v2931, 5
        %v3098 = vrot.slane %v2931, 6
        %v3099 = vrot.slane %v2931, 7
        %v3100 = vrot.slane %v2932, 1
        %v3101 = vrot.slane %v2932, 2
        %v3102 = vrot.slane %v2932, 3
        %v3103 = vrot.slane %v2932, 4
        %v3104 = vrot.slane %v2932, 5
        %v3105 = vrot.slane %v2932, 6
        %v3106 = vrot.slane %v2932, 7
        %v3107 = vrot.slane %v2933, 1
        %v3108 = vrot.slane %v2933, 2
        %v3109 = vrot.slane %v2933, 3
        %v3110 = vrot.slane %v2933, 4
        %v3111 = vrot.slane %v2933, 5
        %v3112 = vrot.slane %v2933, 6
        %v3113 = vrot.slane %v2933, 7
        %v3114 = vrot.slane %v2934, 1
        %v3115 = vrot.slane %v2934, 2
        %v3116 = vrot.slane %v2934, 3
        %v3117 = vrot.slane %v2934, 4
        %v3118 = vrot.slane %v2934, 5
        %v3119 = vrot.slane %v2934, 6
        %v3120 = vrot.slane %v2934, 7
        %v3121 = vrot.slane %v2935, 1
        %v3122 = vrot.slane %v2935, 2
        %v3123 = vrot.slane %v2935, 3
        %v3124 = vrot.slane %v2935, 4
        %v3125 = vrot.slane %v2935, 5
        %v3126 = vrot.slane %v2935, 6
        %v3127 = vrot.slane %v2935, 7
        %v3184 = vperm.slane %v2928, 0
        %v3185 = vperm.slane %v3072, 0
        %v3186 = vperm.slane %v3073, 0
        %v3187 = vperm.slane %v3074, 0
        %v3188 = vperm.slane %v3075, 0
        %v3189 = vperm.slane %v3076, 0
        %v3190 = vperm.slane %v3077, 0
        %v3191 = vperm.slane %v3078, 0
        %v3192 = vperm.slane %v2929, 0
        %v3193 = vperm.slane %v3079, 0
        %v3194 = vperm.slane %v3080, 0
        %v3195 = vperm.slane %v3081, 0
        %v3196 = vperm.slane %v3082, 0
        %v3197 = vperm.slane %v3083, 0
        %v3198 = vperm.slane %v3084, 0
        %v3199 = vperm.slane %v3085, 0
        %v3200 = vperm.slane %v2930, 0
        %v3201 = vperm.slane %v3086, 0
        %v3202 = vperm.slane %v3087, 0
        %v3203 = vperm.slane %v3088, 0
        %v3204 = vperm.slane %v3089, 0
        %v3205 = vperm.slane %v3090, 0
        %v3206 = vperm.slane %v3091, 0
        %v3207 = vperm.slane %v3092, 0
        %v3208 = vperm.slane %v2931, 0
        %v3209 = vperm.slane %v3093, 0
        %v3210 = vperm.slane %v3094, 0
        %v3211 = vperm.slane %v3095, 0
        %v3212 = vperm.slane %v3096, 0
        %v3213 = vperm.slane %v3097, 0
        %v3214 = vperm.slane %v3098, 0
        %v3215 = vperm.slane %v3099, 0
        %v3216 = vperm.slane %v2932, 0
        %v3217 = vperm.slane %v3100, 0
        %v3218 = vperm.slane %v3101, 0
        %v3219 = vperm.slane %v3102, 0
        %v3220 = vperm.slane %v3103, 0
        %v3221 = vperm.slane %v3104, 0
        %v3222 = vperm.slane %v3105, 0
        %v3223 = vperm.slane %v3106, 0
        %v3224 = vperm.slane %v2933, 0
        %v3225 = vperm.slane %v3107, 0
        %v3226 = vperm.slane %v3108, 0
        %v3227 = vperm.slane %v3109, 0
        %v3228 = vperm.slane %v3110, 0
        %v3229 = vperm.slane %v3111, 0
        %v3230 = vperm.slane %v3112, 0
        %v3231 = vperm.slane %v3113, 0
        %v3232 = vperm.slane %v2934, 0
        %v3233 = vperm.slane %v3114, 0
        %v3234 = vperm.slane %v3115, 0
        %v3235 = vperm.slane %v3116, 0
        %v3236 = vperm.slane %v3117, 0
        %v3237 = vperm.slane %v3118, 0
        %v3238 = vperm.slane %v3119, 0
        %v3239 = vperm.slane %v3120, 0
        %v3240 = vperm.slane %v2935, 0
        %v3241 = vperm.slane %v3121, 0
        %v3242 = vperm.slane %v3122, 0
        %v3243 = vperm.slane %v3123, 0
        %v3244 = vperm.slane %v3124, 0
        %v3245 = vperm.slane %v3125, 0
        %v3246 = vperm.slane %v3126, 0
        %v3247 = vperm.slane %v3127, 0
        %v3312 = vsel %vm608, %v2893, %v3184
        %v3313 = vsel %vm608, %v2952, %v3185
        %v3314 = vsel %vm608, %v2953, %v3186
        %v3315 = vsel %vm608, %v2954, %v3187
        %v3316 = vsel %vm608, %v2955, %v3188
        %v3317 = vsel %vm608, %v2956, %v3189
        %v3318 = vsel %vm608, %v2957, %v3190
        %v3319 = vsel %vm608, %v2958, %v3191
        %v3320 = vsel %vm608, %v2894, %v3192
        %v3321 = vsel %vm608, %v2959, %v3193
        %v3322 = vsel %vm608, %v2960, %v3194
        %v3323 = vsel %vm608, %v2961, %v3195
        %v3324 = vsel %vm608, %v2962, %v3196
        %v3325 = vsel %vm608, %v2963, %v3197
        %v3326 = vsel %vm608, %v2964, %v3198
        %v3327 = vsel %vm608, %v2965, %v3199
        %v3328 = vsel %vm608, %v2895, %v3200
        %v3329 = vsel %vm608, %v2966, %v3201
        %v3330 = vsel %vm608, %v2967, %v3202
        %v3331 = vsel %vm608, %v2968, %v3203
        %v3332 = vsel %vm608, %v2969, %v3204
        %v3333 = vsel %vm608, %v2970, %v3205
        %v3334 = vsel %vm608, %v2971, %v3206
        %v3335 = vsel %vm608, %v2972, %v3207
        %v3336 = vsel %vm608, %v2896, %v3208
        %v3337 = vsel %vm608, %v2973, %v3209
        %v3338 = vsel %vm608, %v2974, %v3210
        %v3339 = vsel %vm608, %v2975, %v3211
        %v3340 = vsel %vm608, %v2976, %v3212
        %v3341 = vsel %vm608, %v2977, %v3213
        %v3342 = vsel %vm608, %v2978, %v3214
        %v3343 = vsel %vm608, %v2979, %v3215
        %v3344 = vsel %vm608, %v2897, %v3216
        %v3345 = vsel %vm608, %v2980, %v3217
        %v3346 = vsel %vm608, %v2981, %v3218
        %v3347 = vsel %vm608, %v2982, %v3219
        %v3348 = vsel %vm608, %v2983, %v3220
        %v3349 = vsel %vm608, %v2984, %v3221
        %v3350 = vsel %vm608, %v2985, %v3222
        %v3351 = vsel %vm608, %v2986, %v3223
        %v3352 = vsel %vm608, %v2898, %v3224
        %v3353 = vsel %vm608, %v2987, %v3225
        %v3354 = vsel %vm608, %v2988, %v3226
        %v3355 = vsel %vm608, %v2989, %v3227
        %v3356 = vsel %vm608, %v2990, %v3228
        %v3357 = vsel %vm608, %v2991, %v3229
        %v3358 = vsel %vm608, %v2992, %v3230
        %v3359 = vsel %vm608, %v2993, %v3231
        %v3360 = vsel %vm608, %v2899, %v3232
        %v3361 = vsel %vm608, %v2994, %v3233
        %v3362 = vsel %vm608, %v2995, %v3234
        %v3363 = vsel %vm608, %v2996, %v3235
        %v3364 = vsel %vm608, %v2997, %v3236
        %v3365 = vsel %vm608, %v2998, %v3237
        %v3366 = vsel %vm608, %v2999, %v3238
        %v3367 = vsel %vm608, %v3000, %v3239
        %v3368 = vsel %vm608, %v2900, %v3240
        %v3369 = vsel %vm608, %v3001, %v3241
        %v3370 = vsel %vm608, %v3002, %v3242
        %v3371 = vsel %vm608, %v3003, %v3243
        %v3372 = vsel %vm608, %v3004, %v3244
        %v3373 = vsel %vm608, %v3005, %v3245
        %v3374 = vsel %vm608, %v3006, %v3246
        %v3375 = vsel %vm608, %v3007, %v3247
        %3440 = vst [vmem:[#allocation1] ss:$4 sm:$0xff] %v3312
        %s3441 = scalar_lea.vmem [#allocation1], 1
        %3442 = vst [vmem:[%s3441] ss:$4 sm:$0xff] %v3313
        %s3443 = scalar_lea.vmem [#allocation1], 2
        %3444 = vst [vmem:[%s3443] ss:$4 sm:$0xff] %v3314
        %s3445 = scalar_lea.vmem [#allocation1], 3
        %3446 = vst [vmem:[%s3445] ss:$4 sm:$0xff] %v3315
        %s3447 = scalar_lea.vmem [#allocation1], 32
        %3448 = vst [vmem:[%s3447] ss:$4 sm:$0xff] %v3316
        %s3449 = scalar_lea.vmem [#allocation1], 33
        %3450 = vst [vmem:[%s3449] ss:$4 sm:$0xff] %v3317
        %s3451 = scalar_lea.vmem [#allocation1], 34
        %3452 = vst [vmem:[%s3451] ss:$4 sm:$0xff] %v3318
        %s3453 = scalar_lea.vmem [#allocation1], 35
        %3454 = vst [vmem:[%s3453] ss:$4 sm:$0xff] %v3319
        %v3455 = vld.sshfl [vmem:[#allocation1] sm:$0xff pattern:$0x73625140]
        %v3456 = vld.sshfl [vmem:[#allocation1 + $0x20] sm:$0xff pattern:$0x73625140]
        %3457 = vst [vmem:[#allocation1] ss:$4 sm:$0xff] %v3320
        %3458 = vst [vmem:[%s3441] ss:$4 sm:$0xff] %v3321
        %3459 = vst [vmem:[%s3443] ss:$4 sm:$0xff] %v3322
        %3460 = vst [vmem:[%s3445] ss:$4 sm:$0xff] %v3323
        %3461 = vst [vmem:[%s3447] ss:$4 sm:$0xff] %v3324
        %3462 = vst [vmem:[%s3449] ss:$4 sm:$0xff] %v3325
        %3463 = vst [vmem:[%s3451] ss:$4 sm:$0xff] %v3326
        %3464 = vst [vmem:[%s3453] ss:$4 sm:$0xff] %v3327
        %v3465 = vld.sshfl [vmem:[#allocation1] sm:$0xff pattern:$0x73625140]
        %v3466 = vld.sshfl [vmem:[#allocation1 + $0x20] sm:$0xff pattern:$0x73625140]
        %3467 = vst [vmem:[#allocation1] ss:$4 sm:$0xff] %v3328
        %3468 = vst [vmem:[%s3441] ss:$4 sm:$0xff] %v3329
        %3469 = vst [vmem:[%s3443] ss:$4 sm:$0xff] %v3330
        %3470 = vst [vmem:[%s3445] ss:$4 sm:$0xff] %v3331
        %3471 = vst [vmem:[%s3447] ss:$4 sm:$0xff] %v3332
        %3472 = vst [vmem:[%s3449] ss:$4 sm:$0xff] %v3333
        %3473 = vst [vmem:[%s3451] ss:$4 sm:$0xff] %v3334
        %3474 = vst [vmem:[%s3453] ss:$4 sm:$0xff] %v3335
        %v3475 = vld.sshfl [vmem:[#allocation1] sm:$0xff pattern:$0x73625140]
        %v3476 = vld.sshfl [vmem:[#allocation1 + $0x20] sm:$0xff pattern:$0x73625140]
        %3477 = vst [vmem:[#allocation1] ss:$4 sm:$0xff] %v3336
        %3478 = vst [vmem:[%s3441] ss:$4 sm:$0xff] %v3337
        %3479 = vst [vmem:[%s3443] ss:$4 sm:$0xff] %v3338
        %3480 = vst [vmem:[%s3445] ss:$4 sm:$0xff] %v3339
        %3481 = vst [vmem:[%s3447] ss:$4 sm:$0xff] %v3340
        %3482 = vst [vmem:[%s3449] ss:$4 sm:$0xff] %v3341
        %3483 = vst [vmem:[%s3451] ss:$4 sm:$0xff] %v3342
        %3484 = vst [vmem:[%s3453] ss:$4 sm:$0xff] %v3343
        %v3485 = vld.sshfl [vmem:[#allocation1] sm:$0xff pattern:$0x73625140]
        %v3486 = vld.sshfl [vmem:[#allocation1 + $0x20] sm:$0xff pattern:$0x73625140]
        %3487 = vst [vmem:[#allocation1] ss:$4 sm:$0xff] %v3344
        %3488 = vst [vmem:[%s3441] ss:$4 sm:$0xff] %v3345
        %3489 = vst [vmem:[%s3443] ss:$4 sm:$0xff] %v3346
        %3490 = vst [vmem:[%s3445] ss:$4 sm:$0xff] %v3347
        %3491 = vst [vmem:[%s3447] ss:$4 sm:$0xff] %v3348
        %3492 = vst [vmem:[%s3449] ss:$4 sm:$0xff] %v3349
        %3493 = vst [vmem:[%s3451] ss:$4 sm:$0xff] %v3350
        %3494 = vst [vmem:[%s3453] ss:$4 sm:$0xff] %v3351
        %v3495 = vld.sshfl [vmem:[#allocation1] sm:$0xff pattern:$0x73625140]
        %v3496 = vld.sshfl [vmem:[#allocation1 + $0x20] sm:$0xff pattern:$0x73625140]
        %3497 = vst [vmem:[#allocation1] ss:$4 sm:$0xff] %v3352
        %3498 = vst [vmem:[%s3441] ss:$4 sm:$0xff] %v3353
        %3499 = vst [vmem:[%s3443] ss:$4 sm:$0xff] %v3354
        %3500 = vst [vmem:[%s3445] ss:$4 sm:$0xff] %v3355
        %3501 = vst [vmem:[%s3447] ss:$4 sm:$0xff] %v3356
        %3502 = vst [vmem:[%s3449] ss:$4 sm:$0xff] %v3357
        %3503 = vst [vmem:[%s3451] ss:$4 sm:$0xff] %v3358
        %3504 = vst [vmem:[%s3453] ss:$4 sm:$0xff] %v3359
        %v3505 = vld.sshfl [vmem:[#allocation1] sm:$0xff pattern:$0x73625140]
        %v3506 = vld.sshfl [vmem:[#allocation1 + $0x20] sm:$0xff pattern:$0x73625140]
        %3507 = vst [vmem:[#allocation1] ss:$4 sm:$0xff] %v3360
        %3508 = vst [vmem:[%s3441] ss:$4 sm:$0xff] %v3361
        %3509 = vst [vmem:[%s3443] ss:$4 sm:$0xff] %v3362
        %3510 = vst [vmem:[%s3445] ss:$4 sm:$0xff] %v3363
        %3511 = vst [vmem:[%s3447] ss:$4 sm:$0xff] %v3364
        %3512 = vst [vmem:[%s3449] ss:$4 sm:$0xff] %v3365
        %3513 = vst [vmem:[%s3451] ss:$4 sm:$0xff] %v3366
        %3514 = vst [vmem:[%s3453] ss:$4 sm:$0xff] %v3367
        %v3515 = vld.sshfl [vmem:[#allocation1] sm:$0xff pattern:$0x73625140]
        %v3516 = vld.sshfl [vmem:[#allocation1 + $0x20] sm:$0xff pattern:$0x73625140]
        %3517 = vst [vmem:[#allocation1] ss:$4 sm:$0xff] %v3368
        %3518 = vst [vmem:[%s3441] ss:$4 sm:$0xff] %v3369
        %3519 = vst [vmem:[%s3443] ss:$4 sm:$0xff] %v3370
        %3520 = vst [vmem:[%s3445] ss:$4 sm:$0xff] %v3371
        %3521 = vst [vmem:[%s3447] ss:$4 sm:$0xff] %v3372
        %3522 = vst [vmem:[%s3449] ss:$4 sm:$0xff] %v3373
        %3523 = vst [vmem:[%s3451] ss:$4 sm:$0xff] %v3374
        %3524 = vst [vmem:[%s3453] ss:$4 sm:$0xff] %v3375
        %v3525 = vld.sshfl [vmem:[#allocation1] sm:$0xff pattern:$0x73625140]
        %v3526 = vld.sshfl [vmem:[#allocation1 + $0x20] sm:$0xff pattern:$0x73625140]
        %3543 = vxpose.xlu0.b32.start [1/16] %v3455, 128
        %3544 = vxpose.xlu0.b32.cont [2/16] %v3456, 128
        %3545 = vxpose.xlu0.b32.cont [3/16] %v3465, 128
        %3546 = vxpose.xlu0.b32.cont [4/16] %v3466, 128
        %3547 = vxpose.xlu0.b32.cont [5/16] %v3475, 128
        %3548 = vxpose.xlu0.b32.cont [6/16] %v3476, 128
        %3549 = vxpose.xlu0.b32.cont [7/16] %v3485, 128
        %3550 = vxpose.xlu0.b32.cont [8/16] %v3486, 128
        %3551 = vxpose.xlu0.b32.cont [9/16] %v3495, 128
        %3552 = vxpose.xlu0.b32.cont [10/16] %v3496, 128
        %3553 = vxpose.xlu0.b32.cont [11/16] %v3505, 128
        %3554 = vxpose.xlu0.b32.cont [12/16] %v3506, 128
        %3555 = vxpose.xlu0.b32.cont [13/16] %v3515, 128
        %3556 = vxpose.xlu0.b32.cont [14/16] %v3516, 128
        %3557 = vxpose.xlu0.b32.cont [15/16] %v3525, 128
        %3558 = vxpose.xlu0.b32.end [16/16] %v3526, 128
        %v3559 = vpop.trf.xlu0
        %v3560 = vpop.trf.xlu0
        %v3561 = vpop.trf.xlu0
        %v3562 = vpop.trf.xlu0
        %v3563 = vpop.trf.xlu0
        %v3564 = vpop.trf.xlu0
        %v3565 = vpop.trf.xlu0
        %v3566 = vpop.trf.xlu0
        %v3567 = vpop.trf.xlu0
        %v3568 = vpop.trf.xlu0
        %v3569 = vpop.trf.xlu0
        %v3570 = vpop.trf.xlu0
        %v3571 = vpop.trf.xlu0
        %v3572 = vpop.trf.xlu0
        %v3573 = vpop.trf.xlu0
        %v3574 = vpop.trf.xlu0
        %v3575 = vperm.slane %v2893, 0
        %v3576 = vperm.slane %v2952, 0
        %v3577 = vperm.slane %v2953, 0
        %v3578 = vperm.slane %v2954, 0
        %v3579 = vperm.slane %v2955, 0
        %v3580 = vperm.slane %v2956, 0
        %v3581 = vperm.slane %v2957, 0
        %v3582 = vperm.slane %v2958, 0
        %v3583 = vperm.slane %v2894, 0
        %v3584 = vperm.slane %v2959, 0
        %v3585 = vperm.slane %v2960, 0
        %v3586 = vperm.slane %v2961, 0
        %v3587 = vperm.slane %v2962, 0
        %v3588 = vperm.slane %v2963, 0
        %v3589 = vperm.slane %v2964, 0
        %v3590 = vperm.slane %v2965, 0
        %v3591 = vperm.slane %v2895, 0
        %v3592 = vperm.slane %v2966, 0
        %v3593 = vperm.slane %v2967, 0
        %v3594 = vperm.slane %v2968, 0
        %v3595 = vperm.slane %v2969, 0
        %v3596 = vperm.slane %v2970, 0
        %v3597 = vperm.slane %v2971, 0
        %v3598 = vperm.slane %v2972, 0
        %v3599 = vperm.slane %v2896, 0
        %v3600 = vperm.slane %v2973, 0
        %v3601 = vperm.slane %v2974, 0
        %v3602 = vperm.slane %v2975, 0
        %v3603 = vperm.slane %v2976, 0
        %v3604 = vperm.slane %v2977, 0
        %v3605 = vperm.slane %v2978, 0
        %v3606 = vperm.slane %v2979, 0
        %v3607 = vperm.slane %v2897, 0
        %v3608 = vperm.slane %v2980, 0
        %v3609 = vperm.slane %v2981, 0
        %v3610 = vperm.slane %v2982, 0
        %v3611 = vperm.slane %v2983, 0
        %v3612 = vperm.slane %v2984, 0
        %v3613 = vperm.slane %v2985, 0
        %v3614 = vperm.slane %v2986, 0
        %v3615 = vperm.slane %v2898, 0
        %v3616 = vperm.slane %v2987, 0
        %v3617 = vperm.slane %v2988, 0
        %v3618 = vperm.slane %v2989, 0
        %v3619 = vperm.slane %v2990, 0
        %v3620 = vperm.slane %v2991, 0
        %v3621 = vperm.slane %v2992, 0
        %v3622 = vperm.slane %v2993, 0
        %v3623 = vperm.slane %v2899, 0
        %v3624 = vperm.slane %v2994, 0
        %v3625 = vperm.slane %v2995, 0
        %v3626 = vperm.slane %v2996, 0
        %v3627 = vperm.slane %v2997, 0
        %v3628 = vperm.slane %v2998, 0
        %v3629 = vperm.slane %v2999, 0
        %v3630 = vperm.slane %v3000, 0
        %v3631 = vperm.slane %v2900, 0
        %v3632 = vperm.slane %v3001, 0
        %v3633 = vperm.slane %v3002, 0
        %v3634 = vperm.slane %v3003, 0
        %v3635 = vperm.slane %v3004, 0
        %v3636 = vperm.slane %v3005, 0
        %v3637 = vperm.slane %v3006, 0
        %v3638 = vperm.slane %v3007, 0
        %v3703 = vsel %vm608, %v2928, %v3575
        %v3704 = vsel %vm608, %v3072, %v3576
        %v3705 = vsel %vm608, %v3073, %v3577
        %v3706 = vsel %vm608, %v3074, %v3578
        %v3707 = vsel %vm608, %v3075, %v3579
        %v3708 = vsel %vm608, %v3076, %v3580
        %v3709 = vsel %vm608, %v3077, %v3581
        %v3710 = vsel %vm608, %v3078, %v3582
        %v3711 = vsel %vm608, %v2929, %v3583
        %v3712 = vsel %vm608, %v3079, %v3584
        %v3713 = vsel %vm608, %v3080, %v3585
        %v3714 = vsel %vm608, %v3081, %v3586
        %v3715 = vsel %vm608, %v3082, %v3587
        %v3716 = vsel %vm608, %v3083, %v3588
        %v3717 = vsel %vm608, %v3084, %v3589
        %v3718 = vsel %vm608, %v3085, %v3590
        %v3719 = vsel %vm608, %v2930, %v3591
        %v3720 = vsel %vm608, %v3086, %v3592
        %v3721 = vsel %vm608, %v3087, %v3593
        %v3722 = vsel %vm608, %v3088, %v3594
        %v3723 = vsel %vm608, %v3089, %v3595
        %v3724 = vsel %vm608, %v3090, %v3596
        %v3725 = vsel %vm608, %v3091, %v3597
        %v3726 = vsel %vm608, %v3092, %v3598
        %v3727 = vsel %vm608, %v2931, %v3599
        %v3728 = vsel %vm608, %v3093, %v3600
        %v3729 = vsel %vm608, %v3094, %v3601
        %v3730 = vsel %vm608, %v3095, %v3602
        %v3731 = vsel %vm608, %v3096, %v3603
        %v3732 = vsel %vm608, %v3097, %v3604
        %v3733 = vsel %vm608, %v3098, %v3605
        %v3734 = vsel %vm608, %v3099, %v3606
        %v3735 = vsel %vm608, %v2932, %v3607
        %v3736 = vsel %vm608, %v3100, %v3608
        %v3737 = vsel %vm608, %v3101, %v3609
        %v3738 = vsel %vm608, %v3102, %v3610
        %v3739 = vsel %vm608, %v3103, %v3611
        %v3740 = vsel %vm608, %v3104, %v3612
        %v3741 = vsel %vm608, %v3105, %v3613
        %v3742 = vsel %vm608, %v3106, %v3614
        %v3743 = vsel %vm608, %v2933, %v3615
        %v3744 = vsel %vm608, %v3107, %v3616
        %v3745 = vsel %vm608, %v3108, %v3617
        %v3746 = vsel %vm608, %v3109, %v3618
        %v3747 = vsel %vm608, %v3110, %v3619
        %v3748 = vsel %vm608, %v3111, %v3620
        %v3749 = vsel %vm608, %v3112, %v3621
        %v3750 = vsel %vm608, %v3113, %v3622
        %v3751 = vsel %vm608, %v2934, %v3623
        %v3752 = vsel %vm608, %v3114, %v3624
        %v3753 = vsel %vm608, %v3115, %v3625
        %v3754 = vsel %vm608, %v3116, %v3626
        %v3755 = vsel %vm608, %v3117, %v3627
        %v3756 = vsel %vm608, %v3118, %v3628
        %v3757 = vsel %vm608, %v3119, %v3629
        %v3758 = vsel %vm608, %v3120, %v3630
        %v3759 = vsel %vm608, %v2935, %v3631
        %v3760 = vsel %vm608, %v3121, %v3632
        %v3761 = vsel %vm608, %v3122, %v3633
        %v3762 = vsel %vm608, %v3123, %v3634
        %v3763 = vsel %vm608, %v3124, %v3635
        %v3764 = vsel %vm608, %v3125, %v3636
        %v3765 = vsel %vm608, %v3126, %v3637
        %v3766 = vsel %vm608, %v3127, %v3638
        %3831 = vst [vmem:[#allocation1] ss:$4 sm:$0xff] %v3703
        %s3832 = scalar_lea.vmem [#allocation1], 1
        %3833 = vst [vmem:[%s3832] ss:$4 sm:$0xff] %v3704
        %s3834 = scalar_lea.vmem [#allocation1], 2
        %3835 = vst [vmem:[%s3834] ss:$4 sm:$0xff] %v3705
        %s3836 = scalar_lea.vmem [#allocation1], 3
        %3837 = vst [vmem:[%s3836] ss:$4 sm:$0xff] %v3706
        %s3838 = scalar_lea.vmem [#allocation1], 32
        %3839 = vst [vmem:[%s3838] ss:$4 sm:$0xff] %v3707
        %s3840 = scalar_lea.vmem [#allocation1], 33
        %3841 = vst [vmem:[%s3840] ss:$4 sm:$0xff] %v3708
        %s3842 = scalar_lea.vmem [#allocation1], 34
        %3843 = vst [vmem:[%s3842] ss:$4 sm:$0xff] %v3709
        %s3844 = scalar_lea.vmem [#allocation1], 35
        %3845 = vst [vmem:[%s3844] ss:$4 sm:$0xff] %v3710
        %v3846 = vld.sshfl [vmem:[#allocation1] sm:$0xff pattern:$0x73625140]
        %v3847 = vld.sshfl [vmem:[#allocation1 + $0x20] sm:$0xff pattern:$0x73625140]
        %3848 = vst [vmem:[#allocation1] ss:$4 sm:$0xff] %v3711
        %3849 = vst [vmem:[%s3832] ss:$4 sm:$0xff] %v3712
        %3850 = vst [vmem:[%s3834] ss:$4 sm:$0xff] %v3713
        %3851 = vst [vmem:[%s3836] ss:$4 sm:$0xff] %v3714
        %3852 = vst [vmem:[%s3838] ss:$4 sm:$0xff] %v3715
        %3853 = vst [vmem:[%s3840] ss:$4 sm:$0xff] %v3716
        %3854 = vst [vmem:[%s3842] ss:$4 sm:$0xff] %v3717
        %3855 = vst [vmem:[%s3844] ss:$4 sm:$0xff] %v3718
        %v3856 = vld.sshfl [vmem:[#allocation1] sm:$0xff pattern:$0x73625140]
        %v3857 = vld.sshfl [vmem:[#allocation1 + $0x20] sm:$0xff pattern:$0x73625140]
        %3858 = vst [vmem:[#allocation1] ss:$4 sm:$0xff] %v3719
        %3859 = vst [vmem:[%s3832] ss:$4 sm:$0xff] %v3720
        %3860 = vst [vmem:[%s3834] ss:$4 sm:$0xff] %v3721
        %3861 = vst [vmem:[%s3836] ss:$4 sm:$0xff] %v3722
        %3862 = vst [vmem:[%s3838] ss:$4 sm:$0xff] %v3723
        %3863 = vst [vmem:[%s3840] ss:$4 sm:$0xff] %v3724
        %3864 = vst [vmem:[%s3842] ss:$4 sm:$0xff] %v3725
        %3865 = vst [vmem:[%s3844] ss:$4 sm:$0xff] %v3726
        %v3866 = vld.sshfl [vmem:[#allocation1] sm:$0xff pattern:$0x73625140]
        %v3867 = vld.sshfl [vmem:[#allocation1 + $0x20] sm:$0xff pattern:$0x73625140]
        %3868 = vst [vmem:[#allocation1] ss:$4 sm:$0xff] %v3727
        %3869 = vst [vmem:[%s3832] ss:$4 sm:$0xff] %v3728
        %3870 = vst [vmem:[%s3834] ss:$4 sm:$0xff] %v3729
        %3871 = vst [vmem:[%s3836] ss:$4 sm:$0xff] %v3730
        %3872 = vst [vmem:[%s3838] ss:$4 sm:$0xff] %v3731
        %3873 = vst [vmem:[%s3840] ss:$4 sm:$0xff] %v3732
        %3874 = vst [vmem:[%s3842] ss:$4 sm:$0xff] %v3733
        %3875 = vst [vmem:[%s3844] ss:$4 sm:$0xff] %v3734
        %v3876 = vld.sshfl [vmem:[#allocation1] sm:$0xff pattern:$0x73625140]
        %v3877 = vld.sshfl [vmem:[#allocation1 + $0x20] sm:$0xff pattern:$0x73625140]
        %3878 = vst [vmem:[#allocation1] ss:$4 sm:$0xff] %v3735
        %3879 = vst [vmem:[%s3832] ss:$4 sm:$0xff] %v3736
        %3880 = vst [vmem:[%s3834] ss:$4 sm:$0xff] %v3737
        %3881 = vst [vmem:[%s3836] ss:$4 sm:$0xff] %v3738
        %3882 = vst [vmem:[%s3838] ss:$4 sm:$0xff] %v3739
        %3883 = vst [vmem:[%s3840] ss:$4 sm:$0xff] %v3740
        %3884 = vst [vmem:[%s3842] ss:$4 sm:$0xff] %v3741
        %3885 = vst [vmem:[%s3844] ss:$4 sm:$0xff] %v3742
        %v3886 = vld.sshfl [vmem:[#allocation1] sm:$0xff pattern:$0x73625140]
        %v3887 = vld.sshfl [vmem:[#allocation1 + $0x20] sm:$0xff pattern:$0x73625140]
        %3888 = vst [vmem:[#allocation1] ss:$4 sm:$0xff] %v3743
        %3889 = vst [vmem:[%s3832] ss:$4 sm:$0xff] %v3744
        %3890 = vst [vmem:[%s3834] ss:$4 sm:$0xff] %v3745
        %3891 = vst [vmem:[%s3836] ss:$4 sm:$0xff] %v3746
        %3892 = vst [vmem:[%s3838] ss:$4 sm:$0xff] %v3747
        %3893 = vst [vmem:[%s3840] ss:$4 sm:$0xff] %v3748
        %3894 = vst [vmem:[%s3842] ss:$4 sm:$0xff] %v3749
        %3895 = vst [vmem:[%s3844] ss:$4 sm:$0xff] %v3750
        %v3896 = vld.sshfl [vmem:[#allocation1] sm:$0xff pattern:$0x73625140]
        %v3897 = vld.sshfl [vmem:[#allocation1 + $0x20] sm:$0xff pattern:$0x73625140]
        %3898 = vst [vmem:[#allocation1] ss:$4 sm:$0xff] %v3751
        %3899 = vst [vmem:[%s3832] ss:$4 sm:$0xff] %v3752
        %3900 = vst [vmem:[%s3834] ss:$4 sm:$0xff] %v3753
        %3901 = vst [vmem:[%s3836] ss:$4 sm:$0xff] %v3754
        %3902 = vst [vmem:[%s3838] ss:$4 sm:$0xff] %v3755
        %3903 = vst [vmem:[%s3840] ss:$4 sm:$0xff] %v3756
        %3904 = vst [vmem:[%s3842] ss:$4 sm:$0xff] %v3757
        %3905 = vst [vmem:[%s3844] ss:$4 sm:$0xff] %v3758
        %v3906 = vld.sshfl [vmem:[#allocation1] sm:$0xff pattern:$0x73625140]
        %v3907 = vld.sshfl [vmem:[#allocation1 + $0x20] sm:$0xff pattern:$0x73625140]
        %3908 = vst [vmem:[#allocation1] ss:$4 sm:$0xff] %v3759
        %3909 = vst [vmem:[%s3832] ss:$4 sm:$0xff] %v3760
        %3910 = vst [vmem:[%s3834] ss:$4 sm:$0xff] %v3761
        %3911 = vst [vmem:[%s3836] ss:$4 sm:$0xff] %v3762
        %3912 = vst [vmem:[%s3838] ss:$4 sm:$0xff] %v3763
        %3913 = vst [vmem:[%s3840] ss:$4 sm:$0xff] %v3764
        %3914 = vst [vmem:[%s3842] ss:$4 sm:$0xff] %v3765
        %3915 = vst [vmem:[%s3844] ss:$4 sm:$0xff] %v3766
        %v3916 = vld.sshfl [vmem:[#allocation1] sm:$0xff pattern:$0x73625140]
        %v3917 = vld.sshfl [vmem:[#allocation1 + $0x20] sm:$0xff pattern:$0x73625140]
        %3934 = vxpose.xlu0.b32.start [1/16] %v3846, 128
        %3935 = vxpose.xlu0.b32.cont [2/16] %v3847, 128
        %3936 = vxpose.xlu0.b32.cont [3/16] %v3856, 128
        %3937 = vxpose.xlu0.b32.cont [4/16] %v3857, 128
        %3938 = vxpose.xlu0.b32.cont [5/16] %v3866, 128
        %3939 = vxpose.xlu0.b32.cont [6/16] %v3867, 128
        %3940 = vxpose.xlu0.b32.cont [7/16] %v3876, 128
        %3941 = vxpose.xlu0.b32.cont [8/16] %v3877, 128
        %3942 = vxpose.xlu0.b32.cont [9/16] %v3886, 128
        %3943 = vxpose.xlu0.b32.cont [10/16] %v3887, 128
        %3944 = vxpose.xlu0.b32.cont [11/16] %v3896, 128
        %3945 = vxpose.xlu0.b32.cont [12/16] %v3897, 128
        %3946 = vxpose.xlu0.b32.cont [13/16] %v3906, 128
        %3947 = vxpose.xlu0.b32.cont [14/16] %v3907, 128
        %3948 = vxpose.xlu0.b32.cont [15/16] %v3916, 128
        %3949 = vxpose.xlu0.b32.end [16/16] %v3917, 128
        %v3950 = vpop.trf.xlu0
        %v3951 = vpop.trf.xlu0
        %v3952 = vpop.trf.xlu0
        %v3953 = vpop.trf.xlu0
        %v3954 = vpop.trf.xlu0
        %v3955 = vpop.trf.xlu0
        %v3956 = vpop.trf.xlu0
        %v3957 = vpop.trf.xlu0
        %v3958 = vpop.trf.xlu0
        %v3959 = vpop.trf.xlu0
        %v3960 = vpop.trf.xlu0
        %v3961 = vpop.trf.xlu0
        %v3962 = vpop.trf.xlu0
        %v3963 = vpop.trf.xlu0
        %v3964 = vpop.trf.xlu0
        %v3965 = vpop.trf.xlu0
        %s3966 = scalar_lea.vmem %s149, 96 [#allocation2]
        %v3967 = vld [vmem:[%s3966] sm:$0xff]
        %v3968 = vld [vmem:[%s3966 + $0x8] sm:$0xff]
        %3969 = vxpose.xlu0.b32.start [1/16] %v3967, 128
        %3970 = vxpose.xlu0.b32.cont [2/16] %v3968, 128
        %3971 = vxpose.xlu0.b32.cont [3/16] 0.0, 128
        %3972 = vxpose.xlu0.b32.cont [4/16] 0.0, 128
        %3973 = vxpose.xlu0.b32.cont [5/16] 0.0, 128
        %3974 = vxpose.xlu0.b32.cont [6/16] 0.0, 128
        %3975 = vxpose.xlu0.b32.cont [7/16] 0.0, 128
        %3976 = vxpose.xlu0.b32.cont [8/16] 0.0, 128
        %3977 = vxpose.xlu0.b32.cont [9/16] 0.0, 128
        %3978 = vxpose.xlu0.b32.cont [10/16] 0.0, 128
        %3979 = vxpose.xlu0.b32.cont [11/16] 0.0, 128
        %3980 = vxpose.xlu0.b32.cont [12/16] 0.0, 128
        %3981 = vxpose.xlu0.b32.cont [13/16] 0.0, 128
        %3982 = vxpose.xlu0.b32.cont [14/16] 0.0, 128
        %3983 = vxpose.xlu0.b32.cont [15/16] 0.0, 128
        %3984 = vxpose.xlu0.b32.end [16/16] 0.0, 128
        %v3985 = vpop.trf.xlu0
        %v3986 = vpop.trf.xlu0
        %v3987 = vpop.trf.xlu0
        %v3988 = vpop.trf.xlu0
        %v3989 = vpop.trf.xlu0
        %v3990 = vpop.trf.xlu0
        %v3991 = vpop.trf.xlu0
        %v3992 = vpop.trf.xlu0
        %v3993 = vpop.trf.xlu0
        %v3994 = vpop.trf.xlu0
        %v3995 = vpop.trf.xlu0
        %v3996 = vpop.trf.xlu0
        %v3997 = vpop.trf.xlu0
        %v3998 = vpop.trf.xlu0
        %v3999 = vpop.trf.xlu0
        %v4000 = vpop.trf.xlu0
        %s4001 = scalar_lea.vmem %s149, 112 [#allocation2]
        %v4002 = vld [vmem:[%s4001] sm:$0xff]
        %v4003 = vld [vmem:[%s4001 + $0x8] sm:$0xff]
        %4004 = vxpose.xlu0.b32.start [1/16] %v4002, 128
        %4005 = vxpose.xlu0.b32.cont [2/16] %v4003, 128
        %4006 = vxpose.xlu0.b32.cont [3/16] 0.0, 128
        %4007 = vxpose.xlu0.b32.cont [4/16] 0.0, 128
        %4008 = vxpose.xlu0.b32.cont [5/16] 0.0, 128
        %4009 = vxpose.xlu0.b32.cont [6/16] 0.0, 128
        %4010 = vxpose.xlu0.b32.cont [7/16] 0.0, 128
        %4011 = vxpose.xlu0.b32.cont [8/16] 0.0, 128
        %4012 = vxpose.xlu0.b32.cont [9/16] 0.0, 128
        %4013 = vxpose.xlu0.b32.cont [10/16] 0.0, 128
        %4014 = vxpose.xlu0.b32.cont [11/16] 0.0, 128
        %4015 = vxpose.xlu0.b32.cont [12/16] 0.0, 128
        %4016 = vxpose.xlu0.b32.cont [13/16] 0.0, 128
        %4017 = vxpose.xlu0.b32.cont [14/16] 0.0, 128
        %4018 = vxpose.xlu0.b32.cont [15/16] 0.0, 128
        %4019 = vxpose.xlu0.b32.end [16/16] 0.0, 128
        %v4020 = vpop.trf.xlu0
        %v4021 = vpop.trf.xlu0
        %v4022 = vpop.trf.xlu0
        %v4023 = vpop.trf.xlu0
        %v4024 = vpop.trf.xlu0
        %v4025 = vpop.trf.xlu0
        %v4026 = vpop.trf.xlu0
        %v4027 = vpop.trf.xlu0
        %v4028 = vpop.trf.xlu0
        %v4029 = vpop.trf.xlu0
        %v4030 = vpop.trf.xlu0
        %v4031 = vpop.trf.xlu0
        %v4032 = vpop.trf.xlu0
        %v4033 = vpop.trf.xlu0
        %v4034 = vpop.trf.xlu0
        %v4035 = vpop.trf.xlu0
        %v4044 = vrot.slane %v3985, 1
        %v4045 = vrot.slane %v3985, 2
        %v4046 = vrot.slane %v3985, 3
        %v4047 = vrot.slane %v3985, 4
        %v4048 = vrot.slane %v3985, 5
        %v4049 = vrot.slane %v3985, 6
        %v4050 = vrot.slane %v3985, 7
        %v4051 = vrot.slane %v3986, 1
        %v4052 = vrot.slane %v3986, 2
        %v4053 = vrot.slane %v3986, 3
        %v4054 = vrot.slane %v3986, 4
        %v4055 = vrot.slane %v3986, 5
        %v4056 = vrot.slane %v3986, 6
        %v4057 = vrot.slane %v3986, 7
        %v4058 = vrot.slane %v3987, 1
        %v4059 = vrot.slane %v3987, 2
        %v4060 = vrot.slane %v3987, 3
        %v4061 = vrot.slane %v3987, 4
        %v4062 = vrot.slane %v3987, 5
        %v4063 = vrot.slane %v3987, 6
        %v4064 = vrot.slane %v3987, 7
        %v4065 = vrot.slane %v3988, 1
        %v4066 = vrot.slane %v3988, 2
        %v4067 = vrot.slane %v3988, 3
        %v4068 = vrot.slane %v3988, 4
        %v4069 = vrot.slane %v3988, 5
        %v4070 = vrot.slane %v3988, 6
        %v4071 = vrot.slane %v3988, 7
        %v4072 = vrot.slane %v3989, 1
        %v4073 = vrot.slane %v3989, 2
        %v4074 = vrot.slane %v3989, 3
        %v4075 = vrot.slane %v3989, 4
        %v4076 = vrot.slane %v3989, 5
        %v4077 = vrot.slane %v3989, 6
        %v4078 = vrot.slane %v3989, 7
        %v4079 = vrot.slane %v3990, 1
        %v4080 = vrot.slane %v3990, 2
        %v4081 = vrot.slane %v3990, 3
        %v4082 = vrot.slane %v3990, 4
        %v4083 = vrot.slane %v3990, 5
        %v4084 = vrot.slane %v3990, 6
        %v4085 = vrot.slane %v3990, 7
        %v4086 = vrot.slane %v3991, 1
        %v4087 = vrot.slane %v3991, 2
        %v4088 = vrot.slane %v3991, 3
        %v4089 = vrot.slane %v3991, 4
        %v4090 = vrot.slane %v3991, 5
        %v4091 = vrot.slane %v3991, 6
        %v4092 = vrot.slane %v3991, 7
        %v4093 = vrot.slane %v3992, 1
        %v4094 = vrot.slane %v3992, 2
        %v4095 = vrot.slane %v3992, 3
        %v4096 = vrot.slane %v3992, 4
        %v4097 = vrot.slane %v3992, 5
        %v4098 = vrot.slane %v3992, 6
        %v4099 = vrot.slane %v3992, 7
        %v4164 = vrot.slane %v4020, 1
        %v4165 = vrot.slane %v4020, 2
        %v4166 = vrot.slane %v4020, 3
        %v4167 = vrot.slane %v4020, 4
        %v4168 = vrot.slane %v4020, 5
        %v4169 = vrot.slane %v4020, 6
        %v4170 = vrot.slane %v4020, 7
        %v4171 = vrot.slane %v4021, 1
        %v4172 = vrot.slane %v4021, 2
        %v4173 = vrot.slane %v4021, 3
        %v4174 = vrot.slane %v4021, 4
        %v4175 = vrot.slane %v4021, 5
        %v4176 = vrot.slane %v4021, 6
        %v4177 = vrot.slane %v4021, 7
        %v4178 = vrot.slane %v4022, 1
        %v4179 = vrot.slane %v4022, 2
        %v4180 = vrot.slane %v4022, 3
        %v4181 = vrot.slane %v4022, 4
        %v4182 = vrot.slane %v4022, 5
        %v4183 = vrot.slane %v4022, 6
        %v4184 = vrot.slane %v4022, 7
        %v4185 = vrot.slane %v4023, 1
        %v4186 = vrot.slane %v4023, 2
        %v4187 = vrot.slane %v4023, 3
        %v4188 = vrot.slane %v4023, 4
        %v4189 = vrot.slane %v4023, 5
        %v4190 = vrot.slane %v4023, 6
        %v4191 = vrot.slane %v4023, 7
        %v4192 = vrot.slane %v4024, 1
        %v4193 = vrot.slane %v4024, 2
        %v4194 = vrot.slane %v4024, 3
        %v4195 = vrot.slane %v4024, 4
        %v4196 = vrot.slane %v4024, 5
        %v4197 = vrot.slane %v4024, 6
        %v4198 = vrot.slane %v4024, 7
        %v4199 = vrot.slane %v4025, 1
        %v4200 = vrot.slane %v4025, 2
        %v4201 = vrot.slane %v4025, 3
        %v4202 = vrot.slane %v4025, 4
        %v4203 = vrot.slane %v4025, 5
        %v4204 = vrot.slane %v4025, 6
        %v4205 = vrot.slane %v4025, 7
        %v4206 = vrot.slane %v4026, 1
        %v4207 = vrot.slane %v4026, 2
        %v4208 = vrot.slane %v4026, 3
        %v4209 = vrot.slane %v4026, 4
        %v4210 = vrot.slane %v4026, 5
        %v4211 = vrot.slane %v4026, 6
        %v4212 = vrot.slane %v4026, 7
        %v4213 = vrot.slane %v4027, 1
        %v4214 = vrot.slane %v4027, 2
        %v4215 = vrot.slane %v4027, 3
        %v4216 = vrot.slane %v4027, 4
        %v4217 = vrot.slane %v4027, 5
        %v4218 = vrot.slane %v4027, 6
        %v4219 = vrot.slane %v4027, 7
        %v4276 = vperm.slane %v4020, 0
        %v4277 = vperm.slane %v4164, 0
        %v4278 = vperm.slane %v4165, 0
        %v4279 = vperm.slane %v4166, 0
        %v4280 = vperm.slane %v4167, 0
        %v4281 = vperm.slane %v4168, 0
        %v4282 = vperm.slane %v4169, 0
        %v4283 = vperm.slane %v4170, 0
        %v4284 = vperm.slane %v4021, 0
        %v4285 = vperm.slane %v4171, 0
        %v4286 = vperm.slane %v4172, 0
        %v4287 = vperm.slane %v4173, 0
        %v4288 = vperm.slane %v4174, 0
        %v4289 = vperm.slane %v4175, 0
        %v4290 = vperm.slane %v4176, 0
        %v4291 = vperm.slane %v4177, 0
        %v4292 = vperm.slane %v4022, 0
        %v4293 = vperm.slane %v4178, 0
        %v4294 = vperm.slane %v4179, 0
        %v4295 = vperm.slane %v4180, 0
        %v4296 = vperm.slane %v4181, 0
        %v4297 = vperm.slane %v4182, 0
        %v4298 = vperm.slane %v4183, 0
        %v4299 = vperm.slane %v4184, 0
        %v4300 = vperm.slane %v4023, 0
        %v4301 = vperm.slane %v4185, 0
        %v4302 = vperm.slane %v4186, 0
        %v4303 = vperm.slane %v4187, 0
        %v4304 = vperm.slane %v4188, 0
        %v4305 = vperm.slane %v4189, 0
        %v4306 = vperm.slane %v4190, 0
        %v4307 = vperm.slane %v4191, 0
        %v4308 = vperm.slane %v4024, 0
        %v4309 = vperm.slane %v4192, 0
        %v4310 = vperm.slane %v4193, 0
        %v4311 = vperm.slane %v4194, 0
        %v4312 = vperm.slane %v4195, 0
        %v4313 = vperm.slane %v4196, 0
        %v4314 = vperm.slane %v4197, 0
        %v4315 = vperm.slane %v4198, 0
        %v4316 = vperm.slane %v4025, 0
        %v4317 = vperm.slane %v4199, 0
        %v4318 = vperm.slane %v4200, 0
        %v4319 = vperm.slane %v4201, 0
        %v4320 = vperm.slane %v4202, 0
        %v4321 = vperm.slane %v4203, 0
        %v4322 = vperm.slane %v4204, 0
        %v4323 = vperm.slane %v4205, 0
        %v4324 = vperm.slane %v4026, 0
        %v4325 = vperm.slane %v4206, 0
        %v4326 = vperm.slane %v4207, 0
        %v4327 = vperm.slane %v4208, 0
        %v4328 = vperm.slane %v4209, 0
        %v4329 = vperm.slane %v4210, 0
        %v4330 = vperm.slane %v4211, 0
        %v4331 = vperm.slane %v4212, 0
        %v4332 = vperm.slane %v4027, 0
        %v4333 = vperm.slane %v4213, 0
        %v4334 = vperm.slane %v4214, 0
        %v4335 = vperm.slane %v4215, 0
        %v4336 = vperm.slane %v4216, 0
        %v4337 = vperm.slane %v4217, 0
        %v4338 = vperm.slane %v4218, 0
        %v4339 = vperm.slane %v4219, 0
        %v4404 = vsel %vm608, %v3985, %v4276
        %v4405 = vsel %vm608, %v4044, %v4277
        %v4406 = vsel %vm608, %v4045, %v4278
        %v4407 = vsel %vm608, %v4046, %v4279
        %v4408 = vsel %vm608, %v4047, %v4280
        %v4409 = vsel %vm608, %v4048, %v4281
        %v4410 = vsel %vm608, %v4049, %v4282
        %v4411 = vsel %vm608, %v4050, %v4283
        %v4412 = vsel %vm608, %v3986, %v4284
        %v4413 = vsel %vm608, %v4051, %v4285
        %v4414 = vsel %vm608, %v4052, %v4286
        %v4415 = vsel %vm608, %v4053, %v4287
        %v4416 = vsel %vm608, %v4054, %v4288
        %v4417 = vsel %vm608, %v4055, %v4289
        %v4418 = vsel %vm608, %v4056, %v4290
        %v4419 = vsel %vm608, %v4057, %v4291
        %v4420 = vsel %vm608, %v3987, %v4292
        %v4421 = vsel %vm608, %v4058, %v4293
        %v4422 = vsel %vm608, %v4059, %v4294
        %v4423 = vsel %vm608, %v4060, %v4295
        %v4424 = vsel %vm608, %v4061, %v4296
        %v4425 = vsel %vm608, %v4062, %v4297
        %v4426 = vsel %vm608, %v4063, %v4298
        %v4427 = vsel %vm608, %v4064, %v4299
        %v4428 = vsel %vm608, %v3988, %v4300
        %v4429 = vsel %vm608, %v4065, %v4301
        %v4430 = vsel %vm608, %v4066, %v4302
        %v4431 = vsel %vm608, %v4067, %v4303
        %v4432 = vsel %vm608, %v4068, %v4304
        %v4433 = vsel %vm608, %v4069, %v4305
        %v4434 = vsel %vm608, %v4070, %v4306
        %v4435 = vsel %vm608, %v4071, %v4307
        %v4436 = vsel %vm608, %v3989, %v4308
        %v4437 = vsel %vm608, %v4072, %v4309
        %v4438 = vsel %vm608, %v4073, %v4310
        %v4439 = vsel %vm608, %v4074, %v4311
        %v4440 = vsel %vm608, %v4075, %v4312
        %v4441 = vsel %vm608, %v4076, %v4313
        %v4442 = vsel %vm608, %v4077, %v4314
        %v4443 = vsel %vm608, %v4078, %v4315
        %v4444 = vsel %vm608, %v3990, %v4316
        %v4445 = vsel %vm608, %v4079, %v4317
        %v4446 = vsel %vm608, %v4080, %v4318
        %v4447 = vsel %vm608, %v4081, %v4319
        %v4448 = vsel %vm608, %v4082, %v4320
        %v4449 = vsel %vm608, %v4083, %v4321
        %v4450 = vsel %vm608, %v4084, %v4322
        %v4451 = vsel %vm608, %v4085, %v4323
        %v4452 = vsel %vm608, %v3991, %v4324
        %v4453 = vsel %vm608, %v4086, %v4325
        %v4454 = vsel %vm608, %v4087, %v4326
        %v4455 = vsel %vm608, %v4088, %v4327
        %v4456 = vsel %vm608, %v4089, %v4328
        %v4457 = vsel %vm608, %v4090, %v4329
        %v4458 = vsel %vm608, %v4091, %v4330
        %v4459 = vsel %vm608, %v4092, %v4331
        %v4460 = vsel %vm608, %v3992, %v4332
        %v4461 = vsel %vm608, %v4093, %v4333
        %v4462 = vsel %vm608, %v4094, %v4334
        %v4463 = vsel %vm608, %v4095, %v4335
        %v4464 = vsel %vm608, %v4096, %v4336
        %v4465 = vsel %vm608, %v4097, %v4337
        %v4466 = vsel %vm608, %v4098, %v4338
        %v4467 = vsel %vm608, %v4099, %v4339
        %4532 = vst [vmem:[#allocation1] ss:$4 sm:$0xff] %v4404
        %s4533 = scalar_lea.vmem [#allocation1], 1
        %4534 = vst [vmem:[%s4533] ss:$4 sm:$0xff] %v4405
        %s4535 = scalar_lea.vmem [#allocation1], 2
        %4536 = vst [vmem:[%s4535] ss:$4 sm:$0xff] %v4406
        %s4537 = scalar_lea.vmem [#allocation1], 3
        %4538 = vst [vmem:[%s4537] ss:$4 sm:$0xff] %v4407
        %s4539 = scalar_lea.vmem [#allocation1], 32
        %4540 = vst [vmem:[%s4539] ss:$4 sm:$0xff] %v4408
        %s4541 = scalar_lea.vmem [#allocation1], 33
        %4542 = vst [vmem:[%s4541] ss:$4 sm:$0xff] %v4409
        %s4543 = scalar_lea.vmem [#allocation1], 34
        %4544 = vst [vmem:[%s4543] ss:$4 sm:$0xff] %v4410
        %s4545 = scalar_lea.vmem [#allocation1], 35
        %4546 = vst [vmem:[%s4545] ss:$4 sm:$0xff] %v4411
        %v4547 = vld.sshfl [vmem:[#allocation1] sm:$0xff pattern:$0x73625140]
        %v4548 = vld.sshfl [vmem:[#allocation1 + $0x20] sm:$0xff pattern:$0x73625140]
        %4549 = vst [vmem:[#allocation1] ss:$4 sm:$0xff] %v4412
        %4550 = vst [vmem:[%s4533] ss:$4 sm:$0xff] %v4413
        %4551 = vst [vmem:[%s4535] ss:$4 sm:$0xff] %v4414
        %4552 = vst [vmem:[%s4537] ss:$4 sm:$0xff] %v4415
        %4553 = vst [vmem:[%s4539] ss:$4 sm:$0xff] %v4416
        %4554 = vst [vmem:[%s4541] ss:$4 sm:$0xff] %v4417
        %4555 = vst [vmem:[%s4543] ss:$4 sm:$0xff] %v4418
        %4556 = vst [vmem:[%s4545] ss:$4 sm:$0xff] %v4419
        %v4557 = vld.sshfl [vmem:[#allocation1] sm:$0xff pattern:$0x73625140]
        %v4558 = vld.sshfl [vmem:[#allocation1 + $0x20] sm:$0xff pattern:$0x73625140]
        %4559 = vst [vmem:[#allocation1] ss:$4 sm:$0xff] %v4420
        %4560 = vst [vmem:[%s4533] ss:$4 sm:$0xff] %v4421
        %4561 = vst [vmem:[%s4535] ss:$4 sm:$0xff] %v4422
        %4562 = vst [vmem:[%s4537] ss:$4 sm:$0xff] %v4423
        %4563 = vst [vmem:[%s4539] ss:$4 sm:$0xff] %v4424
        %4564 = vst [vmem:[%s4541] ss:$4 sm:$0xff] %v4425
        %4565 = vst [vmem:[%s4543] ss:$4 sm:$0xff] %v4426
        %4566 = vst [vmem:[%s4545] ss:$4 sm:$0xff] %v4427
        %v4567 = vld.sshfl [vmem:[#allocation1] sm:$0xff pattern:$0x73625140]
        %v4568 = vld.sshfl [vmem:[#allocation1 + $0x20] sm:$0xff pattern:$0x73625140]
        %4569 = vst [vmem:[#allocation1] ss:$4 sm:$0xff] %v4428
        %4570 = vst [vmem:[%s4533] ss:$4 sm:$0xff] %v4429
        %4571 = vst [vmem:[%s4535] ss:$4 sm:$0xff] %v4430
        %4572 = vst [vmem:[%s4537] ss:$4 sm:$0xff] %v4431
        %4573 = vst [vmem:[%s4539] ss:$4 sm:$0xff] %v4432
        %4574 = vst [vmem:[%s4541] ss:$4 sm:$0xff] %v4433
        %4575 = vst [vmem:[%s4543] ss:$4 sm:$0xff] %v4434
        %4576 = vst [vmem:[%s4545] ss:$4 sm:$0xff] %v4435
        %v4577 = vld.sshfl [vmem:[#allocation1] sm:$0xff pattern:$0x73625140]
        %v4578 = vld.sshfl [vmem:[#allocation1 + $0x20] sm:$0xff pattern:$0x73625140]
        %4579 = vst [vmem:[#allocation1] ss:$4 sm:$0xff] %v4436
        %4580 = vst [vmem:[%s4533] ss:$4 sm:$0xff] %v4437
        %4581 = vst [vmem:[%s4535] ss:$4 sm:$0xff] %v4438
        %4582 = vst [vmem:[%s4537] ss:$4 sm:$0xff] %v4439
        %4583 = vst [vmem:[%s4539] ss:$4 sm:$0xff] %v4440
        %4584 = vst [vmem:[%s4541] ss:$4 sm:$0xff] %v4441
        %4585 = vst [vmem:[%s4543] ss:$4 sm:$0xff] %v4442
        %4586 = vst [vmem:[%s4545] ss:$4 sm:$0xff] %v4443
        %v4587 = vld.sshfl [vmem:[#allocation1] sm:$0xff pattern:$0x73625140]
        %v4588 = vld.sshfl [vmem:[#allocation1 + $0x20] sm:$0xff pattern:$0x73625140]
        %4589 = vst [vmem:[#allocation1] ss:$4 sm:$0xff] %v4444
        %4590 = vst [vmem:[%s4533] ss:$4 sm:$0xff] %v4445
        %4591 = vst [vmem:[%s4535] ss:$4 sm:$0xff] %v4446
        %4592 = vst [vmem:[%s4537] ss:$4 sm:$0xff] %v4447
        %4593 = vst [vmem:[%s4539] ss:$4 sm:$0xff] %v4448
        %4594 = vst [vmem:[%s4541] ss:$4 sm:$0xff] %v4449
        %4595 = vst [vmem:[%s4543] ss:$4 sm:$0xff] %v4450
        %4596 = vst [vmem:[%s4545] ss:$4 sm:$0xff] %v4451
        %v4597 = vld.sshfl [vmem:[#allocation1] sm:$0xff pattern:$0x73625140]
        %v4598 = vld.sshfl [vmem:[#allocation1 + $0x20] sm:$0xff pattern:$0x73625140]
        %4599 = vst [vmem:[#allocation1] ss:$4 sm:$0xff] %v4452
        %4600 = vst [vmem:[%s4533] ss:$4 sm:$0xff] %v4453
        %4601 = vst [vmem:[%s4535] ss:$4 sm:$0xff] %v4454
        %4602 = vst [vmem:[%s4537] ss:$4 sm:$0xff] %v4455
        %4603 = vst [vmem:[%s4539] ss:$4 sm:$0xff] %v4456
        %4604 = vst [vmem:[%s4541] ss:$4 sm:$0xff] %v4457
        %4605 = vst [vmem:[%s4543] ss:$4 sm:$0xff] %v4458
        %4606 = vst [vmem:[%s4545] ss:$4 sm:$0xff] %v4459
        %v4607 = vld.sshfl [vmem:[#allocation1] sm:$0xff pattern:$0x73625140]
        %v4608 = vld.sshfl [vmem:[#allocation1 + $0x20] sm:$0xff pattern:$0x73625140]
        %4609 = vst [vmem:[#allocation1] ss:$4 sm:$0xff] %v4460
        %4610 = vst [vmem:[%s4533] ss:$4 sm:$0xff] %v4461
        %4611 = vst [vmem:[%s4535] ss:$4 sm:$0xff] %v4462
        %4612 = vst [vmem:[%s4537] ss:$4 sm:$0xff] %v4463
        %4613 = vst [vmem:[%s4539] ss:$4 sm:$0xff] %v4464
        %4614 = vst [vmem:[%s4541] ss:$4 sm:$0xff] %v4465
        %4615 = vst [vmem:[%s4543] ss:$4 sm:$0xff] %v4466
        %4616 = vst [vmem:[%s4545] ss:$4 sm:$0xff] %v4467
        %v4617 = vld.sshfl [vmem:[#allocation1] sm:$0xff pattern:$0x73625140]
        %v4618 = vld.sshfl [vmem:[#allocation1 + $0x20] sm:$0xff pattern:$0x73625140]
        %4635 = vxpose.xlu0.b32.start [1/16] %v4547, 128
        %4636 = vxpose.xlu0.b32.cont [2/16] %v4548, 128
        %4637 = vxpose.xlu0.b32.cont [3/16] %v4557, 128
        %4638 = vxpose.xlu0.b32.cont [4/16] %v4558, 128
        %4639 = vxpose.xlu0.b32.cont [5/16] %v4567, 128
        %4640 = vxpose.xlu0.b32.cont [6/16] %v4568, 128
        %4641 = vxpose.xlu0.b32.cont [7/16] %v4577, 128
        %4642 = vxpose.xlu0.b32.cont [8/16] %v4578, 128
        %4643 = vxpose.xlu0.b32.cont [9/16] %v4587, 128
        %4644 = vxpose.xlu0.b32.cont [10/16] %v4588, 128
        %4645 = vxpose.xlu0.b32.cont [11/16] %v4597, 128
        %4646 = vxpose.xlu0.b32.cont [12/16] %v4598, 128
        %4647 = vxpose.xlu0.b32.cont [13/16] %v4607, 128
        %4648 = vxpose.xlu0.b32.cont [14/16] %v4608, 128
        %4649 = vxpose.xlu0.b32.cont [15/16] %v4617, 128
        %4650 = vxpose.xlu0.b32.end [16/16] %v4618, 128
        %v4651 = vpop.trf.xlu0
        %v4652 = vpop.trf.xlu0
        %v4653 = vpop.trf.xlu0
        %v4654 = vpop.trf.xlu0
        %v4655 = vpop.trf.xlu0
        %v4656 = vpop.trf.xlu0
        %v4657 = vpop.trf.xlu0
        %v4658 = vpop.trf.xlu0
        %v4659 = vpop.trf.xlu0
        %v4660 = vpop.trf.xlu0
        %v4661 = vpop.trf.xlu0
        %v4662 = vpop.trf.xlu0
        %v4663 = vpop.trf.xlu0
        %v4664 = vpop.trf.xlu0
        %v4665 = vpop.trf.xlu0
        %v4666 = vpop.trf.xlu0
        %v4667 = vperm.slane %v3985, 0
        %v4668 = vperm.slane %v4044, 0
        %v4669 = vperm.slane %v4045, 0
        %v4670 = vperm.slane %v4046, 0
        %v4671 = vperm.slane %v4047, 0
        %v4672 = vperm.slane %v4048, 0
        %v4673 = vperm.slane %v4049, 0
        %v4674 = vperm.slane %v4050, 0
        %v4675 = vperm.slane %v3986, 0
        %v4676 = vperm.slane %v4051, 0
        %v4677 = vperm.slane %v4052, 0
        %v4678 = vperm.slane %v4053, 0
        %v4679 = vperm.slane %v4054, 0
        %v4680 = vperm.slane %v4055, 0
        %v4681 = vperm.slane %v4056, 0
        %v4682 = vperm.slane %v4057, 0
        %v4683 = vperm.slane %v3987, 0
        %v4684 = vperm.slane %v4058, 0
        %v4685 = vperm.slane %v4059, 0
        %v4686 = vperm.slane %v4060, 0
        %v4687 = vperm.slane %v4061, 0
        %v4688 = vperm.slane %v4062, 0
        %v4689 = vperm.slane %v4063, 0
        %v4690 = vperm.slane %v4064, 0
        %v4691 = vperm.slane %v3988, 0
        %v4692 = vperm.slane %v4065, 0
        %v4693 = vperm.slane %v4066, 0
        %v4694 = vperm.slane %v4067, 0
        %v4695 = vperm.slane %v4068, 0
        %v4696 = vperm.slane %v4069, 0
        %v4697 = vperm.slane %v4070, 0
        %v4698 = vperm.slane %v4071, 0
        %v4699 = vperm.slane %v3989, 0
        %v4700 = vperm.slane %v4072, 0
        %v4701 = vperm.slane %v4073, 0
        %v4702 = vperm.slane %v4074, 0
        %v4703 = vperm.slane %v4075, 0
        %v4704 = vperm.slane %v4076, 0
        %v4705 = vperm.slane %v4077, 0
        %v4706 = vperm.slane %v4078, 0
        %v4707 = vperm.slane %v3990, 0
        %v4708 = vperm.slane %v4079, 0
        %v4709 = vperm.slane %v4080, 0
        %v4710 = vperm.slane %v4081, 0
        %v4711 = vperm.slane %v4082, 0
        %v4712 = vperm.slane %v4083, 0
        %v4713 = vperm.slane %v4084, 0
        %v4714 = vperm.slane %v4085, 0
        %v4715 = vperm.slane %v3991, 0
        %v4716 = vperm.slane %v4086, 0
        %v4717 = vperm.slane %v4087, 0
        %v4718 = vperm.slane %v4088, 0
        %v4719 = vperm.slane %v4089, 0
        %v4720 = vperm.slane %v4090, 0
        %v4721 = vperm.slane %v4091, 0
        %v4722 = vperm.slane %v4092, 0
        %v4723 = vperm.slane %v3992, 0
        %v4724 = vperm.slane %v4093, 0
        %v4725 = vperm.slane %v4094, 0
        %v4726 = vperm.slane %v4095, 0
        %v4727 = vperm.slane %v4096, 0
        %v4728 = vperm.slane %v4097, 0
        %v4729 = vperm.slane %v4098, 0
        %v4730 = vperm.slane %v4099, 0
        %v4795 = vsel %vm608, %v4020, %v4667
        %v4796 = vsel %vm608, %v4164, %v4668
        %v4797 = vsel %vm608, %v4165, %v4669
        %v4798 = vsel %vm608, %v4166, %v4670
        %v4799 = vsel %vm608, %v4167, %v4671
        %v4800 = vsel %vm608, %v4168, %v4672
        %v4801 = vsel %vm608, %v4169, %v4673
        %v4802 = vsel %vm608, %v4170, %v4674
        %v4803 = vsel %vm608, %v4021, %v4675
        %v4804 = vsel %vm608, %v4171, %v4676
        %v4805 = vsel %vm608, %v4172, %v4677
        %v4806 = vsel %vm608, %v4173, %v4678
        %v4807 = vsel %vm608, %v4174, %v4679
        %v4808 = vsel %vm608, %v4175, %v4680
        %v4809 = vsel %vm608, %v4176, %v4681
        %v4810 = vsel %vm608, %v4177, %v4682
        %v4811 = vsel %vm608, %v4022, %v4683
        %v4812 = vsel %vm608, %v4178, %v4684
        %v4813 = vsel %vm608, %v4179, %v4685
        %v4814 = vsel %vm608, %v4180, %v4686
        %v4815 = vsel %vm608, %v4181, %v4687
        %v4816 = vsel %vm608, %v4182, %v4688
        %v4817 = vsel %vm608, %v4183, %v4689
        %v4818 = vsel %vm608, %v4184, %v4690
        %v4819 = vsel %vm608, %v4023, %v4691
        %v4820 = vsel %vm608, %v4185, %v4692
        %v4821 = vsel %vm608, %v4186, %v4693
        %v4822 = vsel %vm608, %v4187, %v4694
        %v4823 = vsel %vm608, %v4188, %v4695
        %v4824 = vsel %vm608, %v4189, %v4696
        %v4825 = vsel %vm608, %v4190, %v4697
        %v4826 = vsel %vm608, %v4191, %v4698
        %v4827 = vsel %vm608, %v4024, %v4699
        %v4828 = vsel %vm608, %v4192, %v4700
        %v4829 = vsel %vm608, %v4193, %v4701
        %v4830 = vsel %vm608, %v4194, %v4702
        %v4831 = vsel %vm608, %v4195, %v4703
        %v4832 = vsel %vm608, %v4196, %v4704
        %v4833 = vsel %vm608, %v4197, %v4705
        %v4834 = vsel %vm608, %v4198, %v4706
        %v4835 = vsel %vm608, %v4025, %v4707
        %v4836 = vsel %vm608, %v4199, %v4708
        %v4837 = vsel %vm608, %v4200, %v4709
        %v4838 = vsel %vm608, %v4201, %v4710
        %v4839 = vsel %vm608, %v4202, %v4711
        %v4840 = vsel %vm608, %v4203, %v4712
        %v4841 = vsel %vm608, %v4204, %v4713
        %v4842 = vsel %vm608, %v4205, %v4714
        %v4843 = vsel %vm608, %v4026, %v4715
        %v4844 = vsel %vm608, %v4206, %v4716
        %v4845 = vsel %vm608, %v4207, %v4717
        %v4846 = vsel %vm608, %v4208, %v4718
        %v4847 = vsel %vm608, %v4209, %v4719
        %v4848 = vsel %vm608, %v4210, %v4720
        %v4849 = vsel %vm608, %v4211, %v4721
        %v4850 = vsel %vm608, %v4212, %v4722
        %v4851 = vsel %vm608, %v4027, %v4723
        %v4852 = vsel %vm608, %v4213, %v4724
        %v4853 = vsel %vm608, %v4214, %v4725
        %v4854 = vsel %vm608, %v4215, %v4726
        %v4855 = vsel %vm608, %v4216, %v4727
        %v4856 = vsel %vm608, %v4217, %v4728
        %v4857 = vsel %vm608, %v4218, %v4729
        %v4858 = vsel %vm608, %v4219, %v4730
        %4923 = vst [vmem:[#allocation1] ss:$4 sm:$0xff] %v4795
        %s4924 = scalar_lea.vmem [#allocation1], 1
        %4925 = vst [vmem:[%s4924] ss:$4 sm:$0xff] %v4796
        %s4926 = scalar_lea.vmem [#allocation1], 2
        %4927 = vst [vmem:[%s4926] ss:$4 sm:$0xff] %v4797
        %s4928 = scalar_lea.vmem [#allocation1], 3
        %4929 = vst [vmem:[%s4928] ss:$4 sm:$0xff] %v4798
        %s4930 = scalar_lea.vmem [#allocation1], 32
        %4931 = vst [vmem:[%s4930] ss:$4 sm:$0xff] %v4799
        %s4932 = scalar_lea.vmem [#allocation1], 33
        %4933 = vst [vmem:[%s4932] ss:$4 sm:$0xff] %v4800
        %s4934 = scalar_lea.vmem [#allocation1], 34
        %4935 = vst [vmem:[%s4934] ss:$4 sm:$0xff] %v4801
        %s4936 = scalar_lea.vmem [#allocation1], 35
        %4937 = vst [vmem:[%s4936] ss:$4 sm:$0xff] %v4802
        %v4938 = vld.sshfl [vmem:[#allocation1] sm:$0xff pattern:$0x73625140]
        %v4939 = vld.sshfl [vmem:[#allocation1 + $0x20] sm:$0xff pattern:$0x73625140]
        %4940 = vst [vmem:[#allocation1] ss:$4 sm:$0xff] %v4803
        %4941 = vst [vmem:[%s4924] ss:$4 sm:$0xff] %v4804
        %4942 = vst [vmem:[%s4926] ss:$4 sm:$0xff] %v4805
        %4943 = vst [vmem:[%s4928] ss:$4 sm:$0xff] %v4806
        %4944 = vst [vmem:[%s4930] ss:$4 sm:$0xff] %v4807
        %4945 = vst [vmem:[%s4932] ss:$4 sm:$0xff] %v4808
        %4946 = vst [vmem:[%s4934] ss:$4 sm:$0xff] %v4809
        %4947 = vst [vmem:[%s4936] ss:$4 sm:$0xff] %v4810
        %v4948 = vld.sshfl [vmem:[#allocation1] sm:$0xff pattern:$0x73625140]
        %v4949 = vld.sshfl [vmem:[#allocation1 + $0x20] sm:$0xff pattern:$0x73625140]
        %4950 = vst [vmem:[#allocation1] ss:$4 sm:$0xff] %v4811
        %4951 = vst [vmem:[%s4924] ss:$4 sm:$0xff] %v4812
        %4952 = vst [vmem:[%s4926] ss:$4 sm:$0xff] %v4813
        %4953 = vst [vmem:[%s4928] ss:$4 sm:$0xff] %v4814
        %4954 = vst [vmem:[%s4930] ss:$4 sm:$0xff] %v4815
        %4955 = vst [vmem:[%s4932] ss:$4 sm:$0xff] %v4816
        %4956 = vst [vmem:[%s4934] ss:$4 sm:$0xff] %v4817
        %4957 = vst [vmem:[%s4936] ss:$4 sm:$0xff] %v4818
        %v4958 = vld.sshfl [vmem:[#allocation1] sm:$0xff pattern:$0x73625140]
        %v4959 = vld.sshfl [vmem:[#allocation1 + $0x20] sm:$0xff pattern:$0x73625140]
        %4960 = vst [vmem:[#allocation1] ss:$4 sm:$0xff] %v4819
        %4961 = vst [vmem:[%s4924] ss:$4 sm:$0xff] %v4820
        %4962 = vst [vmem:[%s4926] ss:$4 sm:$0xff] %v4821
        %4963 = vst [vmem:[%s4928] ss:$4 sm:$0xff] %v4822
        %4964 = vst [vmem:[%s4930] ss:$4 sm:$0xff] %v4823
        %4965 = vst [vmem:[%s4932] ss:$4 sm:$0xff] %v4824
        %4966 = vst [vmem:[%s4934] ss:$4 sm:$0xff] %v4825
        %4967 = vst [vmem:[%s4936] ss:$4 sm:$0xff] %v4826
        %v4968 = vld.sshfl [vmem:[#allocation1] sm:$0xff pattern:$0x73625140]
        %v4969 = vld.sshfl [vmem:[#allocation1 + $0x20] sm:$0xff pattern:$0x73625140]
        %4970 = vst [vmem:[#allocation1] ss:$4 sm:$0xff] %v4827
        %4971 = vst [vmem:[%s4924] ss:$4 sm:$0xff] %v4828
        %4972 = vst [vmem:[%s4926] ss:$4 sm:$0xff] %v4829
        %4973 = vst [vmem:[%s4928] ss:$4 sm:$0xff] %v4830
        %4974 = vst [vmem:[%s4930] ss:$4 sm:$0xff] %v4831
        %4975 = vst [vmem:[%s4932] ss:$4 sm:$0xff] %v4832
        %4976 = vst [vmem:[%s4934] ss:$4 sm:$0xff] %v4833
        %4977 = vst [vmem:[%s4936] ss:$4 sm:$0xff] %v4834
        %v4978 = vld.sshfl [vmem:[#allocation1] sm:$0xff pattern:$0x73625140]
        %v4979 = vld.sshfl [vmem:[#allocation1 + $0x20] sm:$0xff pattern:$0x73625140]
        %4980 = vst [vmem:[#allocation1] ss:$4 sm:$0xff] %v4835
        %4981 = vst [vmem:[%s4924] ss:$4 sm:$0xff] %v4836
        %4982 = vst [vmem:[%s4926] ss:$4 sm:$0xff] %v4837
        %4983 = vst [vmem:[%s4928] ss:$4 sm:$0xff] %v4838
        %4984 = vst [vmem:[%s4930] ss:$4 sm:$0xff] %v4839
        %4985 = vst [vmem:[%s4932] ss:$4 sm:$0xff] %v4840
        %4986 = vst [vmem:[%s4934] ss:$4 sm:$0xff] %v4841
        %4987 = vst [vmem:[%s4936] ss:$4 sm:$0xff] %v4842
        %v4988 = vld.sshfl [vmem:[#allocation1] sm:$0xff pattern:$0x73625140]
        %v4989 = vld.sshfl [vmem:[#allocation1 + $0x20] sm:$0xff pattern:$0x73625140]
        %4990 = vst [vmem:[#allocation1] ss:$4 sm:$0xff] %v4843
        %4991 = vst [vmem:[%s4924] ss:$4 sm:$0xff] %v4844
        %4992 = vst [vmem:[%s4926] ss:$4 sm:$0xff] %v4845
        %4993 = vst [vmem:[%s4928] ss:$4 sm:$0xff] %v4846
        %4994 = vst [vmem:[%s4930] ss:$4 sm:$0xff] %v4847
        %4995 = vst [vmem:[%s4932] ss:$4 sm:$0xff] %v4848
        %4996 = vst [vmem:[%s4934] ss:$4 sm:$0xff] %v4849
        %4997 = vst [vmem:[%s4936] ss:$4 sm:$0xff] %v4850
        %v4998 = vld.sshfl [vmem:[#allocation1] sm:$0xff pattern:$0x73625140]
        %v4999 = vld.sshfl [vmem:[#allocation1 + $0x20] sm:$0xff pattern:$0x73625140]
        %5000 = vst [vmem:[#allocation1] ss:$4 sm:$0xff] %v4851
        %5001 = vst [vmem:[%s4924] ss:$4 sm:$0xff] %v4852
        %5002 = vst [vmem:[%s4926] ss:$4 sm:$0xff] %v4853
        %5003 = vst [vmem:[%s4928] ss:$4 sm:$0xff] %v4854
        %5004 = vst [vmem:[%s4930] ss:$4 sm:$0xff] %v4855
        %5005 = vst [vmem:[%s4932] ss:$4 sm:$0xff] %v4856
        %5006 = vst [vmem:[%s4934] ss:$4 sm:$0xff] %v4857
        %5007 = vst [vmem:[%s4936] ss:$4 sm:$0xff] %v4858
        %v5008 = vld.sshfl [vmem:[#allocation1] sm:$0xff pattern:$0x73625140]
        %v5009 = vld.sshfl [vmem:[#allocation1 + $0x20] sm:$0xff pattern:$0x73625140]
        %5026 = vxpose.xlu0.b32.start [1/16] %v4938, 128
        %5027 = vxpose.xlu0.b32.cont [2/16] %v4939, 128
        %5028 = vxpose.xlu0.b32.cont [3/16] %v4948, 128
        %5029 = vxpose.xlu0.b32.cont [4/16] %v4949, 128
        %5030 = vxpose.xlu0.b32.cont [5/16] %v4958, 128
        %5031 = vxpose.xlu0.b32.cont [6/16] %v4959, 128
        %5032 = vxpose.xlu0.b32.cont [7/16] %v4968, 128
        %5033 = vxpose.xlu0.b32.cont [8/16] %v4969, 128
        %5034 = vxpose.xlu0.b32.cont [9/16] %v4978, 128
        %5035 = vxpose.xlu0.b32.cont [10/16] %v4979, 128
        %5036 = vxpose.xlu0.b32.cont [11/16] %v4988, 128
        %5037 = vxpose.xlu0.b32.cont [12/16] %v4989, 128
        %5038 = vxpose.xlu0.b32.cont [13/16] %v4998, 128
        %5039 = vxpose.xlu0.b32.cont [14/16] %v4999, 128
        %5040 = vxpose.xlu0.b32.cont [15/16] %v5008, 128
        %5041 = vxpose.xlu0.b32.end [16/16] %v5009, 128
        %v5042 = vpop.trf.xlu0
        %v5043 = vpop.trf.xlu0
        %v5044 = vpop.trf.xlu0
        %v5045 = vpop.trf.xlu0
        %v5046 = vpop.trf.xlu0
        %v5047 = vpop.trf.xlu0
        %v5048 = vpop.trf.xlu0
        %v5049 = vpop.trf.xlu0
        %v5050 = vpop.trf.xlu0
        %v5051 = vpop.trf.xlu0
        %v5052 = vpop.trf.xlu0
        %v5053 = vpop.trf.xlu0
        %v5054 = vpop.trf.xlu0
        %v5055 = vpop.trf.xlu0
        %v5056 = vpop.trf.xlu0
        %v5057 = vpop.trf.xlu0
        %v5060 = vrot.slane %v3559, 1
        %v5061 = vrot.slane %v3559, 2
        %v5062 = vrot.slane %v3559, 3
        %v5063 = vrot.slane %v3559, 4
        %v5064 = vrot.slane %v3559, 5
        %v5065 = vrot.slane %v3559, 6
        %v5066 = vrot.slane %v3559, 7
        %v5067 = vrot.slane %v3560, 1
        %v5068 = vrot.slane %v3560, 2
        %v5069 = vrot.slane %v3560, 3
        %v5070 = vrot.slane %v3560, 4
        %v5071 = vrot.slane %v3560, 5
        %v5072 = vrot.slane %v3560, 6
        %v5073 = vrot.slane %v3560, 7
        %v5090 = vrot.slane %v4651, 1
        %v5091 = vrot.slane %v4651, 2
        %v5092 = vrot.slane %v4651, 3
        %v5093 = vrot.slane %v4651, 4
        %v5094 = vrot.slane %v4651, 5
        %v5095 = vrot.slane %v4651, 6
        %v5096 = vrot.slane %v4651, 7
        %v5097 = vrot.slane %v4652, 1
        %v5098 = vrot.slane %v4652, 2
        %v5099 = vrot.slane %v4652, 3
        %v5100 = vrot.slane %v4652, 4
        %v5101 = vrot.slane %v4652, 5
        %v5102 = vrot.slane %v4652, 6
        %v5103 = vrot.slane %v4652, 7
        %v5118 = vperm.slane %v4651, 0
        %v5119 = vperm.slane %v5090, 0
        %v5120 = vperm.slane %v5091, 0
        %v5121 = vperm.slane %v5092, 0
        %v5122 = vperm.slane %v5093, 0
        %v5123 = vperm.slane %v5094, 0
        %v5124 = vperm.slane %v5095, 0
        %v5125 = vperm.slane %v5096, 0
        %v5126 = vperm.slane %v4652, 0
        %v5127 = vperm.slane %v5097, 0
        %v5128 = vperm.slane %v5098, 0
        %v5129 = vperm.slane %v5099, 0
        %v5130 = vperm.slane %v5100, 0
        %v5131 = vperm.slane %v5101, 0
        %v5132 = vperm.slane %v5102, 0
        %v5133 = vperm.slane %v5103, 0
        %v5150 = vsel %vm608, %v3559, %v5118
        %v5151 = vsel %vm608, %v5060, %v5119
        %v5152 = vsel %vm608, %v5061, %v5120
        %v5153 = vsel %vm608, %v5062, %v5121
        %v5154 = vsel %vm608, %v5063, %v5122
        %v5155 = vsel %vm608, %v5064, %v5123
        %v5156 = vsel %vm608, %v5065, %v5124
        %v5157 = vsel %vm608, %v5066, %v5125
        %v5158 = vsel %vm608, %v3560, %v5126
        %v5159 = vsel %vm608, %v5067, %v5127
        %v5160 = vsel %vm608, %v5068, %v5128
        %v5161 = vsel %vm608, %v5069, %v5129
        %v5162 = vsel %vm608, %v5070, %v5130
        %v5163 = vsel %vm608, %v5071, %v5131
        %v5164 = vsel %vm608, %v5072, %v5132
        %v5165 = vsel %vm608, %v5073, %v5133
        %5182 = vst [vmem:[#allocation1] ss:$4 sm:$0xff] %v5150
        %s5183 = scalar_lea.vmem [#allocation1], 1
        %5184 = vst [vmem:[%s5183] ss:$4 sm:$0xff] %v5151
        %s5185 = scalar_lea.vmem [#allocation1], 2
        %5186 = vst [vmem:[%s5185] ss:$4 sm:$0xff] %v5152
        %s5187 = scalar_lea.vmem [#allocation1], 3
        %5188 = vst [vmem:[%s5187] ss:$4 sm:$0xff] %v5153
        %s5189 = scalar_lea.vmem [#allocation1], 32
        %5190 = vst [vmem:[%s5189] ss:$4 sm:$0xff] %v5154
        %s5191 = scalar_lea.vmem [#allocation1], 33
        %5192 = vst [vmem:[%s5191] ss:$4 sm:$0xff] %v5155
        %s5193 = scalar_lea.vmem [#allocation1], 34
        %5194 = vst [vmem:[%s5193] ss:$4 sm:$0xff] %v5156
        %s5195 = scalar_lea.vmem [#allocation1], 35
        %5196 = vst [vmem:[%s5195] ss:$4 sm:$0xff] %v5157
        %v5197 = vld.sshfl [vmem:[#allocation1] sm:$0xff pattern:$0x73625140]
        %v5198 = vld.sshfl [vmem:[#allocation1 + $0x20] sm:$0xff pattern:$0x73625140]
        %5199 = vst [vmem:[#allocation1] ss:$4 sm:$0xff] %v5158
        %5200 = vst [vmem:[%s5183] ss:$4 sm:$0xff] %v5159
        %5201 = vst [vmem:[%s5185] ss:$4 sm:$0xff] %v5160
        %5202 = vst [vmem:[%s5187] ss:$4 sm:$0xff] %v5161
        %5203 = vst [vmem:[%s5189] ss:$4 sm:$0xff] %v5162
        %5204 = vst [vmem:[%s5191] ss:$4 sm:$0xff] %v5163
        %5205 = vst [vmem:[%s5193] ss:$4 sm:$0xff] %v5164
        %5206 = vst [vmem:[%s5195] ss:$4 sm:$0xff] %v5165
        %v5207 = vld.sshfl [vmem:[#allocation1] sm:$0xff pattern:$0x73625140]
        %v5208 = vld.sshfl [vmem:[#allocation1 + $0x20] sm:$0xff pattern:$0x73625140]
        %s5213 = scalar_lea.vmem %s168, 32 [#allocation5]
        %5214 = vst [vmem:[%s5213] sm:$0xff] %v5197
        %5215 = vst [vmem:[%s5213 + $0x8] sm:$0xff] %v5198
        %5216 = vst [vmem:[%s5213 + $0x10] sm:$0xff] %v5207
        %5217 = vst [vmem:[%s5213 + $0x18] sm:$0xff] %v5208
        %v5220 = vrot.slane %v3950, 1
        %v5221 = vrot.slane %v3950, 2
        %v5222 = vrot.slane %v3950, 3
        %v5223 = vrot.slane %v3950, 4
        %v5224 = vrot.slane %v3950, 5
        %v5225 = vrot.slane %v3950, 6
        %v5226 = vrot.slane %v3950, 7
        %v5227 = vrot.slane %v3951, 1
        %v5228 = vrot.slane %v3951, 2
        %v5229 = vrot.slane %v3951, 3
        %v5230 = vrot.slane %v3951, 4
        %v5231 = vrot.slane %v3951, 5
        %v5232 = vrot.slane %v3951, 6
        %v5233 = vrot.slane %v3951, 7
        %v5250 = vrot.slane %v5042, 1
        %v5251 = vrot.slane %v5042, 2
        %v5252 = vrot.slane %v5042, 3
        %v5253 = vrot.slane %v5042, 4
        %v5254 = vrot.slane %v5042, 5
        %v5255 = vrot.slane %v5042, 6
        %v5256 = vrot.slane %v5042, 7
        %v5257 = vrot.slane %v5043, 1
        %v5258 = vrot.slane %v5043, 2
        %v5259 = vrot.slane %v5043, 3
        %v5260 = vrot.slane %v5043, 4
        %v5261 = vrot.slane %v5043, 5
        %v5262 = vrot.slane %v5043, 6
        %v5263 = vrot.slane %v5043, 7
        %v5278 = vperm.slane %v5042, 0
        %v5279 = vperm.slane %v5250, 0
        %v5280 = vperm.slane %v5251, 0
        %v5281 = vperm.slane %v5252, 0
        %v5282 = vperm.slane %v5253, 0
        %v5283 = vperm.slane %v5254, 0
        %v5284 = vperm.slane %v5255, 0
        %v5285 = vperm.slane %v5256, 0
        %v5286 = vperm.slane %v5043, 0
        %v5287 = vperm.slane %v5257, 0
        %v5288 = vperm.slane %v5258, 0
        %v5289 = vperm.slane %v5259, 0
        %v5290 = vperm.slane %v5260, 0
        %v5291 = vperm.slane %v5261, 0
        %v5292 = vperm.slane %v5262, 0
        %v5293 = vperm.slane %v5263, 0
        %v5310 = vsel %vm608, %v3950, %v5278
        %v5311 = vsel %vm608, %v5220, %v5279
        %v5312 = vsel %vm608, %v5221, %v5280
        %v5313 = vsel %vm608, %v5222, %v5281
        %v5314 = vsel %vm608, %v5223, %v5282
        %v5315 = vsel %vm608, %v5224, %v5283
        %v5316 = vsel %vm608, %v5225, %v5284
        %v5317 = vsel %vm608, %v5226, %v5285
        %v5318 = vsel %vm608, %v3951, %v5286
        %v5319 = vsel %vm608, %v5227, %v5287
        %v5320 = vsel %vm608, %v5228, %v5288
        %v5321 = vsel %vm608, %v5229, %v5289
        %v5322 = vsel %vm608, %v5230, %v5290
        %v5323 = vsel %vm608, %v5231, %v5291
        %v5324 = vsel %vm608, %v5232, %v5292
        %v5325 = vsel %vm608, %v5233, %v5293
        %5342 = vst [vmem:[#allocation1] ss:$4 sm:$0xff] %v5310
        %s5343 = scalar_lea.vmem [#allocation1], 1
        %5344 = vst [vmem:[%s5343] ss:$4 sm:$0xff] %v5311
        %s5345 = scalar_lea.vmem [#allocation1], 2
        %5346 = vst [vmem:[%s5345] ss:$4 sm:$0xff] %v5312
        %s5347 = scalar_lea.vmem [#allocation1], 3
        %5348 = vst [vmem:[%s5347] ss:$4 sm:$0xff] %v5313
        %s5349 = scalar_lea.vmem [#allocation1], 32
        %5350 = vst [vmem:[%s5349] ss:$4 sm:$0xff] %v5314
        %s5351 = scalar_lea.vmem [#allocation1], 33
        %5352 = vst [vmem:[%s5351] ss:$4 sm:$0xff] %v5315
        %s5353 = scalar_lea.vmem [#allocation1], 34
        %5354 = vst [vmem:[%s5353] ss:$4 sm:$0xff] %v5316
        %s5355 = scalar_lea.vmem [#allocation1], 35
        %5356 = vst [vmem:[%s5355] ss:$4 sm:$0xff] %v5317
        %v5357 = vld.sshfl [vmem:[#allocation1] sm:$0xff pattern:$0x73625140]
        %v5358 = vld.sshfl [vmem:[#allocation1 + $0x20] sm:$0xff pattern:$0x73625140]
        %5359 = vst [vmem:[#allocation1] ss:$4 sm:$0xff] %v5318
        %5360 = vst [vmem:[%s5343] ss:$4 sm:$0xff] %v5319
        %5361 = vst [vmem:[%s5345] ss:$4 sm:$0xff] %v5320
        %5362 = vst [vmem:[%s5347] ss:$4 sm:$0xff] %v5321
        %5363 = vst [vmem:[%s5349] ss:$4 sm:$0xff] %v5322
        %5364 = vst [vmem:[%s5351] ss:$4 sm:$0xff] %v5323
        %5365 = vst [vmem:[%s5353] ss:$4 sm:$0xff] %v5324
        %5366 = vst [vmem:[%s5355] ss:$4 sm:$0xff] %v5325
        %v5367 = vld.sshfl [vmem:[#allocation1] sm:$0xff pattern:$0x73625140]
        %v5368 = vld.sshfl [vmem:[#allocation1 + $0x20] sm:$0xff pattern:$0x73625140]
        %s5373 = scalar_lea.vmem %s168, 96 [#allocation5]
        %5374 = vst [vmem:[%s5373] sm:$0xff] %v5357
        %5375 = vst [vmem:[%s5373 + $0x8] sm:$0xff] %v5358
        %5376 = vst [vmem:[%s5373 + $0x10] sm:$0xff] %v5367
        %5377 = vst [vmem:[%s5373 + $0x18] sm:$0xff] %v5368
        %v5378 = vperm.slane %v3559, 0
        %v5379 = vperm.slane %v5060, 0
        %v5380 = vperm.slane %v5061, 0
        %v5381 = vperm.slane %v5062, 0
        %v5382 = vperm.slane %v5063, 0
        %v5383 = vperm.slane %v5064, 0
        %v5384 = vperm.slane %v5065, 0
        %v5385 = vperm.slane %v5066, 0
        %v5386 = vperm.slane %v3560, 0
        %v5387 = vperm.slane %v5067, 0
        %v5388 = vperm.slane %v5068, 0
        %v5389 = vperm.slane %v5069, 0
        %v5390 = vperm.slane %v5070, 0
        %v5391 = vperm.slane %v5071, 0
        %v5392 = vperm.slane %v5072, 0
        %v5393 = vperm.slane %v5073, 0
        %v5410 = vsel %vm608, %v4651, %v5378
        %v5411 = vsel %vm608, %v5090, %v5379
        %v5412 = vsel %vm608, %v5091, %v5380
        %v5413 = vsel %vm608, %v5092, %v5381
        %v5414 = vsel %vm608, %v5093, %v5382
        %v5415 = vsel %vm608, %v5094, %v5383
        %v5416 = vsel %vm608, %v5095, %v5384
        %v5417 = vsel %vm608, %v5096, %v5385
        %v5418 = vsel %vm608, %v4652, %v5386
        %v5419 = vsel %vm608, %v5097, %v5387
        %v5420 = vsel %vm608, %v5098, %v5388
        %v5421 = vsel %vm608, %v5099, %v5389
        %v5422 = vsel %vm608, %v5100, %v5390
        %v5423 = vsel %vm608, %v5101, %v5391
        %v5424 = vsel %vm608, %v5102, %v5392
        %v5425 = vsel %vm608, %v5103, %v5393
        %5442 = vst [vmem:[#allocation1] ss:$4 sm:$0xff] %v5410
        %s5443 = scalar_lea.vmem [#allocation1], 1
        %5444 = vst [vmem:[%s5443] ss:$4 sm:$0xff] %v5411
        %s5445 = scalar_lea.vmem [#allocation1], 2
        %5446 = vst [vmem:[%s5445] ss:$4 sm:$0xff] %v5412
        %s5447 = scalar_lea.vmem [#allocation1], 3
        %5448 = vst [vmem:[%s5447] ss:$4 sm:$0xff] %v5413
        %s5449 = scalar_lea.vmem [#allocation1], 32
        %5450 = vst [vmem:[%s5449] ss:$4 sm:$0xff] %v5414
        %s5451 = scalar_lea.vmem [#allocation1], 33
        %5452 = vst [vmem:[%s5451] ss:$4 sm:$0xff] %v5415
        %s5453 = scalar_lea.vmem [#allocation1], 34
        %5454 = vst [vmem:[%s5453] ss:$4 sm:$0xff] %v5416
        %s5455 = scalar_lea.vmem [#allocation1], 35
        %5456 = vst [vmem:[%s5455] ss:$4 sm:$0xff] %v5417
        %v5457 = vld.sshfl [vmem:[#allocation1] sm:$0xff pattern:$0x73625140]
        %v5458 = vld.sshfl [vmem:[#allocation1 + $0x20] sm:$0xff pattern:$0x73625140]
        %5459 = vst [vmem:[#allocation1] ss:$4 sm:$0xff] %v5418
        %5460 = vst [vmem:[%s5443] ss:$4 sm:$0xff] %v5419
        %5461 = vst [vmem:[%s5445] ss:$4 sm:$0xff] %v5420
        %5462 = vst [vmem:[%s5447] ss:$4 sm:$0xff] %v5421
        %5463 = vst [vmem:[%s5449] ss:$4 sm:$0xff] %v5422
        %5464 = vst [vmem:[%s5451] ss:$4 sm:$0xff] %v5423
        %5465 = vst [vmem:[%s5453] ss:$4 sm:$0xff] %v5424
        %5466 = vst [vmem:[%s5455] ss:$4 sm:$0xff] %v5425
        %v5467 = vld.sshfl [vmem:[#allocation1] sm:$0xff pattern:$0x73625140]
        %v5468 = vld.sshfl [vmem:[#allocation1 + $0x20] sm:$0xff pattern:$0x73625140]
        %s5473 = scalar_lea.vmem %s168, 160 [#allocation5]
        %5474 = vst [vmem:[%s5473] sm:$0xff] %v5457
        %5475 = vst [vmem:[%s5473 + $0x8] sm:$0xff] %v5458
        %5476 = vst [vmem:[%s5473 + $0x10] sm:$0xff] %v5467
        %5477 = vst [vmem:[%s5473 + $0x18] sm:$0xff] %v5468
        %v5478 = vperm.slane %v3950, 0
        %v5479 = vperm.slane %v5220, 0
        %v5480 = vperm.slane %v5221, 0
        %v5481 = vperm.slane %v5222, 0
        %v5482 = vperm.slane %v5223, 0
        %v5483 = vperm.slane %v5224, 0
        %v5484 = vperm.slane %v5225, 0
        %v5485 = vperm.slane %v5226, 0
        %v5486 = vperm.slane %v3951, 0
        %v5487 = vperm.slane %v5227, 0
        %v5488 = vperm.slane %v5228, 0
        %v5489 = vperm.slane %v5229, 0
        %v5490 = vperm.slane %v5230, 0
        %v5491 = vperm.slane %v5231, 0
        %v5492 = vperm.slane %v5232, 0
        %v5493 = vperm.slane %v5233, 0
        %v5510 = vsel %vm608, %v5042, %v5478
        %v5511 = vsel %vm608, %v5250, %v5479
        %v5512 = vsel %vm608, %v5251, %v5480
        %v5513 = vsel %vm608, %v5252, %v5481
        %v5514 = vsel %vm608, %v5253, %v5482
        %v5515 = vsel %vm608, %v5254, %v5483
        %v5516 = vsel %vm608, %v5255, %v5484
        %v5517 = vsel %vm608, %v5256, %v5485
        %v5518 = vsel %vm608, %v5043, %v5486
        %v5519 = vsel %vm608, %v5257, %v5487
        %v5520 = vsel %vm608, %v5258, %v5488
        %v5521 = vsel %vm608, %v5259, %v5489
        %v5522 = vsel %vm608, %v5260, %v5490
        %v5523 = vsel %vm608, %v5261, %v5491
        %v5524 = vsel %vm608, %v5262, %v5492
        %v5525 = vsel %vm608, %v5263, %v5493
        %5542 = vst [vmem:[#allocation1] ss:$4 sm:$0xff] %v5510
        %s5543 = scalar_lea.vmem [#allocation1], 1
        %5544 = vst [vmem:[%s5543] ss:$4 sm:$0xff] %v5511
        %s5545 = scalar_lea.vmem [#allocation1], 2
        %5546 = vst [vmem:[%s5545] ss:$4 sm:$0xff] %v5512
        %s5547 = scalar_lea.vmem [#allocation1], 3
        %5548 = vst [vmem:[%s5547] ss:$4 sm:$0xff] %v5513
        %s5549 = scalar_lea.vmem [#allocation1], 32
        %5550 = vst [vmem:[%s5549] ss:$4 sm:$0xff] %v5514
        %s5551 = scalar_lea.vmem [#allocation1], 33
        %5552 = vst [vmem:[%s5551] ss:$4 sm:$0xff] %v5515
        %s5553 = scalar_lea.vmem [#allocation1], 34
        %5554 = vst [vmem:[%s5553] ss:$4 sm:$0xff] %v5516
        %s5555 = scalar_lea.vmem [#allocation1], 35
        %5556 = vst [vmem:[%s5555] ss:$4 sm:$0xff] %v5517
        %v5557 = vld.sshfl [vmem:[#allocation1] sm:$0xff pattern:$0x73625140]
        %v5558 = vld.sshfl [vmem:[#allocation1 + $0x20] sm:$0xff pattern:$0x73625140]
        %5559 = vst [vmem:[#allocation1] ss:$4 sm:$0xff] %v5518
        %5560 = vst [vmem:[%s5543] ss:$4 sm:$0xff] %v5519
        %5561 = vst [vmem:[%s5545] ss:$4 sm:$0xff] %v5520
        %5562 = vst [vmem:[%s5547] ss:$4 sm:$0xff] %v5521
        %5563 = vst [vmem:[%s5549] ss:$4 sm:$0xff] %v5522
        %5564 = vst [vmem:[%s5551] ss:$4 sm:$0xff] %v5523
        %5565 = vst [vmem:[%s5553] ss:$4 sm:$0xff] %v5524
        %5566 = vst [vmem:[%s5555] ss:$4 sm:$0xff] %v5525
        %v5567 = vld.sshfl [vmem:[#allocation1] sm:$0xff pattern:$0x73625140]
        %v5568 = vld.sshfl [vmem:[#allocation1 + $0x20] sm:$0xff pattern:$0x73625140]
        %s5573 = scalar_lea.vmem %s168, 224 [#allocation5]
        %5574 = vst [vmem:[%s5573] sm:$0xff] %v5557
        %5575 = vst [vmem:[%s5573 + $0x8] sm:$0xff] %v5558
        %5576 = vst [vmem:[%s5573 + $0x10] sm:$0xff] %v5567
        %5577 = vst [vmem:[%s5573 + $0x18] sm:$0xff] %v5568
        %s5578 = sand.u32 %s79, 1
        %s5579 = scalar_lea.sflag [#allocation4], %s5578
        %s5580 = sand.u32 %s79, 1
        %s5581 = smul.addr %s5580, 256
        %s5582 = scalar_lea.vmem [#allocation5], %s5581
        // Predicated region
        $region29: #{tpu_custom_call.1} parent=23 // pred_check
          %p5583 = pneg %p89
        $region30: #{tpu_custom_call.1} parent=23 // pred_check_branch
          %5585 = sbr.rel (%p5583) target = $region32
        $region31: #{tpu_custom_call.1} parent=23 // pred_region
          %s5586 = smul.u32 2, %s24
          %5588 = vsyncadd %s5579, 0
          %s5589 = smul.addr %s5586, 4
          %s5590 = smul.addr %s25, 8
          %s5591 = sadd.s32 %s5589, %s5590
          %s5592 = smul.addr %s23, 32
          %s5593 = sadd.s32 %s5591, %s5592
          %s5594 = smul.addr %s5593, 8
          %s5595 = scalar_lea.hbm %s1, %s5594
          %s5596 = sshll.u32 %s5582, 4
          %s5597 = int_to_ptr.vmem [resolvable:$true] %s5596
          %s5598 = sshll.u32 %s5595, 4
          %s5599 = int_to_ptr.hbm [resolvable:$true] %s5598
          %5604 = dma.vmem_to_hbm [thread:$0]  %s5597, 4096, %s5599, %s5579, 128, 128, 8
        $region32: #{tpu_custom_call.1} parent=23 // pred_fallthru
          _
      $region24: #{tpu_custom_call.1} parent=5 // pred_fallthru
        _
      %p5605 = scmp.le.s32.totalorder 2, %s13
      // Predicated region
      $region33: #{tpu_custom_call.1} parent=5 // pred_check
        %p5606 = pneg %p5605
      $region34: #{tpu_custom_call.1} parent=5 // pred_check_branch
        %5608 = sbr.rel (%p5606) target = $region36
      $region35: #{tpu_custom_call.1} parent=5 // pred_region
        %s5609 = ssub.s32 %s13, 2
        // Predicated region
        $region37: #{tpu_custom_call.1} parent=35 // pred_check
          %p5610 = pneg %p95
        $region38: #{tpu_custom_call.1} parent=35 // pred_check_branch
          %5612 = sbr.rel (%p5610) target = $region40
        $region39: #{tpu_custom_call.1} parent=35 // pred_region
          %s5613 = sand.u32 %s80, 1
          %s5614 = scalar_lea.sflag [#allocation4], %s5613
          %s5615 = sand.u32 %s80, 1
          %s5616 = smul.addr %s5615, 256
          %s5617 = scalar_lea.vmem [#allocation5], %s5616
          %5619 = dma.done %s5614, 4096
        $region40: #{tpu_custom_call.1} parent=35 // pred_fallthru
          _
      $region36: #{tpu_custom_call.1} parent=5 // pred_fallthru
        _
    $region6: #{tpu_custom_call.1} parent=1 // loop_footer
      %s17 = sadd.s32 1, %s13
    $region7: #{tpu_custom_call.1} parent=1 // loop_footer_branch
      %12 = sbr.rel target = $region3
    $region8: #{tpu_custom_call.1} parent=1 // loop_exit
      _
    %5620 = vsyncpa [#allocation3], 1
    %s5621 = scalar_lea.sflag [#allocation3], 1
    %5622 = vsyncpa %s5621, 1
    %5623 = vsyncpa [#allocation4], 1
    %s5624 = scalar_lea.sflag [#allocation4], 1
    %5625 = vsyncpa %s5624, 1

</llo_original>
